<compile_context>
chip_gen: v7x
topology: tpu7x:2x2x1
jax: 0.10.0
libtpu: 0.0.40
codegen_flags: <defaults>
</compile_context>

<pallas_src>
import functools

import jax
import jax.numpy as jnp
from jax.experimental import pallas as pl
from jax.experimental.pallas import tpu as pltpu


# ----------------------------- Pallas kernel --------------------------------

def _make_crossover_kernel(L, ind_length, P, B, H, H2, n_emb_pad):
    """Builds the fully fused encoder + decoder + sampler kernel (static dims)."""

    def kernel(xproj_ref, enc_whh_ref, dec_whh_ref, wq_ref, vbd_ref, refp_ref,
               emb_ih_ref, init_ih_ref, gum_ref, rand_ref, use_rand_ref,
               attn_out, samp_out):
        f32 = jnp.float32

        enc_whh = enc_whh_ref[...]            # (H, 4H)       resident
        dec_whh = dec_whh_ref[...]            # (H2, 4H2)
        wq = wq_ref[...]                      # (H2, P*A)     pre-tiled
        vbd = vbd_ref[...]                    # (P*A, P)      block-diag of v
        emb_ih = emb_ih_ref[...]              # (n_emb_pad, 4H2)  emb@Wih + b

        def lstm_gates(gates, n):
            # gate columns pre-ordered [i | f | o | g]: one sigmoid slab, one tanh.
            sig = jax.nn.sigmoid(gates[:, :3 * n])
            g_g = jnp.tanh(gates[:, 3 * n:4 * n])
            return sig[:, :n], sig[:, n:2 * n], sig[:, 2 * n:3 * n], g_g

        # ---------------- encoder LSTM: all parents as one (P*B) batch -------
        # t = 0: h, c start at zero -> gates = xproj[0] (no h@Whh matmul).
        i_g, f_g, o_g, g_g = lstm_gates(xproj_ref[0], H)
        c_e = i_g * g_g
        h_e = o_g * jnp.tanh(c_e)
        for t in range(1, L):                 # L static -> unrolled
            gates = xproj_ref[t] + jnp.dot(h_e, enc_whh,
                                           preferred_element_type=f32)
            i_g, f_g, o_g, g_g = lstm_gates(gates, H)
            c_e = f_g * c_e + i_g * g_g
            h_e = o_g * jnp.tanh(c_e)

        # torch.cat(hidden_states, dim=2): per-batch concat of parent states.
        h = jnp.concatenate([h_e[p * B:(p + 1) * B, :] for p in range(P)], axis=-1)
        c = jnp.concatenate([c_e[p * B:(p + 1) * B, :] for p in range(P)], axis=-1)

        # ---------------- decoder + pointer attention + sampling -------------
        lane_iota_p = jax.lax.broadcasted_iota(jnp.int32, (B, P), 1)
        lane_iota_e = jax.lax.broadcasted_iota(jnp.int32, (B, n_emb_pad), 1)

        # decoder input projection of the initial trainable input (bias folded)
        xih = jnp.broadcast_to(init_ih_ref[...], (B, 4 * H2))

        for i in range(ind_length):           # static -> unrolled
            # fused LSTM step: x-projection precomputed, bias folded into xih.
            gates = xih + jnp.dot(h, dec_whh, preferred_element_type=f32)
            i_g, f_g, o_g, g_g = lstm_gates(gates, H2)
            c = f_g * c + i_g * g_g
            h = o_g * jnp.tanh(c)

            # additive pointer attention: score_p = v . tanh(W_ref r_p + W_q h)
            u = jnp.tanh(refp_ref[i] + jnp.dot(h, wq,
                                               preferred_element_type=f32))
            scores = jnp.dot(u, vbd, preferred_element_type=f32)     # (B, P)
            m = jnp.max(scores, axis=-1, keepdims=True)
            e = jnp.exp(scores - m)
            a = e / jnp.sum(e, axis=-1, keepdims=True)               # softmax
            attn_out[:, i * P:(i + 1) * P] = a                       # per-step store

            # Categorical(a) via Gumbel-max on the pre-softmax scores
            noisy = scores + gum_ref[i]                              # (B, P)
            mn = jnp.max(noisy, axis=-1, keepdims=True)
            cat_choice = jnp.min(jnp.where(noisy >= mn, lane_iota_p, P),
                                 axis=-1, keepdims=True)             # (B, 1) int32
            # epsilon-greedy: one scalar decision per step (shared across batch)
            sample = jnp.where(use_rand_ref[i] > 0, rand_ref[i], cat_choice)
            samp_out[:, i:i + 1] = sample                            # per-step store

            if i + 1 < ind_length:
                # next decoder input projection via one-hot x (emb @ Wih + b)
                onehot = (lane_iota_e == sample).astype(f32)         # (B, n_emb_pad)
                xih = jnp.dot(onehot, emb_ih, preferred_element_type=f32)

    return kernel


# ----------------------------- Parameters -----------------------------------

def init_params(key, input_size, hidden_size, n_embeddings, n_parents):
    D, H = input_size, hidden_size
    H2 = n_parents * hidden_size
    A = hidden_size                       # attention projection dim
    ks = jax.random.split(key, 11)
    s = 0.1
    # LSTM gate columns in PyTorch order (i, f, g, o).
    return dict(
        embedding=jax.random.normal(ks[0], (n_embeddings, D), jnp.float32) * s,
        init_input=jax.random.normal(ks[1], (1, D), jnp.float32) * s,  # initial_trainable_input
        enc_wih_t=jax.random.normal(ks[2], (D, 4 * H), jnp.float32) * s,
        enc_whh_t=jax.random.normal(ks[3], (H, 4 * H), jnp.float32) * s,
        enc_b=jax.random.normal(ks[4], (1, 4 * H), jnp.float32) * s,
        dec_wih_t=jax.random.normal(ks[5], (D, 4 * H2), jnp.float32) * s,
        dec_whh_t=jax.random.normal(ks[6], (H2, 4 * H2), jnp.float32) * s,
        dec_b=jax.random.normal(ks[7], (1, 4 * H2), jnp.float32) * s,
        att_wref_t=jax.random.normal(ks[8], (D, A), jnp.float32) * s,
        att_wq_t=jax.random.normal(ks[9], (H2, A), jnp.float32) * s,
        att_v=jax.random.normal(ks[10], (1, A), jnp.float32) * s,
    )


def _reorder_ifgo_to_ifog(w, n):
    """Permute 4*n gate columns from PyTorch (i,f,g,o) order to (i,f,o,g)."""
    return jnp.concatenate(
        [w[..., 0 * n:1 * n], w[..., 1 * n:2 * n],
         w[..., 3 * n:4 * n], w[..., 2 * n:3 * n]], axis=-1)


def prepare_params(params, n_parents):
    """One-time, call-independent parameter transform (outside the hot path)."""
    P = n_parents
    H = params["enc_whh_t"].shape[0]
    H2 = params["dec_whh_t"].shape[0]
    emb = params["embedding"]
    n_emb = emb.shape[0]

    # Gate column reorder so sigmoid/tanh apply to contiguous slabs in-kernel.
    enc_wih = _reorder_ifgo_to_ifog(params["enc_wih_t"], H)
    enc_whh = _reorder_ifgo_to_ifog(params["enc_whh_t"], H)
    enc_b = _reorder_ifgo_to_ifog(params["enc_b"], H)
    dec_wih = _reorder_ifgo_to_ifog(params["dec_wih_t"], H2)
    dec_whh = _reorder_ifgo_to_ifog(params["dec_whh_t"], H2)
    dec_b = _reorder_ifgo_to_ifog(params["dec_b"], H2)

    # Pad embedding rows to a sublane multiple; fold decoder Wih + bias into it.
    pad = (-n_emb) % 8
    emb_pad = jnp.pad(emb, ((0, pad), (0, 0)))
    emb_ih = jnp.dot(emb_pad, dec_wih) + dec_b                 # (n_emb_pad, 4H2)
    init_ih = jnp.dot(params["init_input"], dec_wih) + dec_b   # (1, 4H2)

    # Pre-tiled query projection and block-diagonal v (one matmul for P scores).
    wq_tiled = jnp.tile(params["att_wq_t"], (1, P))            # (H2, P*A)
    vbd = jnp.kron(jnp.eye(P, dtype=jnp.float32), params["att_v"].T)  # (P*A, P)

    return dict(
        embedding=emb,
        att_wref_t=params["att_wref_t"],
        enc_wih=enc_wih, enc_whh=enc_whh, enc_b=enc_b,
        dec_whh=dec_whh, emb_ih=emb_ih, init_ih=init_ih,
        wq_tiled=wq_tiled, vbd=vbd,
    )


# ----------------------------- Forward wrapper --------------------------------

@functools.partial(jax.jit, static_argnames=("ind_length",))
def neural_crossover_forward(prepped, parents_matrix, rng_key, *,
                             ind_length, epsilon_greedy=0.1):
    """parents_matrix: (n_parents, batch, seq_len) int32
       returns (attention_values (B, ind_length, P), samples (B, ind_length))"""
    P, B, L = parents_matrix.shape
    emb = prepped["embedding"]
    n_emb, D = emb.shape
    H = prepped["enc_whh"].shape[0]
    H2 = prepped["dec_whh"].shape[0]
    A = prepped["att_wref_t"].shape[1]
    n_emb_pad = prepped["emb_ih"].shape[0]

    # Embedding lookup for the parent sequences (gather glue stays in JAX).
    pe = jnp.take(emb, parents_matrix, axis=0)                      # (P, B, L, D)

    # Hoisted encoder input projection (incl. bias): all parents as one batch,
    # time-major -> (L, P*B, 4H). One batched matmul, no per-step concat/K=D.
    x_tm = jnp.transpose(pe.reshape(P * B, L, D), (1, 0, 2))        # (L, P*B, D)
    xproj = jnp.einsum("lnd,dg->lng", x_tm, prepped["enc_wih"]) + prepped["enc_b"]

    # Hoisted W_ref projection of parent embeddings for the pointer attention.
    pe_proj = jnp.einsum("pbld,da->pbla", pe, prepped["att_wref_t"])  # (P, B, L, A)
    ref_proj = jnp.transpose(pe_proj, (2, 1, 0, 3)).reshape(L, B, P * A)[:ind_length]

    # Pre-generate all randomness so the whole time loop lives inside the kernel.
    k_gum, k_rand, k_eps = jax.random.split(rng_key, 3)
    gumbel = jax.random.gumbel(k_gum, (ind_length, B, P), jnp.float32)
    rand_choice = jax.random.randint(k_rand, (ind_length, B, 1), 0, P,
                                     dtype=jnp.int32)
    eps_u = jax.random.uniform(k_eps, (ind_length,))                # torch.rand(1) per step
    use_rand = (eps_u < epsilon_greedy).astype(jnp.int32)           # (T,) int32, SMEM

    kernel = _make_crossover_kernel(L, ind_length, P, B, H, H2, n_emb_pad)
    vmem = pl.BlockSpec(memory_space=pltpu.MemorySpace.VMEM)
    smem = pl.BlockSpec(memory_space=pltpu.MemorySpace.SMEM)
    attn_flat, samples = pl.pallas_call(
        kernel,
        out_shape=(jax.ShapeDtypeStruct((B, ind_length * P), jnp.float32),
                   jax.ShapeDtypeStruct((B, ind_length), jnp.int32)),
        in_specs=[vmem] * 10 + [smem],
        out_specs=(vmem, vmem),
    )(xproj, prepped["enc_whh"], prepped["dec_whh"], prepped["wq_tiled"],
      prepped["vbd"], ref_proj, prepped["emb_ih"], prepped["init_ih"],
      gumbel, rand_choice, use_rand)

    attention_values = attn_flat.reshape(B, ind_length, P)
    return attention_values, samples


# --------------------------------- main --------------------------------------

if __name__ == "__main__":
    input_size = 16      # embedding dim D
    hidden_size = 32     # encoder hidden H (decoder hidden = n_parents*H)
    n_embeddings = 10
    n_parents = 2
    batch_size = 8
    seq_len = 8
    ind_length = seq_len

    key = jax.random.PRNGKey(0)
    k_params, k_data, k_sample = jax.random.split(key, 3)
    params = init_params(k_params, input_size, hidden_size, n_embeddings, n_parents)
    prepped = prepare_params(params, n_parents)          # one-time weight prep

    parents_matrix = jax.random.randint(
        k_data, (n_parents, batch_size, seq_len), 0, n_embeddings, dtype=jnp.int32)

    attn, samples = neural_crossover_forward(
        prepped, parents_matrix, k_sample,
        ind_length=ind_length, epsilon_greedy=0.1)
    attn = jax.block_until_ready(attn)
    samples = jax.block_until_ready(samples)

    assert attn.shape == (batch_size, ind_length, n_parents)
    assert samples.shape == (batch_size, ind_length)
    assert bool(jnp.all(jnp.isfinite(attn)))
    assert bool(jnp.all(jnp.abs(jnp.sum(attn, axis=-1) - 1.0) < 1e-4))
    assert bool(jnp.all((samples >= 0) & (samples < n_parents)))
    print("KERNEL_OK")
</pallas_src>

<mosaic_0001>
module attributes {stable_mosaic.version = 11 : i64} {
  func.func @kernel(%arg0: memref<8x16x128xf32, #tpu.memory_space<vmem>>, %arg1: memref<32x128xf32, #tpu.memory_space<vmem>>, %arg2: memref<64x256xf32, #tpu.memory_space<vmem>>, %arg3: memref<64x64xf32, #tpu.memory_space<vmem>>, %arg4: memref<64x2xf32, #tpu.memory_space<vmem>>, %arg5: memref<8x8x64xf32, #tpu.memory_space<vmem>>, %arg6: memref<16x256xf32, #tpu.memory_space<vmem>>, %arg7: memref<1x256xf32, #tpu.memory_space<vmem>>, %arg8: memref<8x8x2xf32, #tpu.memory_space<vmem>>, %arg9: memref<8x8x1xi32, #tpu.memory_space<vmem>>, %arg10: memref<8xi32, #tpu.memory_space<smem>>, %arg11: memref<8x16xf32, #tpu.memory_space<vmem>>, %arg12: memref<8x8xi32, #tpu.memory_space<vmem>>) attributes {dimension_semantics = [], scalar_prefetch = 0 : i64, scratch_operands = 0 : i64, tpu.core_type = #tpu.core_type<tc>} {
    %c0 = arith.constant 0 : index
    %c0_0 = arith.constant 0 : index
    %0 = vector.load %arg1[%c0, %c0_0] : memref<32x128xf32, #tpu.memory_space<vmem>>, vector<32x128xf32>
    %c0_1 = arith.constant 0 : index
    %c0_2 = arith.constant 0 : index
    %1 = vector.load %arg2[%c0_1, %c0_2] : memref<64x256xf32, #tpu.memory_space<vmem>>, vector<64x256xf32>
    %c0_3 = arith.constant 0 : index
    %c0_4 = arith.constant 0 : index
    %2 = vector.load %arg3[%c0_3, %c0_4] : memref<64x64xf32, #tpu.memory_space<vmem>>, vector<64x64xf32>
    %c0_5 = arith.constant 0 : index
    %c0_6 = arith.constant 0 : index
    %3 = vector.load %arg4[%c0_5, %c0_6] : memref<64x2xf32, #tpu.memory_space<vmem>>, vector<64x2xf32>
    %c0_7 = arith.constant 0 : index
    %c0_8 = arith.constant 0 : index
    %4 = vector.load %arg6[%c0_7, %c0_8] : memref<16x256xf32, #tpu.memory_space<vmem>>, vector<16x256xf32>
    %c0_9 = arith.constant 0 : index
    %c0_10 = arith.constant 0 : index
    %c0_11 = arith.constant 0 : index
    %5 = vector.load %arg0[%c0_9, %c0_10, %c0_11] : memref<8x16x128xf32, #tpu.memory_space<vmem>>, vector<1x16x128xf32>
    %6 = vector.shape_cast %5 : vector<1x16x128xf32> to vector<16x128xf32>
    %7 = vector.extract_strided_slice %6 {offsets = [0, 0], sizes = [16, 96], strides = [1, 1]} : vector<16x128xf32> to vector<16x96xf32>
    %8 = arith.negf %7 : vector<16x96xf32>
    %9 = math.exp %8 : vector<16x96xf32>
    %cst = arith.constant 1.000000e+00 : f32
    %10 = vector.broadcast %cst : f32 to vector<16x96xf32>
    %11 = arith.addf %10, %9 : vector<16x96xf32>
    %12 = arith.divf %10, %11 : vector<16x96xf32>
    %13 = vector.extract_strided_slice %6 {offsets = [0, 96], sizes = [16, 32], strides = [1, 1]} : vector<16x128xf32> to vector<16x32xf32>
    %14 = math.tanh %13 : vector<16x32xf32>
    %15 = vector.extract_strided_slice %12 {offsets = [0, 0], sizes = [16, 32], strides = [1, 1]} : vector<16x96xf32> to vector<16x32xf32>
    %16 = vector.extract_strided_slice %12 {offsets = [0, 64], sizes = [16, 32], strides = [1, 1]} : vector<16x96xf32> to vector<16x32xf32>
    %17 = arith.mulf %15, %14 : vector<16x32xf32>
    %18 = math.tanh %17 : vector<16x32xf32>
    %19 = arith.mulf %16, %18 : vector<16x32xf32>
    %c1 = arith.constant 1 : index
    %c0_12 = arith.constant 0 : index
    %c0_13 = arith.constant 0 : index
    %20 = vector.load %arg0[%c1, %c0_12, %c0_13] : memref<8x16x128xf32, #tpu.memory_space<vmem>>, vector<1x16x128xf32>
    %21 = vector.shape_cast %20 : vector<1x16x128xf32> to vector<16x128xf32>
    %cst_14 = arith.constant dense<0.000000e+00> : vector<16x128xf32>
    %22 = tpu.matmul %19, %0, %cst_14 {dimension_numbers = #tpu.dot_dimension_numbers<[1], [0], [0], [1], [0, 0, 1, 1], [], []>} : vector<16x32xf32>, vector<32x128xf32>, vector<16x128xf32> -> vector<16x128xf32>
    %23 = arith.addf %21, %22 : vector<16x128xf32>
    %24 = vector.extract_strided_slice %23 {offsets = [0, 0], sizes = [16, 96], strides = [1, 1]} : vector<16x128xf32> to vector<16x96xf32>
    %25 = arith.negf %24 : vector<16x96xf32>
    %26 = math.exp %25 : vector<16x96xf32>
    %cst_15 = arith.constant 1.000000e+00 : f32
    %27 = vector.broadcast %cst_15 : f32 to vector<16x96xf32>
    %28 = arith.addf %27, %26 : vector<16x96xf32>
    %29 = arith.divf %27, %28 : vector<16x96xf32>
    %30 = vector.extract_strided_slice %23 {offsets = [0, 96], sizes = [16, 32], strides = [1, 1]} : vector<16x128xf32> to vector<16x32xf32>
    %31 = math.tanh %30 : vector<16x32xf32>
    %32 = vector.extract_strided_slice %29 {offsets = [0, 0], sizes = [16, 32], strides = [1, 1]} : vector<16x96xf32> to vector<16x32xf32>
    %33 = vector.extract_strided_slice %29 {offsets = [0, 32], sizes = [16, 32], strides = [1, 1]} : vector<16x96xf32> to vector<16x32xf32>
    %34 = vector.extract_strided_slice %29 {offsets = [0, 64], sizes = [16, 32], strides = [1, 1]} : vector<16x96xf32> to vector<16x32xf32>
    %35 = arith.mulf %33, %17 : vector<16x32xf32>
    %36 = arith.mulf %32, %31 : vector<16x32xf32>
    %37 = arith.addf %35, %36 : vector<16x32xf32>
    %38 = math.tanh %37 : vector<16x32xf32>
    %39 = arith.mulf %34, %38 : vector<16x32xf32>
    %c2 = arith.constant 2 : index
    %c0_16 = arith.constant 0 : index
    %c0_17 = arith.constant 0 : index
    %40 = vector.load %arg0[%c2, %c0_16, %c0_17] : memref<8x16x128xf32, #tpu.memory_space<vmem>>, vector<1x16x128xf32>
    %41 = vector.shape_cast %40 : vector<1x16x128xf32> to vector<16x128xf32>
    %cst_18 = arith.constant dense<0.000000e+00> : vector<16x128xf32>
    %42 = tpu.matmul %39, %0, %cst_18 {dimension_numbers = #tpu.dot_dimension_numbers<[1], [0], [0], [1], [0, 0, 1, 1], [], []>} : vector<16x32xf32>, vector<32x128xf32>, vector<16x128xf32> -> vector<16x128xf32>
    %43 = arith.addf %41, %42 : vector<16x128xf32>
    %44 = vector.extract_strided_slice %43 {offsets = [0, 0], sizes = [16, 96], strides = [1, 1]} : vector<16x128xf32> to vector<16x96xf32>
    %45 = arith.negf %44 : vector<16x96xf32>
    %46 = math.exp %45 : vector<16x96xf32>
    %cst_19 = arith.constant 1.000000e+00 : f32
    %47 = vector.broadcast %cst_19 : f32 to vector<16x96xf32>
    %48 = arith.addf %47, %46 : vector<16x96xf32>
    %49 = arith.divf %47, %48 : vector<16x96xf32>
    %50 = vector.extract_strided_slice %43 {offsets = [0, 96], sizes = [16, 32], strides = [1, 1]} : vector<16x128xf32> to vector<16x32xf32>
    %51 = math.tanh %50 : vector<16x32xf32>
    %52 = vector.extract_strided_slice %49 {offsets = [0, 0], sizes = [16, 32], strides = [1, 1]} : vector<16x96xf32> to vector<16x32xf32>
    %53 = vector.extract_strided_slice %49 {offsets = [0, 32], sizes = [16, 32], strides = [1, 1]} : vector<16x96xf32> to vector<16x32xf32>
    %54 = vector.extract_strided_slice %49 {offsets = [0, 64], sizes = [16, 32], strides = [1, 1]} : vector<16x96xf32> to vector<16x32xf32>
    %55 = arith.mulf %53, %37 : vector<16x32xf32>
    %56 = arith.mulf %52, %51 : vector<16x32xf32>
    %57 = arith.addf %55, %56 : vector<16x32xf32>
    %58 = math.tanh %57 : vector<16x32xf32>
    %59 = arith.mulf %54, %58 : vector<16x32xf32>
    %c3 = arith.constant 3 : index
    %c0_20 = arith.constant 0 : index
    %c0_21 = arith.constant 0 : index
    %60 = vector.load %arg0[%c3, %c0_20, %c0_21] : memref<8x16x128xf32, #tpu.memory_space<vmem>>, vector<1x16x128xf32>
    %61 = vector.shape_cast %60 : vector<1x16x128xf32> to vector<16x128xf32>
    %cst_22 = arith.constant dense<0.000000e+00> : vector<16x128xf32>
    %62 = tpu.matmul %59, %0, %cst_22 {dimension_numbers = #tpu.dot_dimension_numbers<[1], [0], [0], [1], [0, 0, 1, 1], [], []>} : vector<16x32xf32>, vector<32x128xf32>, vector<16x128xf32> -> vector<16x128xf32>
    %63 = arith.addf %61, %62 : vector<16x128xf32>
    %64 = vector.extract_strided_slice %63 {offsets = [0, 0], sizes = [16, 96], strides = [1, 1]} : vector<16x128xf32> to vector<16x96xf32>
    %65 = arith.negf %64 : vector<16x96xf32>
    %66 = math.exp %65 : vector<16x96xf32>
    %cst_23 = arith.constant 1.000000e+00 : f32
    %67 = vector.broadcast %cst_23 : f32 to vector<16x96xf32>
    %68 = arith.addf %67, %66 : vector<16x96xf32>
    %69 = arith.divf %67, %68 : vector<16x96xf32>
    %70 = vector.extract_strided_slice %63 {offsets = [0, 96], sizes = [16, 32], strides = [1, 1]} : vector<16x128xf32> to vector<16x32xf32>
    %71 = math.tanh %70 : vector<16x32xf32>
    %72 = vector.extract_strided_slice %69 {offsets = [0, 0], sizes = [16, 32], strides = [1, 1]} : vector<16x96xf32> to vector<16x32xf32>
    %73 = vector.extract_strided_slice %69 {offsets = [0, 32], sizes = [16, 32], strides = [1, 1]} : vector<16x96xf32> to vector<16x32xf32>
    %74 = vector.extract_strided_slice %69 {offsets = [0, 64], sizes = [16, 32], strides = [1, 1]} : vector<16x96xf32> to vector<16x32xf32>
    %75 = arith.mulf %73, %57 : vector<16x32xf32>
    %76 = arith.mulf %72, %71 : vector<16x32xf32>
    %77 = arith.addf %75, %76 : vector<16x32xf32>
    %78 = math.tanh %77 : vector<16x32xf32>
    %79 = arith.mulf %74, %78 : vector<16x32xf32>
    %c4 = arith.constant 4 : index
    %c0_24 = arith.constant 0 : index
    %c0_25 = arith.constant 0 : index
    %80 = vector.load %arg0[%c4, %c0_24, %c0_25] : memref<8x16x128xf32, #tpu.memory_space<vmem>>, vector<1x16x128xf32>
    %81 = vector.shape_cast %80 : vector<1x16x128xf32> to vector<16x128xf32>
    %cst_26 = arith.constant dense<0.000000e+00> : vector<16x128xf32>
    %82 = tpu.matmul %79, %0, %cst_26 {dimension_numbers = #tpu.dot_dimension_numbers<[1], [0], [0], [1], [0, 0, 1, 1], [], []>} : vector<16x32xf32>, vector<32x128xf32>, vector<16x128xf32> -> vector<16x128xf32>
    %83 = arith.addf %81, %82 : vector<16x128xf32>
    %84 = vector.extract_strided_slice %83 {offsets = [0, 0], sizes = [16, 96], strides = [1, 1]} : vector<16x128xf32> to vector<16x96xf32>
    %85 = arith.negf %84 : vector<16x96xf32>
    %86 = math.exp %85 : vector<16x96xf32>
    %cst_27 = arith.constant 1.000000e+00 : f32
    %87 = vector.broadcast %cst_27 : f32 to vector<16x96xf32>
    %88 = arith.addf %87, %86 : vector<16x96xf32>
    %89 = arith.divf %87, %88 : vector<16x96xf32>
    %90 = vector.extract_strided_slice %83 {offsets = [0, 96], sizes = [16, 32], strides = [1, 1]} : vector<16x128xf32> to vector<16x32xf32>
    %91 = math.tanh %90 : vector<16x32xf32>
    %92 = vector.extract_strided_slice %89 {offsets = [0, 0], sizes = [16, 32], strides = [1, 1]} : vector<16x96xf32> to vector<16x32xf32>
    %93 = vector.extract_strided_slice %89 {offsets = [0, 32], sizes = [16, 32], strides = [1, 1]} : vector<16x96xf32> to vector<16x32xf32>
    %94 = vector.extract_strided_slice %89 {offsets = [0, 64], sizes = [16, 32], strides = [1, 1]} : vector<16x96xf32> to vector<16x32xf32>
    %95 = arith.mulf %93, %77 : vector<16x32xf32>
    %96 = arith.mulf %92, %91 : vector<16x32xf32>
    %97 = arith.addf %95, %96 : vector<16x32xf32>
    %98 = math.tanh %97 : vector<16x32xf32>
    %99 = arith.mulf %94, %98 : vector<16x32xf32>
    %c5 = arith.constant 5 : index
    %c0_28 = arith.constant 0 : index
    %c0_29 = arith.constant 0 : index
    %100 = vector.load %arg0[%c5, %c0_28, %c0_29] : memref<8x16x128xf32, #tpu.memory_space<vmem>>, vector<1x16x128xf32>
    %101 = vector.shape_cast %100 : vector<1x16x128xf32> to vector<16x128xf32>
    %cst_30 = arith.constant dense<0.000000e+00> : vector<16x128xf32>
    %102 = tpu.matmul %99, %0, %cst_30 {dimension_numbers = #tpu.dot_dimension_numbers<[1], [0], [0], [1], [0, 0, 1, 1], [], []>} : vector<16x32xf32>, vector<32x128xf32>, vector<16x128xf32> -> vector<16x128xf32>
    %103 = arith.addf %101, %102 : vector<16x128xf32>
    %104 = vector.extract_strided_slice %103 {offsets = [0, 0], sizes = [16, 96], strides = [1, 1]} : vector<16x128xf32> to vector<16x96xf32>
    %105 = arith.negf %104 : vector<16x96xf32>
    %106 = math.exp %105 : vector<16x96xf32>
    %cst_31 = arith.constant 1.000000e+00 : f32
    %107 = vector.broadcast %cst_31 : f32 to vector<16x96xf32>
    %108 = arith.addf %107, %106 : vector<16x96xf32>
    %109 = arith.divf %107, %108 : vector<16x96xf32>
    %110 = vector.extract_strided_slice %103 {offsets = [0, 96], sizes = [16, 32], strides = [1, 1]} : vector<16x128xf32> to vector<16x32xf32>
    %111 = math.tanh %110 : vector<16x32xf32>
    %112 = vector.extract_strided_slice %109 {offsets = [0, 0], sizes = [16, 32], strides = [1, 1]} : vector<16x96xf32> to vector<16x32xf32>
    %113 = vector.extract_strided_slice %109 {offsets = [0, 32], sizes = [16, 32], strides = [1, 1]} : vector<16x96xf32> to vector<16x32xf32>
    %114 = vector.extract_strided_slice %109 {offsets = [0, 64], sizes = [16, 32], strides = [1, 1]} : vector<16x96xf32> to vector<16x32xf32>
    %115 = arith.mulf %113, %97 : vector<16x32xf32>
    %116 = arith.mulf %112, %111 : vector<16x32xf32>
    %117 = arith.addf %115, %116 : vector<16x32xf32>
    %118 = math.tanh %117 : vector<16x32xf32>
    %119 = arith.mulf %114, %118 : vector<16x32xf32>
    %c6 = arith.constant 6 : index
    %c0_32 = arith.constant 0 : index
    %c0_33 = arith.constant 0 : index
    %120 = vector.load %arg0[%c6, %c0_32, %c0_33] : memref<8x16x128xf32, #tpu.memory_space<vmem>>, vector<1x16x128xf32>
    %121 = vector.shape_cast %120 : vector<1x16x128xf32> to vector<16x128xf32>
    %cst_34 = arith.constant dense<0.000000e+00> : vector<16x128xf32>
    %122 = tpu.matmul %119, %0, %cst_34 {dimension_numbers = #tpu.dot_dimension_numbers<[1], [0], [0], [1], [0, 0, 1, 1], [], []>} : vector<16x32xf32>, vector<32x128xf32>, vector<16x128xf32> -> vector<16x128xf32>
    %123 = arith.addf %121, %122 : vector<16x128xf32>
    %124 = vector.extract_strided_slice %123 {offsets = [0, 0], sizes = [16, 96], strides = [1, 1]} : vector<16x128xf32> to vector<16x96xf32>
    %125 = arith.negf %124 : vector<16x96xf32>
    %126 = math.exp %125 : vector<16x96xf32>
    %cst_35 = arith.constant 1.000000e+00 : f32
    %127 = vector.broadcast %cst_35 : f32 to vector<16x96xf32>
    %128 = arith.addf %127, %126 : vector<16x96xf32>
    %129 = arith.divf %127, %128 : vector<16x96xf32>
    %130 = vector.extract_strided_slice %123 {offsets = [0, 96], sizes = [16, 32], strides = [1, 1]} : vector<16x128xf32> to vector<16x32xf32>
    %131 = math.tanh %130 : vector<16x32xf32>
    %132 = vector.extract_strided_slice %129 {offsets = [0, 0], sizes = [16, 32], strides = [1, 1]} : vector<16x96xf32> to vector<16x32xf32>
    %133 = vector.extract_strided_slice %129 {offsets = [0, 32], sizes = [16, 32], strides = [1, 1]} : vector<16x96xf32> to vector<16x32xf32>
    %134 = vector.extract_strided_slice %129 {offsets = [0, 64], sizes = [16, 32], strides = [1, 1]} : vector<16x96xf32> to vector<16x32xf32>
    %135 = arith.mulf %133, %117 : vector<16x32xf32>
    %136 = arith.mulf %132, %131 : vector<16x32xf32>
    %137 = arith.addf %135, %136 : vector<16x32xf32>
    %138 = math.tanh %137 : vector<16x32xf32>
    %139 = arith.mulf %134, %138 : vector<16x32xf32>
    %c7 = arith.constant 7 : index
    %c0_36 = arith.constant 0 : index
    %c0_37 = arith.constant 0 : index
    %140 = vector.load %arg0[%c7, %c0_36, %c0_37] : memref<8x16x128xf32, #tpu.memory_space<vmem>>, vector<1x16x128xf32>
    %141 = vector.shape_cast %140 : vector<1x16x128xf32> to vector<16x128xf32>
    %cst_38 = arith.constant dense<0.000000e+00> : vector<16x128xf32>
    %142 = tpu.matmul %139, %0, %cst_38 {dimension_numbers = #tpu.dot_dimension_numbers<[1], [0], [0], [1], [0, 0, 1, 1], [], []>} : vector<16x32xf32>, vector<32x128xf32>, vector<16x128xf32> -> vector<16x128xf32>
    %143 = arith.addf %141, %142 : vector<16x128xf32>
    %144 = vector.extract_strided_slice %143 {offsets = [0, 0], sizes = [16, 96], strides = [1, 1]} : vector<16x128xf32> to vector<16x96xf32>
    %145 = arith.negf %144 : vector<16x96xf32>
    %146 = math.exp %145 : vector<16x96xf32>
    %cst_39 = arith.constant 1.000000e+00 : f32
    %147 = vector.broadcast %cst_39 : f32 to vector<16x96xf32>
    %148 = arith.addf %147, %146 : vector<16x96xf32>
    %149 = arith.divf %147, %148 : vector<16x96xf32>
    %150 = vector.extract_strided_slice %143 {offsets = [0, 96], sizes = [16, 32], strides = [1, 1]} : vector<16x128xf32> to vector<16x32xf32>
    %151 = math.tanh %150 : vector<16x32xf32>
    %152 = vector.extract_strided_slice %149 {offsets = [0, 0], sizes = [16, 32], strides = [1, 1]} : vector<16x96xf32> to vector<16x32xf32>
    %153 = vector.extract_strided_slice %149 {offsets = [0, 32], sizes = [16, 32], strides = [1, 1]} : vector<16x96xf32> to vector<16x32xf32>
    %154 = vector.extract_strided_slice %149 {offsets = [0, 64], sizes = [16, 32], strides = [1, 1]} : vector<16x96xf32> to vector<16x32xf32>
    %155 = arith.mulf %153, %137 : vector<16x32xf32>
    %156 = arith.mulf %152, %151 : vector<16x32xf32>
    %157 = arith.addf %155, %156 : vector<16x32xf32>
    %158 = math.tanh %157 : vector<16x32xf32>
    %159 = arith.mulf %154, %158 : vector<16x32xf32>
    %160 = vector.extract_strided_slice %159 {offsets = [0, 0], sizes = [8, 32], strides = [1, 1]} : vector<16x32xf32> to vector<8x32xf32>
    %161 = vector.extract_strided_slice %159 {offsets = [8, 0], sizes = [8, 32], strides = [1, 1]} : vector<16x32xf32> to vector<8x32xf32>
    %162 = tpu.concatenate %160, %161 in 1 : vector<8x32xf32>, vector<8x32xf32> -> vector<8x64xf32>
    %163 = vector.extract_strided_slice %157 {offsets = [0, 0], sizes = [8, 32], strides = [1, 1]} : vector<16x32xf32> to vector<8x32xf32>
    %164 = vector.extract_strided_slice %157 {offsets = [8, 0], sizes = [8, 32], strides = [1, 1]} : vector<16x32xf32> to vector<8x32xf32>
    %165 = tpu.concatenate %163, %164 in 1 : vector<8x32xf32>, vector<8x32xf32> -> vector<8x64xf32>
    %166 = tpu.iota {dimensions = array<i32: 1>} : vector<8x2xi32>
    %167 = tpu.iota {dimensions = array<i32: 1>} : vector<8x16xi32>
    %c0_40 = arith.constant 0 : index
    %c0_41 = arith.constant 0 : index
    %168 = vector.load %arg7[%c0_40, %c0_41] : memref<1x256xf32, #tpu.memory_space<vmem>>, vector<1x256xf32>
    %169 = vector.shape_cast %168 : vector<1x256xf32> to vector<1x256xf32>
    %170 = vector.broadcast %169 : vector<1x256xf32> to vector<8x256xf32>
    %cst_42 = arith.constant dense<0.000000e+00> : vector<8x256xf32>
    %171 = tpu.matmul %162, %1, %cst_42 {dimension_numbers = #tpu.dot_dimension_numbers<[1], [0], [0], [1], [0, 0, 1, 1], [], []>} : vector<8x64xf32>, vector<64x256xf32>, vector<8x256xf32> -> vector<8x256xf32>
    %172 = arith.addf %170, %171 : vector<8x256xf32>
    %173 = vector.extract_strided_slice %172 {offsets = [0, 0], sizes = [8, 192], strides = [1, 1]} : vector<8x256xf32> to vector<8x192xf32>
    %174 = arith.negf %173 : vector<8x192xf32>
    %175 = math.exp %174 : vector<8x192xf32>
    %cst_43 = arith.constant 1.000000e+00 : f32
    %176 = vector.broadcast %cst_43 : f32 to vector<8x192xf32>
    %177 = arith.addf %176, %175 : vector<8x192xf32>
    %178 = arith.divf %176, %177 : vector<8x192xf32>
    %179 = vector.extract_strided_slice %172 {offsets = [0, 192], sizes = [8, 64], strides = [1, 1]} : vector<8x256xf32> to vector<8x64xf32>
    %180 = math.tanh %179 : vector<8x64xf32>
    %181 = vector.extract_strided_slice %178 {offsets = [0, 0], sizes = [8, 64], strides = [1, 1]} : vector<8x192xf32> to vector<8x64xf32>
    %182 = vector.extract_strided_slice %178 {offsets = [0, 64], sizes = [8, 64], strides = [1, 1]} : vector<8x192xf32> to vector<8x64xf32>
    %183 = vector.extract_strided_slice %178 {offsets = [0, 128], sizes = [8, 64], strides = [1, 1]} : vector<8x192xf32> to vector<8x64xf32>
    %184 = arith.mulf %182, %165 : vector<8x64xf32>
    %185 = arith.mulf %181, %180 : vector<8x64xf32>
    %186 = arith.addf %184, %185 : vector<8x64xf32>
    %187 = math.tanh %186 : vector<8x64xf32>
    %188 = arith.mulf %183, %187 : vector<8x64xf32>
    %c0_44 = arith.constant 0 : index
    %c0_45 = arith.constant 0 : index
    %c0_46 = arith.constant 0 : index
    %189 = vector.load %arg5[%c0_44, %c0_45, %c0_46] : memref<8x8x64xf32, #tpu.memory_space<vmem>>, vector<1x8x64xf32>
    %190 = vector.shape_cast %189 : vector<1x8x64xf32> to vector<8x64xf32>
    %cst_47 = arith.constant dense<0.000000e+00> : vector<8x64xf32>
    %191 = tpu.matmul %188, %2, %cst_47 {dimension_numbers = #tpu.dot_dimension_numbers<[1], [0], [0], [1], [0, 0, 1, 1], [], []>} : vector<8x64xf32>, vector<64x64xf32>, vector<8x64xf32> -> vector<8x64xf32>
    %192 = arith.addf %190, %191 : vector<8x64xf32>
    %193 = math.tanh %192 : vector<8x64xf32>
    %cst_48 = arith.constant dense<0.000000e+00> : vector<8x2xf32>
    %194 = tpu.matmul %193, %3, %cst_48 {dimension_numbers = #tpu.dot_dimension_numbers<[1], [0], [0], [1], [0, 0, 1, 1], [], []>} : vector<8x64xf32>, vector<64x2xf32>, vector<8x2xf32> -> vector<8x2xf32>
    %cst_49 = arith.constant dense<0xFF800000> : vector<8xf32>
    %195 = vector.multi_reduction <maximumf>, %194, %cst_49 [1] : vector<8x2xf32> to vector<8xf32>
    %196 = vector.shape_cast %195 : vector<8xf32> to vector<8x1xf32>
    %197 = vector.broadcast %196 : vector<8x1xf32> to vector<8x2xf32>
    %198 = arith.subf %194, %197 : vector<8x2xf32>
    %199 = math.exp %198 : vector<8x2xf32>
    %cst_50 = arith.constant dense<0.000000e+00> : vector<8xf32>
    %200 = vector.multi_reduction <add>, %199, %cst_50 [1] : vector<8x2xf32> to vector<8xf32>
    %201 = vector.shape_cast %200 : vector<8xf32> to vector<8x1xf32>
    %202 = vector.broadcast %201 : vector<8x1xf32> to vector<8x2xf32>
    %203 = arith.divf %199, %202 : vector<8x2xf32>
    %c0_51 = arith.constant 0 : index
    %c0_52 = arith.constant 0 : index
    %204 = vector.load %arg11[%c0_51, %c0_52] : memref<8x16xf32, #tpu.memory_space<vmem>>, vector<8x2xf32>
    tpu.vector_store %arg11[%c0_51, %c0_52], %203 {strides = array<i32>} : memref<8x16xf32, #tpu.memory_space<vmem>>, vector<8x2xf32>,
    %c0_53 = arith.constant 0 : index
    %c0_54 = arith.constant 0 : index
    %c0_55 = arith.constant 0 : index
    %205 = vector.load %arg8[%c0_53, %c0_54, %c0_55] : memref<8x8x2xf32, #tpu.memory_space<vmem>>, vector<1x8x2xf32>
    %206 = vector.shape_cast %205 : vector<1x8x2xf32> to vector<8x2xf32>
    %207 = arith.addf %194, %206 : vector<8x2xf32>
    %cst_56 = arith.constant dense<0xFF800000> : vector<8xf32>
    %208 = vector.multi_reduction <maximumf>, %207, %cst_56 [1] : vector<8x2xf32> to vector<8xf32>
    %209 = vector.shape_cast %208 : vector<8xf32> to vector<8x1xf32>
    %210 = vector.broadcast %209 : vector<8x1xf32> to vector<8x2xf32>
    %211 = arith.cmpf oge, %207, %210 : vector<8x2xf32>
    %c2_i32 = arith.constant 2 : i32
    %212 = vector.broadcast %c2_i32 : i32 to vector<8x2xi32>
    %213 = arith.select %211, %166, %212 : vector<8x2xi1>, vector<8x2xi32>
    %cst_57 = arith.constant dense<2147483647> : vector<8xi32>
    %214 = vector.multi_reduction <minsi>, %213, %cst_57 [1] : vector<8x2xi32> to vector<8xi32>
    %215 = vector.shape_cast %214 : vector<8xi32> to vector<8x1xi32>
    %c0_58 = arith.constant 0 : index
    %216 = memref.load %arg10[%c0_58] : memref<8xi32, #tpu.memory_space<smem>>
    %c0_i32 = arith.constant 0 : i32
    %217 = arith.cmpi sgt, %216, %c0_i32 : i32
    %c0_59 = arith.constant 0 : index
    %c0_60 = arith.constant 0 : index
    %c0_61 = arith.constant 0 : index
    %218 = vector.load %arg9[%c0_59, %c0_60, %c0_61] : memref<8x8x1xi32, #tpu.memory_space<vmem>>, vector<1x8x1xi32>
    %219 = vector.shape_cast %218 : vector<1x8x1xi32> to vector<8x1xi32>
    %220 = arith.select %217, %219, %215 : vector<8x1xi32>
    %c0_62 = arith.constant 0 : index
    %c0_63 = arith.constant 0 : index
    %221 = vector.load %arg12[%c0_62, %c0_63] : memref<8x8xi32, #tpu.memory_space<vmem>>, vector<8x1xi32>
    tpu.vector_store %arg12[%c0_62, %c0_63], %220 {strides = array<i32>} : memref<8x8xi32, #tpu.memory_space<vmem>>, vector<8x1xi32>,
    %222 = vector.broadcast %220 : vector<8x1xi32> to vector<8x16xi32>
    %223 = arith.cmpi eq, %167, %222 : vector<8x16xi32>
    %224 = arith.extui %223 : vector<8x16xi1> to vector<8x16xi32>
    %225 = arith.sitofp %224 : vector<8x16xi32> to vector<8x16xf32>
    %cst_64 = arith.constant dense<0.000000e+00> : vector<8x256xf32>
    %226 = tpu.matmul %225, %4, %cst_64 {dimension_numbers = #tpu.dot_dimension_numbers<[1], [0], [0], [1], [0, 0, 1, 1], [], []>} : vector<8x16xf32>, vector<16x256xf32>, vector<8x256xf32> -> vector<8x256xf32>
    %cst_65 = arith.constant dense<0.000000e+00> : vector<8x256xf32>
    %227 = tpu.matmul %188, %1, %cst_65 {dimension_numbers = #tpu.dot_dimension_numbers<[1], [0], [0], [1], [0, 0, 1, 1], [], []>} : vector<8x64xf32>, vector<64x256xf32>, vector<8x256xf32> -> vector<8x256xf32>
    %228 = arith.addf %226, %227 : vector<8x256xf32>
    %229 = vector.extract_strided_slice %228 {offsets = [0, 0], sizes = [8, 192], strides = [1, 1]} : vector<8x256xf32> to vector<8x192xf32>
    %230 = arith.negf %229 : vector<8x192xf32>
    %231 = math.exp %230 : vector<8x192xf32>
    %cst_66 = arith.constant 1.000000e+00 : f32
    %232 = vector.broadcast %cst_66 : f32 to vector<8x192xf32>
    %233 = arith.addf %232, %231 : vector<8x192xf32>
    %234 = arith.divf %232, %233 : vector<8x192xf32>
    %235 = vector.extract_strided_slice %228 {offsets = [0, 192], sizes = [8, 64], strides = [1, 1]} : vector<8x256xf32> to vector<8x64xf32>
    %236 = math.tanh %235 : vector<8x64xf32>
    %237 = vector.extract_strided_slice %234 {offsets = [0, 0], sizes = [8, 64], strides = [1, 1]} : vector<8x192xf32> to vector<8x64xf32>
    %238 = vector.extract_strided_slice %234 {offsets = [0, 64], sizes = [8, 64], strides = [1, 1]} : vector<8x192xf32> to vector<8x64xf32>
    %239 = vector.extract_strided_slice %234 {offsets = [0, 128], sizes = [8, 64], strides = [1, 1]} : vector<8x192xf32> to vector<8x64xf32>
    %240 = arith.mulf %238, %186 : vector<8x64xf32>
    %241 = arith.mulf %237, %236 : vector<8x64xf32>
    %242 = arith.addf %240, %241 : vector<8x64xf32>
    %243 = math.tanh %242 : vector<8x64xf32>
    %244 = arith.mulf %239, %243 : vector<8x64xf32>
    %c1_67 = arith.constant 1 : index
    %c0_68 = arith.constant 0 : index
    %c0_69 = arith.constant 0 : index
    %245 = vector.load %arg5[%c1_67, %c0_68, %c0_69] : memref<8x8x64xf32, #tpu.memory_space<vmem>>, vector<1x8x64xf32>
    %246 = vector.shape_cast %245 : vector<1x8x64xf32> to vector<8x64xf32>
    %cst_70 = arith.constant dense<0.000000e+00> : vector<8x64xf32>
    %247 = tpu.matmul %244, %2, %cst_70 {dimension_numbers = #tpu.dot_dimension_numbers<[1], [0], [0], [1], [0, 0, 1, 1], [], []>} : vector<8x64xf32>, vector<64x64xf32>, vector<8x64xf32> -> vector<8x64xf32>
    %248 = arith.addf %246, %247 : vector<8x64xf32>
    %249 = math.tanh %248 : vector<8x64xf32>
    %cst_71 = arith.constant dense<0.000000e+00> : vector<8x2xf32>
    %250 = tpu.matmul %249, %3, %cst_71 {dimension_numbers = #tpu.dot_dimension_numbers<[1], [0], [0], [1], [0, 0, 1, 1], [], []>} : vector<8x64xf32>, vector<64x2xf32>, vector<8x2xf32> -> vector<8x2xf32>
    %cst_72 = arith.constant dense<0xFF800000> : vector<8xf32>
    %251 = vector.multi_reduction <maximumf>, %250, %cst_72 [1] : vector<8x2xf32> to vector<8xf32>
    %252 = vector.shape_cast %251 : vector<8xf32> to vector<8x1xf32>
    %253 = vector.broadcast %252 : vector<8x1xf32> to vector<8x2xf32>
    %254 = arith.subf %250, %253 : vector<8x2xf32>
    %255 = math.exp %254 : vector<8x2xf32>
    %cst_73 = arith.constant dense<0.000000e+00> : vector<8xf32>
    %256 = vector.multi_reduction <add>, %255, %cst_73 [1] : vector<8x2xf32> to vector<8xf32>
    %257 = vector.shape_cast %256 : vector<8xf32> to vector<8x1xf32>
    %258 = vector.broadcast %257 : vector<8x1xf32> to vector<8x2xf32>
    %259 = arith.divf %255, %258 : vector<8x2xf32>
    %c0_74 = arith.constant 0 : index
    %c2_75 = arith.constant 2 : index
    %260 = vector.load %arg11[%c0_74, %c2_75] : memref<8x16xf32, #tpu.memory_space<vmem>>, vector<8x2xf32>
    tpu.vector_store %arg11[%c0_74, %c2_75], %259 {strides = array<i32>} : memref<8x16xf32, #tpu.memory_space<vmem>>, vector<8x2xf32>,
    %c1_76 = arith.constant 1 : index
    %c0_77 = arith.constant 0 : index
    %c0_78 = arith.constant 0 : index
    %261 = vector.load %arg8[%c1_76, %c0_77, %c0_78] : memref<8x8x2xf32, #tpu.memory_space<vmem>>, vector<1x8x2xf32>
    %262 = vector.shape_cast %261 : vector<1x8x2xf32> to vector<8x2xf32>
    %263 = arith.addf %250, %262 : vector<8x2xf32>
    %cst_79 = arith.constant dense<0xFF800000> : vector<8xf32>
    %264 = vector.multi_reduction <maximumf>, %263, %cst_79 [1] : vector<8x2xf32> to vector<8xf32>
    %265 = vector.shape_cast %264 : vector<8xf32> to vector<8x1xf32>
    %266 = vector.broadcast %265 : vector<8x1xf32> to vector<8x2xf32>
    %267 = arith.cmpf oge, %263, %266 : vector<8x2xf32>
    %c2_i32_80 = arith.constant 2 : i32
    %268 = vector.broadcast %c2_i32_80 : i32 to vector<8x2xi32>
    %269 = arith.select %267, %166, %268 : vector<8x2xi1>, vector<8x2xi32>
    %cst_81 = arith.constant dense<2147483647> : vector<8xi32>
    %270 = vector.multi_reduction <minsi>, %269, %cst_81 [1] : vector<8x2xi32> to vector<8xi32>
    %271 = vector.shape_cast %270 : vector<8xi32> to vector<8x1xi32>
    %c1_82 = arith.constant 1 : index
    %272 = memref.load %arg10[%c1_82] : memref<8xi32, #tpu.memory_space<smem>>
    %c0_i32_83 = arith.constant 0 : i32
    %273 = arith.cmpi sgt, %272, %c0_i32_83 : i32
    %c1_84 = arith.constant 1 : index
    %c0_85 = arith.constant 0 : index
    %c0_86 = arith.constant 0 : index
    %274 = vector.load %arg9[%c1_84, %c0_85, %c0_86] : memref<8x8x1xi32, #tpu.memory_space<vmem>>, vector<1x8x1xi32>
    %275 = vector.shape_cast %274 : vector<1x8x1xi32> to vector<8x1xi32>
    %276 = arith.select %273, %275, %271 : vector<8x1xi32>
    %c0_87 = arith.constant 0 : index
    %c1_88 = arith.constant 1 : index
    %277 = vector.load %arg12[%c0_87, %c1_88] : memref<8x8xi32, #tpu.memory_space<vmem>>, vector<8x1xi32>
    tpu.vector_store %arg12[%c0_87, %c1_88], %276 {strides = array<i32>} : memref<8x8xi32, #tpu.memory_space<vmem>>, vector<8x1xi32>,
    %278 = vector.broadcast %276 : vector<8x1xi32> to vector<8x16xi32>
    %279 = arith.cmpi eq, %167, %278 : vector<8x16xi32>
    %280 = arith.extui %279 : vector<8x16xi1> to vector<8x16xi32>
    %281 = arith.sitofp %280 : vector<8x16xi32> to vector<8x16xf32>
    %cst_89 = arith.constant dense<0.000000e+00> : vector<8x256xf32>
    %282 = tpu.matmul %281, %4, %cst_89 {dimension_numbers = #tpu.dot_dimension_numbers<[1], [0], [0], [1], [0, 0, 1, 1], [], []>} : vector<8x16xf32>, vector<16x256xf32>, vector<8x256xf32> -> vector<8x256xf32>
    %cst_90 = arith.constant dense<0.000000e+00> : vector<8x256xf32>
    %283 = tpu.matmul %244, %1, %cst_90 {dimension_numbers = #tpu.dot_dimension_numbers<[1], [0], [0], [1], [0, 0, 1, 1], [], []>} : vector<8x64xf32>, vector<64x256xf32>, vector<8x256xf32> -> vector<8x256xf32>
    %284 = arith.addf %282, %283 : vector<8x256xf32>
    %285 = vector.extract_strided_slice %284 {offsets = [0, 0], sizes = [8, 192], strides = [1, 1]} : vector<8x256xf32> to vector<8x192xf32>
    %286 = arith.negf %285 : vector<8x192xf32>
    %287 = math.exp %286 : vector<8x192xf32>
    %cst_91 = arith.constant 1.000000e+00 : f32
    %288 = vector.broadcast %cst_91 : f32 to vector<8x192xf32>
    %289 = arith.addf %288, %287 : vector<8x192xf32>
    %290 = arith.divf %288, %289 : vector<8x192xf32>
    %291 = vector.extract_strided_slice %284 {offsets = [0, 192], sizes = [8, 64], strides = [1, 1]} : vector<8x256xf32> to vector<8x64xf32>
    %292 = math.tanh %291 : vector<8x64xf32>
    %293 = vector.extract_strided_slice %290 {offsets = [0, 0], sizes = [8, 64], strides = [1, 1]} : vector<8x192xf32> to vector<8x64xf32>
    %294 = vector.extract_strided_slice %290 {offsets = [0, 64], sizes = [8, 64], strides = [1, 1]} : vector<8x192xf32> to vector<8x64xf32>
    %295 = vector.extract_strided_slice %290 {offsets = [0, 128], sizes = [8, 64], strides = [1, 1]} : vector<8x192xf32> to vector<8x64xf32>
    %296 = arith.mulf %294, %242 : vector<8x64xf32>
    %297 = arith.mulf %293, %292 : vector<8x64xf32>
    %298 = arith.addf %296, %297 : vector<8x64xf32>
    %299 = math.tanh %298 : vector<8x64xf32>
    %300 = arith.mulf %295, %299 : vector<8x64xf32>
    %c2_92 = arith.constant 2 : index
    %c0_93 = arith.constant 0 : index
    %c0_94 = arith.constant 0 : index
    %301 = vector.load %arg5[%c2_92, %c0_93, %c0_94] : memref<8x8x64xf32, #tpu.memory_space<vmem>>, vector<1x8x64xf32>
    %302 = vector.shape_cast %301 : vector<1x8x64xf32> to vector<8x64xf32>
    %cst_95 = arith.constant dense<0.000000e+00> : vector<8x64xf32>
    %303 = tpu.matmul %300, %2, %cst_95 {dimension_numbers = #tpu.dot_dimension_numbers<[1], [0], [0], [1], [0, 0, 1, 1], [], []>} : vector<8x64xf32>, vector<64x64xf32>, vector<8x64xf32> -> vector<8x64xf32>
    %304 = arith.addf %302, %303 : vector<8x64xf32>
    %305 = math.tanh %304 : vector<8x64xf32>
    %cst_96 = arith.constant dense<0.000000e+00> : vector<8x2xf32>
    %306 = tpu.matmul %305, %3, %cst_96 {dimension_numbers = #tpu.dot_dimension_numbers<[1], [0], [0], [1], [0, 0, 1, 1], [], []>} : vector<8x64xf32>, vector<64x2xf32>, vector<8x2xf32> -> vector<8x2xf32>
    %cst_97 = arith.constant dense<0xFF800000> : vector<8xf32>
    %307 = vector.multi_reduction <maximumf>, %306, %cst_97 [1] : vector<8x2xf32> to vector<8xf32>
    %308 = vector.shape_cast %307 : vector<8xf32> to vector<8x1xf32>
    %309 = vector.broadcast %308 : vector<8x1xf32> to vector<8x2xf32>
    %310 = arith.subf %306, %309 : vector<8x2xf32>
    %311 = math.exp %310 : vector<8x2xf32>
    %cst_98 = arith.constant dense<0.000000e+00> : vector<8xf32>
    %312 = vector.multi_reduction <add>, %311, %cst_98 [1] : vector<8x2xf32> to vector<8xf32>
    %313 = vector.shape_cast %312 : vector<8xf32> to vector<8x1xf32>
    %314 = vector.broadcast %313 : vector<8x1xf32> to vector<8x2xf32>
    %315 = arith.divf %311, %314 : vector<8x2xf32>
    %c0_99 = arith.constant 0 : index
    %c4_100 = arith.constant 4 : index
    %316 = vector.load %arg11[%c0_99, %c4_100] : memref<8x16xf32, #tpu.memory_space<vmem>>, vector<8x2xf32>
    tpu.vector_store %arg11[%c0_99, %c4_100], %315 {strides = array<i32>} : memref<8x16xf32, #tpu.memory_space<vmem>>, vector<8x2xf32>,
    %c2_101 = arith.constant 2 : index
    %c0_102 = arith.constant 0 : index
    %c0_103 = arith.constant 0 : index
    %317 = vector.load %arg8[%c2_101, %c0_102, %c0_103] : memref<8x8x2xf32, #tpu.memory_space<vmem>>, vector<1x8x2xf32>
    %318 = vector.shape_cast %317 : vector<1x8x2xf32> to vector<8x2xf32>
    %319 = arith.addf %306, %318 : vector<8x2xf32>
    %cst_104 = arith.constant dense<0xFF800000> : vector<8xf32>
    %320 = vector.multi_reduction <maximumf>, %319, %cst_104 [1] : vector<8x2xf32> to vector<8xf32>
    %321 = vector.shape_cast %320 : vector<8xf32> to vector<8x1xf32>
    %322 = vector.broadcast %321 : vector<8x1xf32> to vector<8x2xf32>
    %323 = arith.cmpf oge, %319, %322 : vector<8x2xf32>
    %c2_i32_105 = arith.constant 2 : i32
    %324 = vector.broadcast %c2_i32_105 : i32 to vector<8x2xi32>
    %325 = arith.select %323, %166, %324 : vector<8x2xi1>, vector<8x2xi32>
    %cst_106 = arith.constant dense<2147483647> : vector<8xi32>
    %326 = vector.multi_reduction <minsi>, %325, %cst_106 [1] : vector<8x2xi32> to vector<8xi32>
    %327 = vector.shape_cast %326 : vector<8xi32> to vector<8x1xi32>
    %c2_107 = arith.constant 2 : index
    %328 = memref.load %arg10[%c2_107] : memref<8xi32, #tpu.memory_space<smem>>
    %c0_i32_108 = arith.constant 0 : i32
    %329 = arith.cmpi sgt, %328, %c0_i32_108 : i32
    %c2_109 = arith.constant 2 : index
    %c0_110 = arith.constant 0 : index
    %c0_111 = arith.constant 0 : index
    %330 = vector.load %arg9[%c2_109, %c0_110, %c0_111] : memref<8x8x1xi32, #tpu.memory_space<vmem>>, vector<1x8x1xi32>
    %331 = vector.shape_cast %330 : vector<1x8x1xi32> to vector<8x1xi32>
    %332 = arith.select %329, %331, %327 : vector<8x1xi32>
    %c0_112 = arith.constant 0 : index
    %c2_113 = arith.constant 2 : index
    %333 = vector.load %arg12[%c0_112, %c2_113] : memref<8x8xi32, #tpu.memory_space<vmem>>, vector<8x1xi32>
    tpu.vector_store %arg12[%c0_112, %c2_113], %332 {strides = array<i32>} : memref<8x8xi32, #tpu.memory_space<vmem>>, vector<8x1xi32>,
    %334 = vector.broadcast %332 : vector<8x1xi32> to vector<8x16xi32>
    %335 = arith.cmpi eq, %167, %334 : vector<8x16xi32>
    %336 = arith.extui %335 : vector<8x16xi1> to vector<8x16xi32>
    %337 = arith.sitofp %336 : vector<8x16xi32> to vector<8x16xf32>
    %cst_114 = arith.constant dense<0.000000e+00> : vector<8x256xf32>
    %338 = tpu.matmul %337, %4, %cst_114 {dimension_numbers = #tpu.dot_dimension_numbers<[1], [0], [0], [1], [0, 0, 1, 1], [], []>} : vector<8x16xf32>, vector<16x256xf32>, vector<8x256xf32> -> vector<8x256xf32>
    %cst_115 = arith.constant dense<0.000000e+00> : vector<8x256xf32>
    %339 = tpu.matmul %300, %1, %cst_115 {dimension_numbers = #tpu.dot_dimension_numbers<[1], [0], [0], [1], [0, 0, 1, 1], [], []>} : vector<8x64xf32>, vector<64x256xf32>, vector<8x256xf32> -> vector<8x256xf32>
    %340 = arith.addf %338, %339 : vector<8x256xf32>
    %341 = vector.extract_strided_slice %340 {offsets = [0, 0], sizes = [8, 192], strides = [1, 1]} : vector<8x256xf32> to vector<8x192xf32>
    %342 = arith.negf %341 : vector<8x192xf32>
    %343 = math.exp %342 : vector<8x192xf32>
    %cst_116 = arith.constant 1.000000e+00 : f32
    %344 = vector.broadcast %cst_116 : f32 to vector<8x192xf32>
    %345 = arith.addf %344, %343 : vector<8x192xf32>
    %346 = arith.divf %344, %345 : vector<8x192xf32>
    %347 = vector.extract_strided_slice %340 {offsets = [0, 192], sizes = [8, 64], strides = [1, 1]} : vector<8x256xf32> to vector<8x64xf32>
    %348 = math.tanh %347 : vector<8x64xf32>
    %349 = vector.extract_strided_slice %346 {offsets = [0, 0], sizes = [8, 64], strides = [1, 1]} : vector<8x192xf32> to vector<8x64xf32>
    %350 = vector.extract_strided_slice %346 {offsets = [0, 64], sizes = [8, 64], strides = [1, 1]} : vector<8x192xf32> to vector<8x64xf32>
    %351 = vector.extract_strided_slice %346 {offsets = [0, 128], sizes = [8, 64], strides = [1, 1]} : vector<8x192xf32> to vector<8x64xf32>
    %352 = arith.mulf %350, %298 : vector<8x64xf32>
    %353 = arith.mulf %349, %348 : vector<8x64xf32>
    %354 = arith.addf %352, %353 : vector<8x64xf32>
    %355 = math.tanh %354 : vector<8x64xf32>
    %356 = arith.mulf %351, %355 : vector<8x64xf32>
    %c3_117 = arith.constant 3 : index
    %c0_118 = arith.constant 0 : index
    %c0_119 = arith.constant 0 : index
    %357 = vector.load %arg5[%c3_117, %c0_118, %c0_119] : memref<8x8x64xf32, #tpu.memory_space<vmem>>, vector<1x8x64xf32>
    %358 = vector.shape_cast %357 : vector<1x8x64xf32> to vector<8x64xf32>
    %cst_120 = arith.constant dense<0.000000e+00> : vector<8x64xf32>
    %359 = tpu.matmul %356, %2, %cst_120 {dimension_numbers = #tpu.dot_dimension_numbers<[1], [0], [0], [1], [0, 0, 1, 1], [], []>} : vector<8x64xf32>, vector<64x64xf32>, vector<8x64xf32> -> vector<8x64xf32>
    %360 = arith.addf %358, %359 : vector<8x64xf32>
    %361 = math.tanh %360 : vector<8x64xf32>
    %cst_121 = arith.constant dense<0.000000e+00> : vector<8x2xf32>
    %362 = tpu.matmul %361, %3, %cst_121 {dimension_numbers = #tpu.dot_dimension_numbers<[1], [0], [0], [1], [0, 0, 1, 1], [], []>} : vector<8x64xf32>, vector<64x2xf32>, vector<8x2xf32> -> vector<8x2xf32>
    %cst_122 = arith.constant dense<0xFF800000> : vector<8xf32>
    %363 = vector.multi_reduction <maximumf>, %362, %cst_122 [1] : vector<8x2xf32> to vector<8xf32>
    %364 = vector.shape_cast %363 : vector<8xf32> to vector<8x1xf32>
    %365 = vector.broadcast %364 : vector<8x1xf32> to vector<8x2xf32>
    %366 = arith.subf %362, %365 : vector<8x2xf32>
    %367 = math.exp %366 : vector<8x2xf32>
    %cst_123 = arith.constant dense<0.000000e+00> : vector<8xf32>
    %368 = vector.multi_reduction <add>, %367, %cst_123 [1] : vector<8x2xf32> to vector<8xf32>
    %369 = vector.shape_cast %368 : vector<8xf32> to vector<8x1xf32>
    %370 = vector.broadcast %369 : vector<8x1xf32> to vector<8x2xf32>
    %371 = arith.divf %367, %370 : vector<8x2xf32>
    %c0_124 = arith.constant 0 : index
    %c6_125 = arith.constant 6 : index
    %372 = vector.load %arg11[%c0_124, %c6_125] : memref<8x16xf32, #tpu.memory_space<vmem>>, vector<8x2xf32>
    tpu.vector_store %arg11[%c0_124, %c6_125], %371 {strides = array<i32>} : memref<8x16xf32, #tpu.memory_space<vmem>>, vector<8x2xf32>,
    %c3_126 = arith.constant 3 : index
    %c0_127 = arith.constant 0 : index
    %c0_128 = arith.constant 0 : index
    %373 = vector.load %arg8[%c3_126, %c0_127, %c0_128] : memref<8x8x2xf32, #tpu.memory_space<vmem>>, vector<1x8x2xf32>
    %374 = vector.shape_cast %373 : vector<1x8x2xf32> to vector<8x2xf32>
    %375 = arith.addf %362, %374 : vector<8x2xf32>
    %cst_129 = arith.constant dense<0xFF800000> : vector<8xf32>
    %376 = vector.multi_reduction <maximumf>, %375, %cst_129 [1] : vector<8x2xf32> to vector<8xf32>
    %377 = vector.shape_cast %376 : vector<8xf32> to vector<8x1xf32>
    %378 = vector.broadcast %377 : vector<8x1xf32> to vector<8x2xf32>
    %379 = arith.cmpf oge, %375, %378 : vector<8x2xf32>
    %c2_i32_130 = arith.constant 2 : i32
    %380 = vector.broadcast %c2_i32_130 : i32 to vector<8x2xi32>
    %381 = arith.select %379, %166, %380 : vector<8x2xi1>, vector<8x2xi32>
    %cst_131 = arith.constant dense<2147483647> : vector<8xi32>
    %382 = vector.multi_reduction <minsi>, %381, %cst_131 [1] : vector<8x2xi32> to vector<8xi32>
    %383 = vector.shape_cast %382 : vector<8xi32> to vector<8x1xi32>
    %c3_132 = arith.constant 3 : index
    %384 = memref.load %arg10[%c3_132] : memref<8xi32, #tpu.memory_space<smem>>
    %c0_i32_133 = arith.constant 0 : i32
    %385 = arith.cmpi sgt, %384, %c0_i32_133 : i32
    %c3_134 = arith.constant 3 : index
    %c0_135 = arith.constant 0 : index
    %c0_136 = arith.constant 0 : index
    %386 = vector.load %arg9[%c3_134, %c0_135, %c0_136] : memref<8x8x1xi32, #tpu.memory_space<vmem>>, vector<1x8x1xi32>
    %387 = vector.shape_cast %386 : vector<1x8x1xi32> to vector<8x1xi32>
    %388 = arith.select %385, %387, %383 : vector<8x1xi32>
    %c0_137 = arith.constant 0 : index
    %c3_138 = arith.constant 3 : index
    %389 = vector.load %arg12[%c0_137, %c3_138] : memref<8x8xi32, #tpu.memory_space<vmem>>, vector<8x1xi32>
    tpu.vector_store %arg12[%c0_137, %c3_138], %388 {strides = array<i32>} : memref<8x8xi32, #tpu.memory_space<vmem>>, vector<8x1xi32>,
    %390 = vector.broadcast %388 : vector<8x1xi32> to vector<8x16xi32>
    %391 = arith.cmpi eq, %167, %390 : vector<8x16xi32>
    %392 = arith.extui %391 : vector<8x16xi1> to vector<8x16xi32>
    %393 = arith.sitofp %392 : vector<8x16xi32> to vector<8x16xf32>
    %cst_139 = arith.constant dense<0.000000e+00> : vector<8x256xf32>
    %394 = tpu.matmul %393, %4, %cst_139 {dimension_numbers = #tpu.dot_dimension_numbers<[1], [0], [0], [1], [0, 0, 1, 1], [], []>} : vector<8x16xf32>, vector<16x256xf32>, vector<8x256xf32> -> vector<8x256xf32>
    %cst_140 = arith.constant dense<0.000000e+00> : vector<8x256xf32>
    %395 = tpu.matmul %356, %1, %cst_140 {dimension_numbers = #tpu.dot_dimension_numbers<[1], [0], [0], [1], [0, 0, 1, 1], [], []>} : vector<8x64xf32>, vector<64x256xf32>, vector<8x256xf32> -> vector<8x256xf32>
    %396 = arith.addf %394, %395 : vector<8x256xf32>
    %397 = vector.extract_strided_slice %396 {offsets = [0, 0], sizes = [8, 192], strides = [1, 1]} : vector<8x256xf32> to vector<8x192xf32>
    %398 = arith.negf %397 : vector<8x192xf32>
    %399 = math.exp %398 : vector<8x192xf32>
    %cst_141 = arith.constant 1.000000e+00 : f32
    %400 = vector.broadcast %cst_141 : f32 to vector<8x192xf32>
    %401 = arith.addf %400, %399 : vector<8x192xf32>
    %402 = arith.divf %400, %401 : vector<8x192xf32>
    %403 = vector.extract_strided_slice %396 {offsets = [0, 192], sizes = [8, 64], strides = [1, 1]} : vector<8x256xf32> to vector<8x64xf32>
    %404 = math.tanh %403 : vector<8x64xf32>
    %405 = vector.extract_strided_slice %402 {offsets = [0, 0], sizes = [8, 64], strides = [1, 1]} : vector<8x192xf32> to vector<8x64xf32>
    %406 = vector.extract_strided_slice %402 {offsets = [0, 64], sizes = [8, 64], strides = [1, 1]} : vector<8x192xf32> to vector<8x64xf32>
    %407 = vector.extract_strided_slice %402 {offsets = [0, 128], sizes = [8, 64], strides = [1, 1]} : vector<8x192xf32> to vector<8x64xf32>
    %408 = arith.mulf %406, %354 : vector<8x64xf32>
    %409 = arith.mulf %405, %404 : vector<8x64xf32>
    %410 = arith.addf %408, %409 : vector<8x64xf32>
    %411 = math.tanh %410 : vector<8x64xf32>
    %412 = arith.mulf %407, %411 : vector<8x64xf32>
    %c4_142 = arith.constant 4 : index
    %c0_143 = arith.constant 0 : index
    %c0_144 = arith.constant 0 : index
    %413 = vector.load %arg5[%c4_142, %c0_143, %c0_144] : memref<8x8x64xf32, #tpu.memory_space<vmem>>, vector<1x8x64xf32>
    %414 = vector.shape_cast %413 : vector<1x8x64xf32> to vector<8x64xf32>
    %cst_145 = arith.constant dense<0.000000e+00> : vector<8x64xf32>
    %415 = tpu.matmul %412, %2, %cst_145 {dimension_numbers = #tpu.dot_dimension_numbers<[1], [0], [0], [1], [0, 0, 1, 1], [], []>} : vector<8x64xf32>, vector<64x64xf32>, vector<8x64xf32> -> vector<8x64xf32>
    %416 = arith.addf %414, %415 : vector<8x64xf32>
    %417 = math.tanh %416 : vector<8x64xf32>
    %cst_146 = arith.constant dense<0.000000e+00> : vector<8x2xf32>
    %418 = tpu.matmul %417, %3, %cst_146 {dimension_numbers = #tpu.dot_dimension_numbers<[1], [0], [0], [1], [0, 0, 1, 1], [], []>} : vector<8x64xf32>, vector<64x2xf32>, vector<8x2xf32> -> vector<8x2xf32>
    %cst_147 = arith.constant dense<0xFF800000> : vector<8xf32>
    %419 = vector.multi_reduction <maximumf>, %418, %cst_147 [1] : vector<8x2xf32> to vector<8xf32>
    %420 = vector.shape_cast %419 : vector<8xf32> to vector<8x1xf32>
    %421 = vector.broadcast %420 : vector<8x1xf32> to vector<8x2xf32>
    %422 = arith.subf %418, %421 : vector<8x2xf32>
    %423 = math.exp %422 : vector<8x2xf32>
    %cst_148 = arith.constant dense<0.000000e+00> : vector<8xf32>
    %424 = vector.multi_reduction <add>, %423, %cst_148 [1] : vector<8x2xf32> to vector<8xf32>
    %425 = vector.shape_cast %424 : vector<8xf32> to vector<8x1xf32>
    %426 = vector.broadcast %425 : vector<8x1xf32> to vector<8x2xf32>
    %427 = arith.divf %423, %426 : vector<8x2xf32>
    %c0_149 = arith.constant 0 : index
    %c8 = arith.constant 8 : index
    %428 = vector.load %arg11[%c0_149, %c8] : memref<8x16xf32, #tpu.memory_space<vmem>>, vector<8x2xf32>
    tpu.vector_store %arg11[%c0_149, %c8], %427 {strides = array<i32>} : memref<8x16xf32, #tpu.memory_space<vmem>>, vector<8x2xf32>,
    %c4_150 = arith.constant 4 : index
    %c0_151 = arith.constant 0 : index
    %c0_152 = arith.constant 0 : index
    %429 = vector.load %arg8[%c4_150, %c0_151, %c0_152] : memref<8x8x2xf32, #tpu.memory_space<vmem>>, vector<1x8x2xf32>
    %430 = vector.shape_cast %429 : vector<1x8x2xf32> to vector<8x2xf32>
    %431 = arith.addf %418, %430 : vector<8x2xf32>
    %cst_153 = arith.constant dense<0xFF800000> : vector<8xf32>
    %432 = vector.multi_reduction <maximumf>, %431, %cst_153 [1] : vector<8x2xf32> to vector<8xf32>
    %433 = vector.shape_cast %432 : vector<8xf32> to vector<8x1xf32>
    %434 = vector.broadcast %433 : vector<8x1xf32> to vector<8x2xf32>
    %435 = arith.cmpf oge, %431, %434 : vector<8x2xf32>
    %c2_i32_154 = arith.constant 2 : i32
    %436 = vector.broadcast %c2_i32_154 : i32 to vector<8x2xi32>
    %437 = arith.select %435, %166, %436 : vector<8x2xi1>, vector<8x2xi32>
    %cst_155 = arith.constant dense<2147483647> : vector<8xi32>
    %438 = vector.multi_reduction <minsi>, %437, %cst_155 [1] : vector<8x2xi32> to vector<8xi32>
    %439 = vector.shape_cast %438 : vector<8xi32> to vector<8x1xi32>
    %c4_156 = arith.constant 4 : index
    %440 = memref.load %arg10[%c4_156] : memref<8xi32, #tpu.memory_space<smem>>
    %c0_i32_157 = arith.constant 0 : i32
    %441 = arith.cmpi sgt, %440, %c0_i32_157 : i32
    %c4_158 = arith.constant 4 : index
    %c0_159 = arith.constant 0 : index
    %c0_160 = arith.constant 0 : index
    %442 = vector.load %arg9[%c4_158, %c0_159, %c0_160] : memref<8x8x1xi32, #tpu.memory_space<vmem>>, vector<1x8x1xi32>
    %443 = vector.shape_cast %442 : vector<1x8x1xi32> to vector<8x1xi32>
    %444 = arith.select %441, %443, %439 : vector<8x1xi32>
    %c0_161 = arith.constant 0 : index
    %c4_162 = arith.constant 4 : index
    %445 = vector.load %arg12[%c0_161, %c4_162] : memref<8x8xi32, #tpu.memory_space<vmem>>, vector<8x1xi32>
    tpu.vector_store %arg12[%c0_161, %c4_162], %444 {strides = array<i32>} : memref<8x8xi32, #tpu.memory_space<vmem>>, vector<8x1xi32>,
    %446 = vector.broadcast %444 : vector<8x1xi32> to vector<8x16xi32>
    %447 = arith.cmpi eq, %167, %446 : vector<8x16xi32>
    %448 = arith.extui %447 : vector<8x16xi1> to vector<8x16xi32>
    %449 = arith.sitofp %448 : vector<8x16xi32> to vector<8x16xf32>
    %cst_163 = arith.constant dense<0.000000e+00> : vector<8x256xf32>
    %450 = tpu.matmul %449, %4, %cst_163 {dimension_numbers = #tpu.dot_dimension_numbers<[1], [0], [0], [1], [0, 0, 1, 1], [], []>} : vector<8x16xf32>, vector<16x256xf32>, vector<8x256xf32> -> vector<8x256xf32>
    %cst_164 = arith.constant dense<0.000000e+00> : vector<8x256xf32>
    %451 = tpu.matmul %412, %1, %cst_164 {dimension_numbers = #tpu.dot_dimension_numbers<[1], [0], [0], [1], [0, 0, 1, 1], [], []>} : vector<8x64xf32>, vector<64x256xf32>, vector<8x256xf32> -> vector<8x256xf32>
    %452 = arith.addf %450, %451 : vector<8x256xf32>
    %453 = vector.extract_strided_slice %452 {offsets = [0, 0], sizes = [8, 192], strides = [1, 1]} : vector<8x256xf32> to vector<8x192xf32>
    %454 = arith.negf %453 : vector<8x192xf32>
    %455 = math.exp %454 : vector<8x192xf32>
    %cst_165 = arith.constant 1.000000e+00 : f32
    %456 = vector.broadcast %cst_165 : f32 to vector<8x192xf32>
    %457 = arith.addf %456, %455 : vector<8x192xf32>
    %458 = arith.divf %456, %457 : vector<8x192xf32>
    %459 = vector.extract_strided_slice %452 {offsets = [0, 192], sizes = [8, 64], strides = [1, 1]} : vector<8x256xf32> to vector<8x64xf32>
    %460 = math.tanh %459 : vector<8x64xf32>
    %461 = vector.extract_strided_slice %458 {offsets = [0, 0], sizes = [8, 64], strides = [1, 1]} : vector<8x192xf32> to vector<8x64xf32>
    %462 = vector.extract_strided_slice %458 {offsets = [0, 64], sizes = [8, 64], strides = [1, 1]} : vector<8x192xf32> to vector<8x64xf32>
    %463 = vector.extract_strided_slice %458 {offsets = [0, 128], sizes = [8, 64], strides = [1, 1]} : vector<8x192xf32> to vector<8x64xf32>
    %464 = arith.mulf %462, %410 : vector<8x64xf32>
    %465 = arith.mulf %461, %460 : vector<8x64xf32>
    %466 = arith.addf %464, %465 : vector<8x64xf32>
    %467 = math.tanh %466 : vector<8x64xf32>
    %468 = arith.mulf %463, %467 : vector<8x64xf32>
    %c5_166 = arith.constant 5 : index
    %c0_167 = arith.constant 0 : index
    %c0_168 = arith.constant 0 : index
    %469 = vector.load %arg5[%c5_166, %c0_167, %c0_168] : memref<8x8x64xf32, #tpu.memory_space<vmem>>, vector<1x8x64xf32>
    %470 = vector.shape_cast %469 : vector<1x8x64xf32> to vector<8x64xf32>
    %cst_169 = arith.constant dense<0.000000e+00> : vector<8x64xf32>
    %471 = tpu.matmul %468, %2, %cst_169 {dimension_numbers = #tpu.dot_dimension_numbers<[1], [0], [0], [1], [0, 0, 1, 1], [], []>} : vector<8x64xf32>, vector<64x64xf32>, vector<8x64xf32> -> vector<8x64xf32>
    %472 = arith.addf %470, %471 : vector<8x64xf32>
    %473 = math.tanh %472 : vector<8x64xf32>
    %cst_170 = arith.constant dense<0.000000e+00> : vector<8x2xf32>
    %474 = tpu.matmul %473, %3, %cst_170 {dimension_numbers = #tpu.dot_dimension_numbers<[1], [0], [0], [1], [0, 0, 1, 1], [], []>} : vector<8x64xf32>, vector<64x2xf32>, vector<8x2xf32> -> vector<8x2xf32>
    %cst_171 = arith.constant dense<0xFF800000> : vector<8xf32>
    %475 = vector.multi_reduction <maximumf>, %474, %cst_171 [1] : vector<8x2xf32> to vector<8xf32>
    %476 = vector.shape_cast %475 : vector<8xf32> to vector<8x1xf32>
    %477 = vector.broadcast %476 : vector<8x1xf32> to vector<8x2xf32>
    %478 = arith.subf %474, %477 : vector<8x2xf32>
    %479 = math.exp %478 : vector<8x2xf32>
    %cst_172 = arith.constant dense<0.000000e+00> : vector<8xf32>
    %480 = vector.multi_reduction <add>, %479, %cst_172 [1] : vector<8x2xf32> to vector<8xf32>
    %481 = vector.shape_cast %480 : vector<8xf32> to vector<8x1xf32>
    %482 = vector.broadcast %481 : vector<8x1xf32> to vector<8x2xf32>
    %483 = arith.divf %479, %482 : vector<8x2xf32>
    %c0_173 = arith.constant 0 : index
    %c10 = arith.constant 10 : index
    %484 = vector.load %arg11[%c0_173, %c10] : memref<8x16xf32, #tpu.memory_space<vmem>>, vector<8x2xf32>
    tpu.vector_store %arg11[%c0_173, %c10], %483 {strides = array<i32>} : memref<8x16xf32, #tpu.memory_space<vmem>>, vector<8x2xf32>,
    %c5_174 = arith.constant 5 : index
    %c0_175 = arith.constant 0 : index
    %c0_176 = arith.constant 0 : index
    %485 = vector.load %arg8[%c5_174, %c0_175, %c0_176] : memref<8x8x2xf32, #tpu.memory_space<vmem>>, vector<1x8x2xf32>
    %486 = vector.shape_cast %485 : vector<1x8x2xf32> to vector<8x2xf32>
    %487 = arith.addf %474, %486 : vector<8x2xf32>
    %cst_177 = arith.constant dense<0xFF800000> : vector<8xf32>
    %488 = vector.multi_reduction <maximumf>, %487, %cst_177 [1] : vector<8x2xf32> to vector<8xf32>
    %489 = vector.shape_cast %488 : vector<8xf32> to vector<8x1xf32>
    %490 = vector.broadcast %489 : vector<8x1xf32> to vector<8x2xf32>
    %491 = arith.cmpf oge, %487, %490 : vector<8x2xf32>
    %c2_i32_178 = arith.constant 2 : i32
    %492 = vector.broadcast %c2_i32_178 : i32 to vector<8x2xi32>
    %493 = arith.select %491, %166, %492 : vector<8x2xi1>, vector<8x2xi32>
    %cst_179 = arith.constant dense<2147483647> : vector<8xi32>
    %494 = vector.multi_reduction <minsi>, %493, %cst_179 [1] : vector<8x2xi32> to vector<8xi32>
    %495 = vector.shape_cast %494 : vector<8xi32> to vector<8x1xi32>
    %c5_180 = arith.constant 5 : index
    %496 = memref.load %arg10[%c5_180] : memref<8xi32, #tpu.memory_space<smem>>
    %c0_i32_181 = arith.constant 0 : i32
    %497 = arith.cmpi sgt, %496, %c0_i32_181 : i32
    %c5_182 = arith.constant 5 : index
    %c0_183 = arith.constant 0 : index
    %c0_184 = arith.constant 0 : index
    %498 = vector.load %arg9[%c5_182, %c0_183, %c0_184] : memref<8x8x1xi32, #tpu.memory_space<vmem>>, vector<1x8x1xi32>
    %499 = vector.shape_cast %498 : vector<1x8x1xi32> to vector<8x1xi32>
    %500 = arith.select %497, %499, %495 : vector<8x1xi32>
    %c0_185 = arith.constant 0 : index
    %c5_186 = arith.constant 5 : index
    %501 = vector.load %arg12[%c0_185, %c5_186] : memref<8x8xi32, #tpu.memory_space<vmem>>, vector<8x1xi32>
    tpu.vector_store %arg12[%c0_185, %c5_186], %500 {strides = array<i32>} : memref<8x8xi32, #tpu.memory_space<vmem>>, vector<8x1xi32>,
    %502 = vector.broadcast %500 : vector<8x1xi32> to vector<8x16xi32>
    %503 = arith.cmpi eq, %167, %502 : vector<8x16xi32>
    %504 = arith.extui %503 : vector<8x16xi1> to vector<8x16xi32>
    %505 = arith.sitofp %504 : vector<8x16xi32> to vector<8x16xf32>
    %cst_187 = arith.constant dense<0.000000e+00> : vector<8x256xf32>
    %506 = tpu.matmul %505, %4, %cst_187 {dimension_numbers = #tpu.dot_dimension_numbers<[1], [0], [0], [1], [0, 0, 1, 1], [], []>} : vector<8x16xf32>, vector<16x256xf32>, vector<8x256xf32> -> vector<8x256xf32>
    %cst_188 = arith.constant dense<0.000000e+00> : vector<8x256xf32>
    %507 = tpu.matmul %468, %1, %cst_188 {dimension_numbers = #tpu.dot_dimension_numbers<[1], [0], [0], [1], [0, 0, 1, 1], [], []>} : vector<8x64xf32>, vector<64x256xf32>, vector<8x256xf32> -> vector<8x256xf32>
    %508 = arith.addf %506, %507 : vector<8x256xf32>
    %509 = vector.extract_strided_slice %508 {offsets = [0, 0], sizes = [8, 192], strides = [1, 1]} : vector<8x256xf32> to vector<8x192xf32>
    %510 = arith.negf %509 : vector<8x192xf32>
    %511 = math.exp %510 : vector<8x192xf32>
    %cst_189 = arith.constant 1.000000e+00 : f32
    %512 = vector.broadcast %cst_189 : f32 to vector<8x192xf32>
    %513 = arith.addf %512, %511 : vector<8x192xf32>
    %514 = arith.divf %512, %513 : vector<8x192xf32>
    %515 = vector.extract_strided_slice %508 {offsets = [0, 192], sizes = [8, 64], strides = [1, 1]} : vector<8x256xf32> to vector<8x64xf32>
    %516 = math.tanh %515 : vector<8x64xf32>
    %517 = vector.extract_strided_slice %514 {offsets = [0, 0], sizes = [8, 64], strides = [1, 1]} : vector<8x192xf32> to vector<8x64xf32>
    %518 = vector.extract_strided_slice %514 {offsets = [0, 64], sizes = [8, 64], strides = [1, 1]} : vector<8x192xf32> to vector<8x64xf32>
    %519 = vector.extract_strided_slice %514 {offsets = [0, 128], sizes = [8, 64], strides = [1, 1]} : vector<8x192xf32> to vector<8x64xf32>
    %520 = arith.mulf %518, %466 : vector<8x64xf32>
    %521 = arith.mulf %517, %516 : vector<8x64xf32>
    %522 = arith.addf %520, %521 : vector<8x64xf32>
    %523 = math.tanh %522 : vector<8x64xf32>
    %524 = arith.mulf %519, %523 : vector<8x64xf32>
    %c6_190 = arith.constant 6 : index
    %c0_191 = arith.constant 0 : index
    %c0_192 = arith.constant 0 : index
    %525 = vector.load %arg5[%c6_190, %c0_191, %c0_192] : memref<8x8x64xf32, #tpu.memory_space<vmem>>, vector<1x8x64xf32>
    %526 = vector.shape_cast %525 : vector<1x8x64xf32> to vector<8x64xf32>
    %cst_193 = arith.constant dense<0.000000e+00> : vector<8x64xf32>
    %527 = tpu.matmul %524, %2, %cst_193 {dimension_numbers = #tpu.dot_dimension_numbers<[1], [0], [0], [1], [0, 0, 1, 1], [], []>} : vector<8x64xf32>, vector<64x64xf32>, vector<8x64xf32> -> vector<8x64xf32>
    %528 = arith.addf %526, %527 : vector<8x64xf32>
    %529 = math.tanh %528 : vector<8x64xf32>
    %cst_194 = arith.constant dense<0.000000e+00> : vector<8x2xf32>
    %530 = tpu.matmul %529, %3, %cst_194 {dimension_numbers = #tpu.dot_dimension_numbers<[1], [0], [0], [1], [0, 0, 1, 1], [], []>} : vector<8x64xf32>, vector<64x2xf32>, vector<8x2xf32> -> vector<8x2xf32>
    %cst_195 = arith.constant dense<0xFF800000> : vector<8xf32>
    %531 = vector.multi_reduction <maximumf>, %530, %cst_195 [1] : vector<8x2xf32> to vector<8xf32>
    %532 = vector.shape_cast %531 : vector<8xf32> to vector<8x1xf32>
    %533 = vector.broadcast %532 : vector<8x1xf32> to vector<8x2xf32>
    %534 = arith.subf %530, %533 : vector<8x2xf32>
    %535 = math.exp %534 : vector<8x2xf32>
    %cst_196 = arith.constant dense<0.000000e+00> : vector<8xf32>
    %536 = vector.multi_reduction <add>, %535, %cst_196 [1] : vector<8x2xf32> to vector<8xf32>
    %537 = vector.shape_cast %536 : vector<8xf32> to vector<8x1xf32>
    %538 = vector.broadcast %537 : vector<8x1xf32> to vector<8x2xf32>
    %539 = arith.divf %535, %538 : vector<8x2xf32>
    %c0_197 = arith.constant 0 : index
    %c12 = arith.constant 12 : index
    %540 = vector.load %arg11[%c0_197, %c12] : memref<8x16xf32, #tpu.memory_space<vmem>>, vector<8x2xf32>
    tpu.vector_store %arg11[%c0_197, %c12], %539 {strides = array<i32>} : memref<8x16xf32, #tpu.memory_space<vmem>>, vector<8x2xf32>,
    %c6_198 = arith.constant 6 : index
    %c0_199 = arith.constant 0 : index
    %c0_200 = arith.constant 0 : index
    %541 = vector.load %arg8[%c6_198, %c0_199, %c0_200] : memref<8x8x2xf32, #tpu.memory_space<vmem>>, vector<1x8x2xf32>
    %542 = vector.shape_cast %541 : vector<1x8x2xf32> to vector<8x2xf32>
    %543 = arith.addf %530, %542 : vector<8x2xf32>
    %cst_201 = arith.constant dense<0xFF800000> : vector<8xf32>
    %544 = vector.multi_reduction <maximumf>, %543, %cst_201 [1] : vector<8x2xf32> to vector<8xf32>
    %545 = vector.shape_cast %544 : vector<8xf32> to vector<8x1xf32>
    %546 = vector.broadcast %545 : vector<8x1xf32> to vector<8x2xf32>
    %547 = arith.cmpf oge, %543, %546 : vector<8x2xf32>
    %c2_i32_202 = arith.constant 2 : i32
    %548 = vector.broadcast %c2_i32_202 : i32 to vector<8x2xi32>
    %549 = arith.select %547, %166, %548 : vector<8x2xi1>, vector<8x2xi32>
    %cst_203 = arith.constant dense<2147483647> : vector<8xi32>
    %550 = vector.multi_reduction <minsi>, %549, %cst_203 [1] : vector<8x2xi32> to vector<8xi32>
    %551 = vector.shape_cast %550 : vector<8xi32> to vector<8x1xi32>
    %c6_204 = arith.constant 6 : index
    %552 = memref.load %arg10[%c6_204] : memref<8xi32, #tpu.memory_space<smem>>
    %c0_i32_205 = arith.constant 0 : i32
    %553 = arith.cmpi sgt, %552, %c0_i32_205 : i32
    %c6_206 = arith.constant 6 : index
    %c0_207 = arith.constant 0 : index
    %c0_208 = arith.constant 0 : index
    %554 = vector.load %arg9[%c6_206, %c0_207, %c0_208] : memref<8x8x1xi32, #tpu.memory_space<vmem>>, vector<1x8x1xi32>
    %555 = vector.shape_cast %554 : vector<1x8x1xi32> to vector<8x1xi32>
    %556 = arith.select %553, %555, %551 : vector<8x1xi32>
    %c0_209 = arith.constant 0 : index
    %c6_210 = arith.constant 6 : index
    %557 = vector.load %arg12[%c0_209, %c6_210] : memref<8x8xi32, #tpu.memory_space<vmem>>, vector<8x1xi32>
    tpu.vector_store %arg12[%c0_209, %c6_210], %556 {strides = array<i32>} : memref<8x8xi32, #tpu.memory_space<vmem>>, vector<8x1xi32>,
    %558 = vector.broadcast %556 : vector<8x1xi32> to vector<8x16xi32>
    %559 = arith.cmpi eq, %167, %558 : vector<8x16xi32>
    %560 = arith.extui %559 : vector<8x16xi1> to vector<8x16xi32>
    %561 = arith.sitofp %560 : vector<8x16xi32> to vector<8x16xf32>
    %cst_211 = arith.constant dense<0.000000e+00> : vector<8x256xf32>
    %562 = tpu.matmul %561, %4, %cst_211 {dimension_numbers = #tpu.dot_dimension_numbers<[1], [0], [0], [1], [0, 0, 1, 1], [], []>} : vector<8x16xf32>, vector<16x256xf32>, vector<8x256xf32> -> vector<8x256xf32>
    %cst_212 = arith.constant dense<0.000000e+00> : vector<8x256xf32>
    %563 = tpu.matmul %524, %1, %cst_212 {dimension_numbers = #tpu.dot_dimension_numbers<[1], [0], [0], [1], [0, 0, 1, 1], [], []>} : vector<8x64xf32>, vector<64x256xf32>, vector<8x256xf32> -> vector<8x256xf32>
    %564 = arith.addf %562, %563 : vector<8x256xf32>
    %565 = vector.extract_strided_slice %564 {offsets = [0, 0], sizes = [8, 192], strides = [1, 1]} : vector<8x256xf32> to vector<8x192xf32>
    %566 = arith.negf %565 : vector<8x192xf32>
    %567 = math.exp %566 : vector<8x192xf32>
    %cst_213 = arith.constant 1.000000e+00 : f32
    %568 = vector.broadcast %cst_213 : f32 to vector<8x192xf32>
    %569 = arith.addf %568, %567 : vector<8x192xf32>
    %570 = arith.divf %568, %569 : vector<8x192xf32>
    %571 = vector.extract_strided_slice %564 {offsets = [0, 192], sizes = [8, 64], strides = [1, 1]} : vector<8x256xf32> to vector<8x64xf32>
    %572 = math.tanh %571 : vector<8x64xf32>
    %573 = vector.extract_strided_slice %570 {offsets = [0, 0], sizes = [8, 64], strides = [1, 1]} : vector<8x192xf32> to vector<8x64xf32>
    %574 = vector.extract_strided_slice %570 {offsets = [0, 64], sizes = [8, 64], strides = [1, 1]} : vector<8x192xf32> to vector<8x64xf32>
    %575 = vector.extract_strided_slice %570 {offsets = [0, 128], sizes = [8, 64], strides = [1, 1]} : vector<8x192xf32> to vector<8x64xf32>
    %576 = arith.mulf %574, %522 : vector<8x64xf32>
    %577 = arith.mulf %573, %572 : vector<8x64xf32>
    %578 = arith.addf %576, %577 : vector<8x64xf32>
    %579 = math.tanh %578 : vector<8x64xf32>
    %580 = arith.mulf %575, %579 : vector<8x64xf32>
    %c7_214 = arith.constant 7 : index
    %c0_215 = arith.constant 0 : index
    %c0_216 = arith.constant 0 : index
    %581 = vector.load %arg5[%c7_214, %c0_215, %c0_216] : memref<8x8x64xf32, #tpu.memory_space<vmem>>, vector<1x8x64xf32>
    %582 = vector.shape_cast %581 : vector<1x8x64xf32> to vector<8x64xf32>
    %cst_217 = arith.constant dense<0.000000e+00> : vector<8x64xf32>
    %583 = tpu.matmul %580, %2, %cst_217 {dimension_numbers = #tpu.dot_dimension_numbers<[1], [0], [0], [1], [0, 0, 1, 1], [], []>} : vector<8x64xf32>, vector<64x64xf32>, vector<8x64xf32> -> vector<8x64xf32>
    %584 = arith.addf %582, %583 : vector<8x64xf32>
    %585 = math.tanh %584 : vector<8x64xf32>
    %cst_218 = arith.constant dense<0.000000e+00> : vector<8x2xf32>
    %586 = tpu.matmul %585, %3, %cst_218 {dimension_numbers = #tpu.dot_dimension_numbers<[1], [0], [0], [1], [0, 0, 1, 1], [], []>} : vector<8x64xf32>, vector<64x2xf32>, vector<8x2xf32> -> vector<8x2xf32>
    %cst_219 = arith.constant dense<0xFF800000> : vector<8xf32>
    %587 = vector.multi_reduction <maximumf>, %586, %cst_219 [1] : vector<8x2xf32> to vector<8xf32>
    %588 = vector.shape_cast %587 : vector<8xf32> to vector<8x1xf32>
    %589 = vector.broadcast %588 : vector<8x1xf32> to vector<8x2xf32>
    %590 = arith.subf %586, %589 : vector<8x2xf32>
    %591 = math.exp %590 : vector<8x2xf32>
    %cst_220 = arith.constant dense<0.000000e+00> : vector<8xf32>
    %592 = vector.multi_reduction <add>, %591, %cst_220 [1] : vector<8x2xf32> to vector<8xf32>
    %593 = vector.shape_cast %592 : vector<8xf32> to vector<8x1xf32>
    %594 = vector.broadcast %593 : vector<8x1xf32> to vector<8x2xf32>
    %595 = arith.divf %591, %594 : vector<8x2xf32>
    %c0_221 = arith.constant 0 : index
    %c14 = arith.constant 14 : index
    %596 = vector.load %arg11[%c0_221, %c14] : memref<8x16xf32, #tpu.memory_space<vmem>>, vector<8x2xf32>
    tpu.vector_store %arg11[%c0_221, %c14], %595 {strides = array<i32>} : memref<8x16xf32, #tpu.memory_space<vmem>>, vector<8x2xf32>,
    %c7_222 = arith.constant 7 : index
    %c0_223 = arith.constant 0 : index
    %c0_224 = arith.constant 0 : index
    %597 = vector.load %arg8[%c7_222, %c0_223, %c0_224] : memref<8x8x2xf32, #tpu.memory_space<vmem>>, vector<1x8x2xf32>
    %598 = vector.shape_cast %597 : vector<1x8x2xf32> to vector<8x2xf32>
    %599 = arith.addf %586, %598 : vector<8x2xf32>
    %cst_225 = arith.constant dense<0xFF800000> : vector<8xf32>
    %600 = vector.multi_reduction <maximumf>, %599, %cst_225 [1] : vector<8x2xf32> to vector<8xf32>
    %601 = vector.shape_cast %600 : vector<8xf32> to vector<8x1xf32>
    %602 = vector.broadcast %601 : vector<8x1xf32> to vector<8x2xf32>
    %603 = arith.cmpf oge, %599, %602 : vector<8x2xf32>
    %c2_i32_226 = arith.constant 2 : i32
    %604 = vector.broadcast %c2_i32_226 : i32 to vector<8x2xi32>
    %605 = arith.select %603, %166, %604 : vector<8x2xi1>, vector<8x2xi32>
    %cst_227 = arith.constant dense<2147483647> : vector<8xi32>
    %606 = vector.multi_reduction <minsi>, %605, %cst_227 [1] : vector<8x2xi32> to vector<8xi32>
    %607 = vector.shape_cast %606 : vector<8xi32> to vector<8x1xi32>
    %c7_228 = arith.constant 7 : index
    %608 = memref.load %arg10[%c7_228] : memref<8xi32, #tpu.memory_space<smem>>
    %c0_i32_229 = arith.constant 0 : i32
    %609 = arith.cmpi sgt, %608, %c0_i32_229 : i32
    %c7_230 = arith.constant 7 : index
    %c0_231 = arith.constant 0 : index
    %c0_232 = arith.constant 0 : index
    %610 = vector.load %arg9[%c7_230, %c0_231, %c0_232] : memref<8x8x1xi32, #tpu.memory_space<vmem>>, vector<1x8x1xi32>
    %611 = vector.shape_cast %610 : vector<1x8x1xi32> to vector<8x1xi32>
    %612 = arith.select %609, %611, %607 : vector<8x1xi32>
    %c0_233 = arith.constant 0 : index
    %c7_234 = arith.constant 7 : index
    %613 = vector.load %arg12[%c0_233, %c7_234] : memref<8x8xi32, #tpu.memory_space<vmem>>, vector<8x1xi32>
    tpu.vector_store %arg12[%c0_233, %c7_234], %612 {strides = array<i32>} : memref<8x8xi32, #tpu.memory_space<vmem>>, vector<8x1xi32>,
    return
  }
}

</mosaic_0001>

<llo_original>
// kernel: neural_crossover_forward.3
$region0: #{neural_crossover_forward.3}
  #allocation0 [shape = 'u32[]', space=smem, size = 0x4, offset = 0x4, fixed_abs, tag = 'smem constant byte address 0x4 - core index']
  #allocation1 [shape = 'u32[144,128]{1,0:T(1,128)}', space=vmem, size = 0x12000, scoped, tag = 'internal scratch']
  %s0 = inlined_call_operand.vmem [shape: f32[8,16,128], index: 0, kind: input, shape index: {}]
  %s1 = inlined_call_operand.vmem [shape: f32[32,128], index: 1, kind: input, shape index: {}]
  %s2 = inlined_call_operand.vmem [shape: f32[64,256], index: 2, kind: input, shape index: {}]
  %s3 = inlined_call_operand.vmem [shape: f32[64,64], index: 3, kind: input, shape index: {}]
  %s4 = inlined_call_operand.vmem [shape: f32[64,2], index: 4, kind: input, shape index: {}]
  %s5 = inlined_call_operand.vmem [shape: f32[8,8,64], index: 5, kind: input, shape index: {}]
  %s6 = inlined_call_operand.vmem [shape: f32[16,256], index: 6, kind: input, shape index: {}]
  %s7 = inlined_call_operand.vmem [shape: f32[1,256], index: 7, kind: input, shape index: {}]
  %s8 = inlined_call_operand.vmem [shape: f32[8,8,2], index: 8, kind: input, shape index: {}]
  %s9 = inlined_call_operand.vmem [shape: s32[8,8,1], index: 9, kind: input, shape index: {}]
  %s10 = inlined_call_operand.vmem [shape: s32[8], index: 10, kind: input, shape index: {}]
  %s11 = inlined_call_operand.vmem [shape: f32[8,16], index: 11, kind: output, shape index: {0}]
  %s12 = inlined_call_operand.hbm [shape: s32[8,8], index: 12, kind: output, shape index: {1}]
  %13 = xla_tuple %s11, %s12
  %s14 = sld [smem:[#allocation0]]
  $region66: #{neural_crossover_forward.3} parent=0
    _
  %s16 = ssub.s32 1, %s14
  %s17 = scalar_select 0, %s16, %s14
  $region1: #{neural_crossover_forward.3} parent=0
    #allocation2 [shape = 'u8[512]{0}', space=smem, size = 0x200, scoped, tag = 'input window, operand 10, single buffered']
    #allocation3 [shape = 's32[1]{0}', space=sflag, size = 0x4, scoped, tag = 'scoped memory for neural_crossover_forward.3']
    #allocation4 [shape = 's32[1]{0}', space=sflag, size = 0x4, scoped, tag = 'scoped memory for neural_crossover_forward.3']
    #allocation5 [shape = 'u8[4096]{0}', space=vmem, size = 0x1000, scoped, tag = 'output window, operand 1, single buffered']
    %18 = vsyncpa [#allocation4], 0
    %19 = vsyncpa [#allocation3], 0
    // Predicated region
    $region2: #{neural_crossover_forward.3} parent=1 // pred_check
      _
    $region3: #{neural_crossover_forward.3} parent=1 // pred_check_branch
      %21 = sbr.rel (0) target = $region5
    $region4: #{neural_crossover_forward.3} parent=1 // pred_region
      _
    $region5: #{neural_crossover_forward.3} parent=1 // pred_fallthru
      _
    // Predicated region
    $region6: #{neural_crossover_forward.3} parent=1 // pred_check
      _
    $region7: #{neural_crossover_forward.3} parent=1 // pred_check_branch
      %23 = sbr.rel (0) target = $region9
    $region8: #{neural_crossover_forward.3} parent=1 // pred_region
      _
    $region9: #{neural_crossover_forward.3} parent=1 // pred_fallthru
      _
    // Predicated region
    $region10: #{neural_crossover_forward.3} parent=1 // pred_check
      _
    $region11: #{neural_crossover_forward.3} parent=1 // pred_check_branch
      %25 = sbr.rel (0) target = $region13
    $region12: #{neural_crossover_forward.3} parent=1 // pred_region
      _
    $region13: #{neural_crossover_forward.3} parent=1 // pred_fallthru
      _
    // Predicated region
    $region14: #{neural_crossover_forward.3} parent=1 // pred_check
      _
    $region15: #{neural_crossover_forward.3} parent=1 // pred_check_branch
      %27 = sbr.rel (0) target = $region17
    $region16: #{neural_crossover_forward.3} parent=1 // pred_region
      _
    $region17: #{neural_crossover_forward.3} parent=1 // pred_fallthru
      _
    // Predicated region
    $region18: #{neural_crossover_forward.3} parent=1 // pred_check
      _
    $region19: #{neural_crossover_forward.3} parent=1 // pred_check_branch
      %29 = sbr.rel (0) target = $region21
    $region20: #{neural_crossover_forward.3} parent=1 // pred_region
      _
    $region21: #{neural_crossover_forward.3} parent=1 // pred_fallthru
      _
    // Predicated region
    $region22: #{neural_crossover_forward.3} parent=1 // pred_check
      _
    $region23: #{neural_crossover_forward.3} parent=1 // pred_check_branch
      %31 = sbr.rel (0) target = $region25
    $region24: #{neural_crossover_forward.3} parent=1 // pred_region
      _
    $region25: #{neural_crossover_forward.3} parent=1 // pred_fallthru
      _
    // Predicated region
    $region26: #{neural_crossover_forward.3} parent=1 // pred_check
      _
    $region27: #{neural_crossover_forward.3} parent=1 // pred_check_branch
      %33 = sbr.rel (0) target = $region29
    $region28: #{neural_crossover_forward.3} parent=1 // pred_region
      _
    $region29: #{neural_crossover_forward.3} parent=1 // pred_fallthru
      _
    // Predicated region
    $region30: #{neural_crossover_forward.3} parent=1 // pred_check
      _
    $region31: #{neural_crossover_forward.3} parent=1 // pred_check_branch
      %35 = sbr.rel (0) target = $region33
    $region32: #{neural_crossover_forward.3} parent=1 // pred_region
      _
    $region33: #{neural_crossover_forward.3} parent=1 // pred_fallthru
      _
    // Predicated region
    $region34: #{neural_crossover_forward.3} parent=1 // pred_check
      _
    $region35: #{neural_crossover_forward.3} parent=1 // pred_check_branch
      %37 = sbr.rel (0) target = $region37
    $region36: #{neural_crossover_forward.3} parent=1 // pred_region
      _
    $region37: #{neural_crossover_forward.3} parent=1 // pred_fallthru
      _
    // Predicated region
    $region38: #{neural_crossover_forward.3} parent=1 // pred_check
      _
    $region39: #{neural_crossover_forward.3} parent=1 // pred_check_branch
      %39 = sbr.rel (0) target = $region41
    $region40: #{neural_crossover_forward.3} parent=1 // pred_region
      _
    $region41: #{neural_crossover_forward.3} parent=1 // pred_fallthru
      _
    // Predicated region
    $region42: #{neural_crossover_forward.3} parent=1 // pred_check
      _
    $region43: #{neural_crossover_forward.3} parent=1 // pred_check_branch
      %41 = sbr.rel (0) target = $region45
    $region44: #{neural_crossover_forward.3} parent=1 // pred_region
      %s43 = ssub.s32 16, 16
      %44 = vsyncadd [#allocation4], %s43
      %s46 = sshll.u32 %s10, 4
      %s47 = int_to_ptr.vmem [resolvable:$true] %s46
      %49 = dma.vmem_to_smem %s47, 16, [#allocation2], [#allocation4]
    $region45: #{neural_crossover_forward.3} parent=1 // pred_fallthru
      _
    // Predicated region
    $region46: #{neural_crossover_forward.3} parent=1 // pred_check
      _
    $region47: #{neural_crossover_forward.3} parent=1 // pred_check_branch
      %51 = sbr.rel (0) target = $region49
    $region48: #{neural_crossover_forward.3} parent=1 // pred_region
      %52 = dma.done [#allocation4], 16
    $region49: #{neural_crossover_forward.3} parent=1 // pred_fallthru
      _
    %53 = sfence
    %v54 = vld [vmem:[%s1] sm:$0xff]
    %v55 = vld [vmem:[%s1 + $0x8] sm:$0xff]
    %v56 = vld [vmem:[%s1 + $0x10] sm:$0xff]
    %v57 = vld [vmem:[%s1 + $0x18] sm:$0xff]
    %v58 = vld [vmem:[%s2] sm:$0xff]
    %v59 = vld [vmem:[%s2 + $0x8] sm:$0xff]
    %v60 = vld [vmem:[%s2 + $0x10] sm:$0xff]
    %v61 = vld [vmem:[%s2 + $0x18] sm:$0xff]
    %v62 = vld [vmem:[%s2 + $0x20] sm:$0xff]
    %v63 = vld [vmem:[%s2 + $0x28] sm:$0xff]
    %v64 = vld [vmem:[%s2 + $0x30] sm:$0xff]
    %v65 = vld [vmem:[%s2 + $0x38] sm:$0xff]
    %v66 = vld [vmem:[%s2 + $0x40] sm:$0xff]
    %v67 = vld [vmem:[%s2 + $0x48] sm:$0xff]
    %v68 = vld [vmem:[%s2 + $0x50] sm:$0xff]
    %v69 = vld [vmem:[%s2 + $0x58] sm:$0xff]
    %v70 = vld [vmem:[%s2 + $0x60] sm:$0xff]
    %v71 = vld [vmem:[%s2 + $0x68] sm:$0xff]
    %v72 = vld [vmem:[%s2 + $0x70] sm:$0xff]
    %v73 = vld [vmem:[%s2 + $0x78] sm:$0xff]
    %v74 = vld [vmem:[%s3] sm:$0xff]
    %v75 = vld [vmem:[%s3 + $0x8] sm:$0xff]
    %v76 = vld [vmem:[%s3 + $0x10] sm:$0xff]
    %v77 = vld [vmem:[%s3 + $0x18] sm:$0xff]
    %v78 = vld [vmem:[%s3 + $0x20] sm:$0xff]
    %v79 = vld [vmem:[%s3 + $0x28] sm:$0xff]
    %v80 = vld [vmem:[%s3 + $0x30] sm:$0xff]
    %v81 = vld [vmem:[%s3 + $0x38] sm:$0xff]
    %v82 = vld [vmem:[%s4] sm:$0xff]
    %v83 = vld [vmem:[%s4 + $0x8] sm:$0xff]
    %v84 = vld [vmem:[%s4 + $0x10] sm:$0xff]
    %v85 = vld [vmem:[%s4 + $0x18] sm:$0xff]
    %v86 = vld [vmem:[%s4 + $0x20] sm:$0xff]
    %v87 = vld [vmem:[%s4 + $0x28] sm:$0xff]
    %v88 = vld [vmem:[%s4 + $0x30] sm:$0xff]
    %v89 = vld [vmem:[%s4 + $0x38] sm:$0xff]
    %v90 = vld [vmem:[%s6] sm:$0xff]
    %v91 = vld [vmem:[%s6 + $0x8] sm:$0xff]
    %v92 = vld [vmem:[%s6 + $0x10] sm:$0xff]
    %v93 = vld [vmem:[%s6 + $0x18] sm:$0xff]
    %v94 = vld [vmem:[%s0] sm:$0xff]
    %v95 = vld [vmem:[%s0 + $0x8] sm:$0xff]
    %v96 = vxor.u32 %v94, 2147483648
    %v97 = vxor.u32 %v95, 2147483648
    %v98 = vmul.f32 %v96, 1.442695
    %v99 = vpow.pop %v98
    %v100 = vmul.f32 %v97, 1.442695
    %v101 = vpow.pop %v100
    %v102 = vadd.f32 %v99, 1.0
    %v103 = vadd.f32 %v101, 1.0
    %v104 = vrcp.pop %v102
    %v105 = vmul.f32 1.0, %v104
    %v106 = vrcp.pop %v103
    %v107 = vmul.f32 1.0, %v106
    %v108 = vtanh.pop %v94
    %v109 = vtanh.pop %v95
    %112 = vrot.lane.b32.xlu0 %v108, 32
    %v113 = vpop.permute.xlu0 %112
    %114 = vrot.lane.b32.xlu0 %v109, 32
    %v115 = vpop.permute.xlu0 %114
    %v118 = vmul.f32 %v105, %v113
    %v119 = vmul.f32 %v107, %v115
    %v120 = vtanh.pop %v118
    %v121 = vtanh.pop %v119
    %124 = vrot.lane.b32.xlu0 %v120, 64
    %v125 = vpop.permute.xlu0 %124
    %126 = vrot.lane.b32.xlu0 %v121, 64
    %v127 = vpop.permute.xlu0 %126
    %v130 = vmul.f32 %v105, %v125
    %v131 = vmul.f32 %v107, %v127
    %s132 = scalar_lea.vmem %s0, 16
    %v133 = vld [vmem:[%s132] sm:$0xff]
    %v134 = vld [vmem:[%s132 + $0x8] sm:$0xff]
    %137 = vrot.lane.b32.xlu0 %v130, 64
    %v138 = vpop.permute.xlu0 %137
    %139 = vrot.lane.b32.xlu0 %v131, 64
    %v140 = vpop.permute.xlu0 %139
    %vm141 = vcmask 261120
    %v142 = vsel %vm141, %v138, 0
    %v144 = vsel %vm141, %v140, 0
    %146 = vmatprep.subr.mxu0 0.0
    %147 = vmatpush1.msra.mxu0 %v54
    %148 = vmatprep.subr.mxu0 0.0
    %149 = vmatpush1.msra.mxu0 %v55
    %150 = vmatprep.subr.mxu0 0.0
    %151 = vmatpush1.msra.mxu0 %v56
    %152 = vmatprep.subr.mxu0 0.0
    %153 = vmatpush1.msra.mxu0 %v57
    %154 = vmatprep.subr.mxu0 0.0
    %155 = vmatpush1.msra.mxu0 0.0
    %156 = vmatprep.subr.mxu0 0.0
    %157 = vmatpush1.msra.mxu0 0.0
    %158 = vmatprep.subr.mxu0 0.0
    %159 = vmatpush1.msra.mxu0 0.0
    %160 = vmatprep.subr.mxu0 0.0
    %161 = vmatpush1.msra.mxu0 0.0
    %162 = vmatprep.subr.mxu0 0.0
    %163 = vmatpush1.msra.mxu0 0.0
    %164 = vmatprep.subr.mxu0 0.0
    %165 = vmatpush1.msra.mxu0 0.0
    %166 = vmatprep.subr.mxu0 0.0
    %167 = vmatpush1.msra.mxu0 0.0
    %168 = vmatprep.subr.mxu0 0.0
    %169 = vmatpush1.msra.mxu0 0.0
    %170 = vmatprep.subr.mxu0 0.0
    %171 = vmatpush1.msra.mxu0 0.0
    %172 = vmatprep.subr.mxu0 0.0
    %173 = vmatpush1.msra.mxu0 0.0
    %174 = vmatprep.subr.mxu0 0.0
    %175 = vmatpush1.msra.mxu0 0.0
    %176 = vmatprep.subr.mxu0 0.0
    %177 = vmatpush1.msra.mxu0 0.0
    %178 = vmatprep.subr.mxu0 0.0
    %179 = vmatpush1.msra.mxu0 0.0
    %180 = vmatprep.subr.mxu0 0.0
    %181 = vmatpush1.msra.mxu0 0.0
    %182 = vmatprep.subr.mxu0 0.0
    %183 = vmatpush1.msra.mxu0 0.0
    %184 = vmatprep.subr.mxu0 0.0
    %185 = vmatpush1.msra.mxu0 0.0
    %186 = vmatprep.subr.mxu0 0.0
    %187 = vmatpush1.msra.mxu0 0.0
    %188 = vmatprep.subr.mxu0 0.0
    %189 = vmatpush1.msra.mxu0 0.0
    %190 = vmatprep.subr.mxu0 0.0
    %191 = vmatpush1.msra.mxu0 0.0
    %192 = vmatprep.subr.mxu0 0.0
    %193 = vmatpush1.msra.mxu0 0.0
    %194 = vmatprep.subr.mxu0 0.0
    %195 = vmatpush1.msra.mxu0 0.0
    %196 = vmatprep.subr.mxu0 0.0
    %197 = vmatpush1.msra.mxu0 0.0
    %198 = vmatprep.subr.mxu0 0.0
    %199 = vmatpush1.msra.mxu0 0.0
    %200 = vmatprep.subr.mxu0 0.0
    %201 = vmatpush1.msra.mxu0 0.0
    %202 = vmatprep.subr.mxu0 0.0
    %203 = vmatpush1.msra.mxu0 0.0
    %204 = vmatprep.subr.mxu0 0.0
    %205 = vmatpush1.msra.mxu0 0.0
    %206 = vmatprep.subr.mxu0 0.0
    %207 = vmatpush1.msra.mxu0 0.0
    %208 = vmatprep.subr.mxu0 0.0
    %209 = vmatpush1.msra.mxu0 0.0
    %210 = vmatprep.mubr.f32.mxu0 0.0
    %211 = vmatmul.mubr.f32.gmra.mrb[0].mxu0 %v142
    %v212 = vpop.f32.mrb[0].mxu0
    %v213 = vadd.f32 0.0, %v212
    %v214 = vpop.f32.mrb[0].mxu0
    %215 = vmatprep.mubr.f32.mxu0 0.0
    %216 = vmatmul.mubr.f32.gmra.mrb[0].mxu0 %v144
    %v217 = vpop.f32.mrb[0].mxu0
    %v218 = vadd.f32 0.0, %v217
    %v219 = vpop.f32.mrb[0].mxu0
    %220 = vdwg.mxu0
    %v221 = vadd.f32 %v133, %v213
    %v222 = vadd.f32 %v134, %v218
    %v223 = vxor.u32 %v221, 2147483648
    %v224 = vxor.u32 %v222, 2147483648
    %v225 = vmul.f32 %v223, 1.442695
    %v226 = vpow.pop %v225
    %v227 = vmul.f32 %v224, 1.442695
    %v228 = vpow.pop %v227
    %v229 = vadd.f32 %v226, 1.0
    %v230 = vadd.f32 %v228, 1.0
    %v231 = vrcp.pop %v229
    %v232 = vmul.f32 1.0, %v231
    %v233 = vrcp.pop %v230
    %v234 = vmul.f32 1.0, %v233
    %v235 = vtanh.pop %v221
    %v236 = vtanh.pop %v222
    %239 = vrot.lane.b32.xlu0 %v118, 32
    %v240 = vpop.permute.xlu0 %239
    %241 = vrot.lane.b32.xlu0 %v119, 32
    %v242 = vpop.permute.xlu0 %241
    %v245 = vmul.f32 %v232, %v240
    %v246 = vmul.f32 %v234, %v242
    %249 = vrot.lane.b32.xlu0 %v235, 32
    %v250 = vpop.permute.xlu0 %249
    %251 = vrot.lane.b32.xlu0 %v236, 32
    %v252 = vpop.permute.xlu0 %251
    %v255 = vmul.f32 %v232, %v250
    %v256 = vmul.f32 %v234, %v252
    %259 = vrot.lane.b32.xlu0 %v255, 32
    %v260 = vpop.permute.xlu0 %259
    %261 = vrot.lane.b32.xlu0 %v256, 32
    %v262 = vpop.permute.xlu0 %261
    %v265 = vadd.f32 %v245, %v260
    %v266 = vadd.f32 %v246, %v262
    %v267 = vtanh.pop %v265
    %v268 = vtanh.pop %v266
    %271 = vrot.lane.b32.xlu0 %v267, 32
    %v272 = vpop.permute.xlu0 %271
    %273 = vrot.lane.b32.xlu0 %v268, 32
    %v274 = vpop.permute.xlu0 %273
    %v277 = vmul.f32 %v232, %v272
    %v278 = vmul.f32 %v234, %v274
    %s279 = scalar_lea.vmem %s0, 32
    %v280 = vld [vmem:[%s279] sm:$0xff]
    %v281 = vld [vmem:[%s279 + $0x8] sm:$0xff]
    %284 = vrot.lane.b32.xlu0 %v277, 64
    %v285 = vpop.permute.xlu0 %284
    %286 = vrot.lane.b32.xlu0 %v278, 64
    %v287 = vpop.permute.xlu0 %286
    %v288 = vsel %vm141, %v285, 0
    %v290 = vsel %vm141, %v287, 0
    %292 = vmatprep.subr.mxu0 0.0
    %293 = vmatpush1.msra.mxu0 %v54
    %294 = vmatprep.subr.mxu0 0.0
    %295 = vmatpush1.msra.mxu0 %v55
    %296 = vmatprep.subr.mxu0 0.0
    %297 = vmatpush1.msra.mxu0 %v56
    %298 = vmatprep.subr.mxu0 0.0
    %299 = vmatpush1.msra.mxu0 %v57
    %300 = vmatprep.subr.mxu0 0.0
    %301 = vmatpush1.msra.mxu0 0.0
    %302 = vmatprep.subr.mxu0 0.0
    %303 = vmatpush1.msra.mxu0 0.0
    %304 = vmatprep.subr.mxu0 0.0
    %305 = vmatpush1.msra.mxu0 0.0
    %306 = vmatprep.subr.mxu0 0.0
    %307 = vmatpush1.msra.mxu0 0.0
    %308 = vmatprep.subr.mxu0 0.0
    %309 = vmatpush1.msra.mxu0 0.0
    %310 = vmatprep.subr.mxu0 0.0
    %311 = vmatpush1.msra.mxu0 0.0
    %312 = vmatprep.subr.mxu0 0.0
    %313 = vmatpush1.msra.mxu0 0.0
    %314 = vmatprep.subr.mxu0 0.0
    %315 = vmatpush1.msra.mxu0 0.0
    %316 = vmatprep.subr.mxu0 0.0
    %317 = vmatpush1.msra.mxu0 0.0
    %318 = vmatprep.subr.mxu0 0.0
    %319 = vmatpush1.msra.mxu0 0.0
    %320 = vmatprep.subr.mxu0 0.0
    %321 = vmatpush1.msra.mxu0 0.0
    %322 = vmatprep.subr.mxu0 0.0
    %323 = vmatpush1.msra.mxu0 0.0
    %324 = vmatprep.subr.mxu0 0.0
    %325 = vmatpush1.msra.mxu0 0.0
    %326 = vmatprep.subr.mxu0 0.0
    %327 = vmatpush1.msra.mxu0 0.0
    %328 = vmatprep.subr.mxu0 0.0
    %329 = vmatpush1.msra.mxu0 0.0
    %330 = vmatprep.subr.mxu0 0.0
    %331 = vmatpush1.msra.mxu0 0.0
    %332 = vmatprep.subr.mxu0 0.0
    %333 = vmatpush1.msra.mxu0 0.0
    %334 = vmatprep.subr.mxu0 0.0
    %335 = vmatpush1.msra.mxu0 0.0
    %336 = vmatprep.subr.mxu0 0.0
    %337 = vmatpush1.msra.mxu0 0.0
    %338 = vmatprep.subr.mxu0 0.0
    %339 = vmatpush1.msra.mxu0 0.0
    %340 = vmatprep.subr.mxu0 0.0
    %341 = vmatpush1.msra.mxu0 0.0
    %342 = vmatprep.subr.mxu0 0.0
    %343 = vmatpush1.msra.mxu0 0.0
    %344 = vmatprep.subr.mxu0 0.0
    %345 = vmatpush1.msra.mxu0 0.0
    %346 = vmatprep.subr.mxu0 0.0
    %347 = vmatpush1.msra.mxu0 0.0
    %348 = vmatprep.subr.mxu0 0.0
    %349 = vmatpush1.msra.mxu0 0.0
    %350 = vmatprep.subr.mxu0 0.0
    %351 = vmatpush1.msra.mxu0 0.0
    %352 = vmatprep.subr.mxu0 0.0
    %353 = vmatpush1.msra.mxu0 0.0
    %354 = vmatprep.subr.mxu0 0.0
    %355 = vmatpush1.msra.mxu0 0.0
    %356 = vmatprep.mubr.f32.mxu0 0.0
    %357 = vmatmul.mubr.f32.gmra.mrb[0].mxu0 %v288
    %v358 = vpop.f32.mrb[0].mxu0
    %v359 = vadd.f32 0.0, %v358
    %v360 = vpop.f32.mrb[0].mxu0
    %361 = vmatprep.mubr.f32.mxu0 0.0
    %362 = vmatmul.mubr.f32.gmra.mrb[0].mxu0 %v290
    %v363 = vpop.f32.mrb[0].mxu0
    %v364 = vadd.f32 0.0, %v363
    %v365 = vpop.f32.mrb[0].mxu0
    %366 = vdwg.mxu0
    %v367 = vadd.f32 %v280, %v359
    %v368 = vadd.f32 %v281, %v364
    %v369 = vxor.u32 %v367, 2147483648
    %v370 = vxor.u32 %v368, 2147483648
    %v371 = vmul.f32 %v369, 1.442695
    %v372 = vpow.pop %v371
    %v373 = vmul.f32 %v370, 1.442695
    %v374 = vpow.pop %v373
    %v375 = vadd.f32 %v372, 1.0
    %v376 = vadd.f32 %v374, 1.0
    %v377 = vrcp.pop %v375
    %v378 = vmul.f32 1.0, %v377
    %v379 = vrcp.pop %v376
    %v380 = vmul.f32 1.0, %v379
    %v381 = vtanh.pop %v367
    %v382 = vtanh.pop %v368
    %v383 = vmul.f32 %v378, %v265
    %v384 = vmul.f32 %v380, %v266
    %387 = vrot.lane.b32.xlu0 %v381, 32
    %v388 = vpop.permute.xlu0 %387
    %389 = vrot.lane.b32.xlu0 %v382, 32
    %v390 = vpop.permute.xlu0 %389
    %v393 = vmul.f32 %v378, %v388
    %v394 = vmul.f32 %v380, %v390
    %397 = vrot.lane.b32.xlu0 %v393, 32
    %v398 = vpop.permute.xlu0 %397
    %399 = vrot.lane.b32.xlu0 %v394, 32
    %v400 = vpop.permute.xlu0 %399
    %v403 = vadd.f32 %v383, %v398
    %v404 = vadd.f32 %v384, %v400
    %v405 = vtanh.pop %v403
    %v406 = vtanh.pop %v404
    %409 = vrot.lane.b32.xlu0 %v405, 32
    %v410 = vpop.permute.xlu0 %409
    %411 = vrot.lane.b32.xlu0 %v406, 32
    %v412 = vpop.permute.xlu0 %411
    %v415 = vmul.f32 %v378, %v410
    %v416 = vmul.f32 %v380, %v412
    %s417 = scalar_lea.vmem %s0, 48
    %v418 = vld [vmem:[%s417] sm:$0xff]
    %v419 = vld [vmem:[%s417 + $0x8] sm:$0xff]
    %422 = vrot.lane.b32.xlu0 %v415, 64
    %v423 = vpop.permute.xlu0 %422
    %424 = vrot.lane.b32.xlu0 %v416, 64
    %v425 = vpop.permute.xlu0 %424
    %v426 = vsel %vm141, %v423, 0
    %v428 = vsel %vm141, %v425, 0
    %430 = vmatprep.subr.mxu0 0.0
    %431 = vmatpush1.msra.mxu0 %v54
    %432 = vmatprep.subr.mxu0 0.0
    %433 = vmatpush1.msra.mxu0 %v55
    %434 = vmatprep.subr.mxu0 0.0
    %435 = vmatpush1.msra.mxu0 %v56
    %436 = vmatprep.subr.mxu0 0.0
    %437 = vmatpush1.msra.mxu0 %v57
    %438 = vmatprep.subr.mxu0 0.0
    %439 = vmatpush1.msra.mxu0 0.0
    %440 = vmatprep.subr.mxu0 0.0
    %441 = vmatpush1.msra.mxu0 0.0
    %442 = vmatprep.subr.mxu0 0.0
    %443 = vmatpush1.msra.mxu0 0.0
    %444 = vmatprep.subr.mxu0 0.0
    %445 = vmatpush1.msra.mxu0 0.0
    %446 = vmatprep.subr.mxu0 0.0
    %447 = vmatpush1.msra.mxu0 0.0
    %448 = vmatprep.subr.mxu0 0.0
    %449 = vmatpush1.msra.mxu0 0.0
    %450 = vmatprep.subr.mxu0 0.0
    %451 = vmatpush1.msra.mxu0 0.0
    %452 = vmatprep.subr.mxu0 0.0
    %453 = vmatpush1.msra.mxu0 0.0
    %454 = vmatprep.subr.mxu0 0.0
    %455 = vmatpush1.msra.mxu0 0.0
    %456 = vmatprep.subr.mxu0 0.0
    %457 = vmatpush1.msra.mxu0 0.0
    %458 = vmatprep.subr.mxu0 0.0
    %459 = vmatpush1.msra.mxu0 0.0
    %460 = vmatprep.subr.mxu0 0.0
    %461 = vmatpush1.msra.mxu0 0.0
    %462 = vmatprep.subr.mxu0 0.0
    %463 = vmatpush1.msra.mxu0 0.0
    %464 = vmatprep.subr.mxu0 0.0
    %465 = vmatpush1.msra.mxu0 0.0
    %466 = vmatprep.subr.mxu0 0.0
    %467 = vmatpush1.msra.mxu0 0.0
    %468 = vmatprep.subr.mxu0 0.0
    %469 = vmatpush1.msra.mxu0 0.0
    %470 = vmatprep.subr.mxu0 0.0
    %471 = vmatpush1.msra.mxu0 0.0
    %472 = vmatprep.subr.mxu0 0.0
    %473 = vmatpush1.msra.mxu0 0.0
    %474 = vmatprep.subr.mxu0 0.0
    %475 = vmatpush1.msra.mxu0 0.0
    %476 = vmatprep.subr.mxu0 0.0
    %477 = vmatpush1.msra.mxu0 0.0
    %478 = vmatprep.subr.mxu0 0.0
    %479 = vmatpush1.msra.mxu0 0.0
    %480 = vmatprep.subr.mxu0 0.0
    %481 = vmatpush1.msra.mxu0 0.0
    %482 = vmatprep.subr.mxu0 0.0
    %483 = vmatpush1.msra.mxu0 0.0
    %484 = vmatprep.subr.mxu0 0.0
    %485 = vmatpush1.msra.mxu0 0.0
    %486 = vmatprep.subr.mxu0 0.0
    %487 = vmatpush1.msra.mxu0 0.0
    %488 = vmatprep.subr.mxu0 0.0
    %489 = vmatpush1.msra.mxu0 0.0
    %490 = vmatprep.subr.mxu0 0.0
    %491 = vmatpush1.msra.mxu0 0.0
    %492 = vmatprep.subr.mxu0 0.0
    %493 = vmatpush1.msra.mxu0 0.0
    %494 = vmatprep.mubr.f32.mxu0 0.0
    %495 = vmatmul.mubr.f32.gmra.mrb[0].mxu0 %v426
    %v496 = vpop.f32.mrb[0].mxu0
    %v497 = vadd.f32 0.0, %v496
    %v498 = vpop.f32.mrb[0].mxu0
    %499 = vmatprep.mubr.f32.mxu0 0.0
    %500 = vmatmul.mubr.f32.gmra.mrb[0].mxu0 %v428
    %v501 = vpop.f32.mrb[0].mxu0
    %v502 = vadd.f32 0.0, %v501
    %v503 = vpop.f32.mrb[0].mxu0
    %504 = vdwg.mxu0
    %v505 = vadd.f32 %v418, %v497
    %v506 = vadd.f32 %v419, %v502
    %v507 = vxor.u32 %v505, 2147483648
    %v508 = vxor.u32 %v506, 2147483648
    %v509 = vmul.f32 %v507, 1.442695
    %v510 = vpow.pop %v509
    %v511 = vmul.f32 %v508, 1.442695
    %v512 = vpow.pop %v511
    %v513 = vadd.f32 %v510, 1.0
    %v514 = vadd.f32 %v512, 1.0
    %v515 = vrcp.pop %v513
    %v516 = vmul.f32 1.0, %v515
    %v517 = vrcp.pop %v514
    %v518 = vmul.f32 1.0, %v517
    %v519 = vtanh.pop %v505
    %v520 = vtanh.pop %v506
    %v521 = vmul.f32 %v516, %v403
    %v522 = vmul.f32 %v518, %v404
    %525 = vrot.lane.b32.xlu0 %v519, 32
    %v526 = vpop.permute.xlu0 %525
    %527 = vrot.lane.b32.xlu0 %v520, 32
    %v528 = vpop.permute.xlu0 %527
    %v531 = vmul.f32 %v516, %v526
    %v532 = vmul.f32 %v518, %v528
    %535 = vrot.lane.b32.xlu0 %v531, 32
    %v536 = vpop.permute.xlu0 %535
    %537 = vrot.lane.b32.xlu0 %v532, 32
    %v538 = vpop.permute.xlu0 %537
    %v541 = vadd.f32 %v521, %v536
    %v542 = vadd.f32 %v522, %v538
    %v543 = vtanh.pop %v541
    %v544 = vtanh.pop %v542
    %547 = vrot.lane.b32.xlu0 %v543, 32
    %v548 = vpop.permute.xlu0 %547
    %549 = vrot.lane.b32.xlu0 %v544, 32
    %v550 = vpop.permute.xlu0 %549
    %v553 = vmul.f32 %v516, %v548
    %v554 = vmul.f32 %v518, %v550
    %s555 = scalar_lea.vmem %s0, 64
    %v556 = vld [vmem:[%s555] sm:$0xff]
    %v557 = vld [vmem:[%s555 + $0x8] sm:$0xff]
    %560 = vrot.lane.b32.xlu0 %v553, 64
    %v561 = vpop.permute.xlu0 %560
    %562 = vrot.lane.b32.xlu0 %v554, 64
    %v563 = vpop.permute.xlu0 %562
    %v564 = vsel %vm141, %v561, 0
    %v566 = vsel %vm141, %v563, 0
    %568 = vmatprep.subr.mxu0 0.0
    %569 = vmatpush1.msra.mxu0 %v54
    %570 = vmatprep.subr.mxu0 0.0
    %571 = vmatpush1.msra.mxu0 %v55
    %572 = vmatprep.subr.mxu0 0.0
    %573 = vmatpush1.msra.mxu0 %v56
    %574 = vmatprep.subr.mxu0 0.0
    %575 = vmatpush1.msra.mxu0 %v57
    %576 = vmatprep.subr.mxu0 0.0
    %577 = vmatpush1.msra.mxu0 0.0
    %578 = vmatprep.subr.mxu0 0.0
    %579 = vmatpush1.msra.mxu0 0.0
    %580 = vmatprep.subr.mxu0 0.0
    %581 = vmatpush1.msra.mxu0 0.0
    %582 = vmatprep.subr.mxu0 0.0
    %583 = vmatpush1.msra.mxu0 0.0
    %584 = vmatprep.subr.mxu0 0.0
    %585 = vmatpush1.msra.mxu0 0.0
    %586 = vmatprep.subr.mxu0 0.0
    %587 = vmatpush1.msra.mxu0 0.0
    %588 = vmatprep.subr.mxu0 0.0
    %589 = vmatpush1.msra.mxu0 0.0
    %590 = vmatprep.subr.mxu0 0.0
    %591 = vmatpush1.msra.mxu0 0.0
    %592 = vmatprep.subr.mxu0 0.0
    %593 = vmatpush1.msra.mxu0 0.0
    %594 = vmatprep.subr.mxu0 0.0
    %595 = vmatpush1.msra.mxu0 0.0
    %596 = vmatprep.subr.mxu0 0.0
    %597 = vmatpush1.msra.mxu0 0.0
    %598 = vmatprep.subr.mxu0 0.0
    %599 = vmatpush1.msra.mxu0 0.0
    %600 = vmatprep.subr.mxu0 0.0
    %601 = vmatpush1.msra.mxu0 0.0
    %602 = vmatprep.subr.mxu0 0.0
    %603 = vmatpush1.msra.mxu0 0.0
    %604 = vmatprep.subr.mxu0 0.0
    %605 = vmatpush1.msra.mxu0 0.0
    %606 = vmatprep.subr.mxu0 0.0
    %607 = vmatpush1.msra.mxu0 0.0
    %608 = vmatprep.subr.mxu0 0.0
    %609 = vmatpush1.msra.mxu0 0.0
    %610 = vmatprep.subr.mxu0 0.0
    %611 = vmatpush1.msra.mxu0 0.0
    %612 = vmatprep.subr.mxu0 0.0
    %613 = vmatpush1.msra.mxu0 0.0
    %614 = vmatprep.subr.mxu0 0.0
    %615 = vmatpush1.msra.mxu0 0.0
    %616 = vmatprep.subr.mxu0 0.0
    %617 = vmatpush1.msra.mxu0 0.0
    %618 = vmatprep.subr.mxu0 0.0
    %619 = vmatpush1.msra.mxu0 0.0
    %620 = vmatprep.subr.mxu0 0.0
    %621 = vmatpush1.msra.mxu0 0.0
    %622 = vmatprep.subr.mxu0 0.0
    %623 = vmatpush1.msra.mxu0 0.0
    %624 = vmatprep.subr.mxu0 0.0
    %625 = vmatpush1.msra.mxu0 0.0
    %626 = vmatprep.subr.mxu0 0.0
    %627 = vmatpush1.msra.mxu0 0.0
    %628 = vmatprep.subr.mxu0 0.0
    %629 = vmatpush1.msra.mxu0 0.0
    %630 = vmatprep.subr.mxu0 0.0
    %631 = vmatpush1.msra.mxu0 0.0
    %632 = vmatprep.mubr.f32.mxu0 0.0
    %633 = vmatmul.mubr.f32.gmra.mrb[0].mxu0 %v564
    %v634 = vpop.f32.mrb[0].mxu0
    %v635 = vadd.f32 0.0, %v634
    %v636 = vpop.f32.mrb[0].mxu0
    %637 = vmatprep.mubr.f32.mxu0 0.0
    %638 = vmatmul.mubr.f32.gmra.mrb[0].mxu0 %v566
    %v639 = vpop.f32.mrb[0].mxu0
    %v640 = vadd.f32 0.0, %v639
    %v641 = vpop.f32.mrb[0].mxu0
    %642 = vdwg.mxu0
    %v643 = vadd.f32 %v556, %v635
    %v644 = vadd.f32 %v557, %v640
    %v645 = vxor.u32 %v643, 2147483648
    %v646 = vxor.u32 %v644, 2147483648
    %v647 = vmul.f32 %v645, 1.442695
    %v648 = vpow.pop %v647
    %v649 = vmul.f32 %v646, 1.442695
    %v650 = vpow.pop %v649
    %v651 = vadd.f32 %v648, 1.0
    %v652 = vadd.f32 %v650, 1.0
    %v653 = vrcp.pop %v651
    %v654 = vmul.f32 1.0, %v653
    %v655 = vrcp.pop %v652
    %v656 = vmul.f32 1.0, %v655
    %v657 = vtanh.pop %v643
    %v658 = vtanh.pop %v644
    %v659 = vmul.f32 %v654, %v541
    %v660 = vmul.f32 %v656, %v542
    %663 = vrot.lane.b32.xlu0 %v657, 32
    %v664 = vpop.permute.xlu0 %663
    %665 = vrot.lane.b32.xlu0 %v658, 32
    %v666 = vpop.permute.xlu0 %665
    %v669 = vmul.f32 %v654, %v664
    %v670 = vmul.f32 %v656, %v666
    %673 = vrot.lane.b32.xlu0 %v669, 32
    %v674 = vpop.permute.xlu0 %673
    %675 = vrot.lane.b32.xlu0 %v670, 32
    %v676 = vpop.permute.xlu0 %675
    %v679 = vadd.f32 %v659, %v674
    %v680 = vadd.f32 %v660, %v676
    %v681 = vtanh.pop %v679
    %v682 = vtanh.pop %v680
    %685 = vrot.lane.b32.xlu0 %v681, 32
    %v686 = vpop.permute.xlu0 %685
    %687 = vrot.lane.b32.xlu0 %v682, 32
    %v688 = vpop.permute.xlu0 %687
    %v691 = vmul.f32 %v654, %v686
    %v692 = vmul.f32 %v656, %v688
    %s693 = scalar_lea.vmem %s0, 80
    %v694 = vld [vmem:[%s693] sm:$0xff]
    %v695 = vld [vmem:[%s693 + $0x8] sm:$0xff]
    %698 = vrot.lane.b32.xlu0 %v691, 64
    %v699 = vpop.permute.xlu0 %698
    %700 = vrot.lane.b32.xlu0 %v692, 64
    %v701 = vpop.permute.xlu0 %700
    %v702 = vsel %vm141, %v699, 0
    %v704 = vsel %vm141, %v701, 0
    %706 = vmatprep.subr.mxu0 0.0
    %707 = vmatpush1.msra.mxu0 %v54
    %708 = vmatprep.subr.mxu0 0.0
    %709 = vmatpush1.msra.mxu0 %v55
    %710 = vmatprep.subr.mxu0 0.0
    %711 = vmatpush1.msra.mxu0 %v56
    %712 = vmatprep.subr.mxu0 0.0
    %713 = vmatpush1.msra.mxu0 %v57
    %714 = vmatprep.subr.mxu0 0.0
    %715 = vmatpush1.msra.mxu0 0.0
    %716 = vmatprep.subr.mxu0 0.0
    %717 = vmatpush1.msra.mxu0 0.0
    %718 = vmatprep.subr.mxu0 0.0
    %719 = vmatpush1.msra.mxu0 0.0
    %720 = vmatprep.subr.mxu0 0.0
    %721 = vmatpush1.msra.mxu0 0.0
    %722 = vmatprep.subr.mxu0 0.0
    %723 = vmatpush1.msra.mxu0 0.0
    %724 = vmatprep.subr.mxu0 0.0
    %725 = vmatpush1.msra.mxu0 0.0
    %726 = vmatprep.subr.mxu0 0.0
    %727 = vmatpush1.msra.mxu0 0.0
    %728 = vmatprep.subr.mxu0 0.0
    %729 = vmatpush1.msra.mxu0 0.0
    %730 = vmatprep.subr.mxu0 0.0
    %731 = vmatpush1.msra.mxu0 0.0
    %732 = vmatprep.subr.mxu0 0.0
    %733 = vmatpush1.msra.mxu0 0.0
    %734 = vmatprep.subr.mxu0 0.0
    %735 = vmatpush1.msra.mxu0 0.0
    %736 = vmatprep.subr.mxu0 0.0
    %737 = vmatpush1.msra.mxu0 0.0
    %738 = vmatprep.subr.mxu0 0.0
    %739 = vmatpush1.msra.mxu0 0.0
    %740 = vmatprep.subr.mxu0 0.0
    %741 = vmatpush1.msra.mxu0 0.0
    %742 = vmatprep.subr.mxu0 0.0
    %743 = vmatpush1.msra.mxu0 0.0
    %744 = vmatprep.subr.mxu0 0.0
    %745 = vmatpush1.msra.mxu0 0.0
    %746 = vmatprep.subr.mxu0 0.0
    %747 = vmatpush1.msra.mxu0 0.0
    %748 = vmatprep.subr.mxu0 0.0
    %749 = vmatpush1.msra.mxu0 0.0
    %750 = vmatprep.subr.mxu0 0.0
    %751 = vmatpush1.msra.mxu0 0.0
    %752 = vmatprep.subr.mxu0 0.0
    %753 = vmatpush1.msra.mxu0 0.0
    %754 = vmatprep.subr.mxu0 0.0
    %755 = vmatpush1.msra.mxu0 0.0
    %756 = vmatprep.subr.mxu0 0.0
    %757 = vmatpush1.msra.mxu0 0.0
    %758 = vmatprep.subr.mxu0 0.0
    %759 = vmatpush1.msra.mxu0 0.0
    %760 = vmatprep.subr.mxu0 0.0
    %761 = vmatpush1.msra.mxu0 0.0
    %762 = vmatprep.subr.mxu0 0.0
    %763 = vmatpush1.msra.mxu0 0.0
    %764 = vmatprep.subr.mxu0 0.0
    %765 = vmatpush1.msra.mxu0 0.0
    %766 = vmatprep.subr.mxu0 0.0
    %767 = vmatpush1.msra.mxu0 0.0
    %768 = vmatprep.subr.mxu0 0.0
    %769 = vmatpush1.msra.mxu0 0.0
    %770 = vmatprep.mubr.f32.mxu0 0.0
    %771 = vmatmul.mubr.f32.gmra.mrb[0].mxu0 %v702
    %v772 = vpop.f32.mrb[0].mxu0
    %v773 = vadd.f32 0.0, %v772
    %v774 = vpop.f32.mrb[0].mxu0
    %775 = vmatprep.mubr.f32.mxu0 0.0
    %776 = vmatmul.mubr.f32.gmra.mrb[0].mxu0 %v704
    %v777 = vpop.f32.mrb[0].mxu0
    %v778 = vadd.f32 0.0, %v777
    %v779 = vpop.f32.mrb[0].mxu0
    %780 = vdwg.mxu0
    %v781 = vadd.f32 %v694, %v773
    %v782 = vadd.f32 %v695, %v778
    %v783 = vxor.u32 %v781, 2147483648
    %v784 = vxor.u32 %v782, 2147483648
    %v785 = vmul.f32 %v783, 1.442695
    %v786 = vpow.pop %v785
    %v787 = vmul.f32 %v784, 1.442695
    %v788 = vpow.pop %v787
    %v789 = vadd.f32 %v786, 1.0
    %v790 = vadd.f32 %v788, 1.0
    %v791 = vrcp.pop %v789
    %v792 = vmul.f32 1.0, %v791
    %v793 = vrcp.pop %v790
    %v794 = vmul.f32 1.0, %v793
    %v795 = vtanh.pop %v781
    %v796 = vtanh.pop %v782
    %v797 = vmul.f32 %v792, %v679
    %v798 = vmul.f32 %v794, %v680
    %801 = vrot.lane.b32.xlu0 %v795, 32
    %v802 = vpop.permute.xlu0 %801
    %803 = vrot.lane.b32.xlu0 %v796, 32
    %v804 = vpop.permute.xlu0 %803
    %v807 = vmul.f32 %v792, %v802
    %v808 = vmul.f32 %v794, %v804
    %811 = vrot.lane.b32.xlu0 %v807, 32
    %v812 = vpop.permute.xlu0 %811
    %813 = vrot.lane.b32.xlu0 %v808, 32
    %v814 = vpop.permute.xlu0 %813
    %v817 = vadd.f32 %v797, %v812
    %v818 = vadd.f32 %v798, %v814
    %v819 = vtanh.pop %v817
    %v820 = vtanh.pop %v818
    %823 = vrot.lane.b32.xlu0 %v819, 32
    %v824 = vpop.permute.xlu0 %823
    %825 = vrot.lane.b32.xlu0 %v820, 32
    %v826 = vpop.permute.xlu0 %825
    %v829 = vmul.f32 %v792, %v824
    %v830 = vmul.f32 %v794, %v826
    %s831 = scalar_lea.vmem %s0, 96
    %v832 = vld [vmem:[%s831] sm:$0xff]
    %v833 = vld [vmem:[%s831 + $0x8] sm:$0xff]
    %836 = vrot.lane.b32.xlu0 %v829, 64
    %v837 = vpop.permute.xlu0 %836
    %838 = vrot.lane.b32.xlu0 %v830, 64
    %v839 = vpop.permute.xlu0 %838
    %v840 = vsel %vm141, %v837, 0
    %v842 = vsel %vm141, %v839, 0
    %844 = vmatprep.subr.mxu0 0.0
    %845 = vmatpush1.msra.mxu0 %v54
    %846 = vmatprep.subr.mxu0 0.0
    %847 = vmatpush1.msra.mxu0 %v55
    %848 = vmatprep.subr.mxu0 0.0
    %849 = vmatpush1.msra.mxu0 %v56
    %850 = vmatprep.subr.mxu0 0.0
    %851 = vmatpush1.msra.mxu0 %v57
    %852 = vmatprep.subr.mxu0 0.0
    %853 = vmatpush1.msra.mxu0 0.0
    %854 = vmatprep.subr.mxu0 0.0
    %855 = vmatpush1.msra.mxu0 0.0
    %856 = vmatprep.subr.mxu0 0.0
    %857 = vmatpush1.msra.mxu0 0.0
    %858 = vmatprep.subr.mxu0 0.0
    %859 = vmatpush1.msra.mxu0 0.0
    %860 = vmatprep.subr.mxu0 0.0
    %861 = vmatpush1.msra.mxu0 0.0
    %862 = vmatprep.subr.mxu0 0.0
    %863 = vmatpush1.msra.mxu0 0.0
    %864 = vmatprep.subr.mxu0 0.0
    %865 = vmatpush1.msra.mxu0 0.0
    %866 = vmatprep.subr.mxu0 0.0
    %867 = vmatpush1.msra.mxu0 0.0
    %868 = vmatprep.subr.mxu0 0.0
    %869 = vmatpush1.msra.mxu0 0.0
    %870 = vmatprep.subr.mxu0 0.0
    %871 = vmatpush1.msra.mxu0 0.0
    %872 = vmatprep.subr.mxu0 0.0
    %873 = vmatpush1.msra.mxu0 0.0
    %874 = vmatprep.subr.mxu0 0.0
    %875 = vmatpush1.msra.mxu0 0.0
    %876 = vmatprep.subr.mxu0 0.0
    %877 = vmatpush1.msra.mxu0 0.0
    %878 = vmatprep.subr.mxu0 0.0
    %879 = vmatpush1.msra.mxu0 0.0
    %880 = vmatprep.subr.mxu0 0.0
    %881 = vmatpush1.msra.mxu0 0.0
    %882 = vmatprep.subr.mxu0 0.0
    %883 = vmatpush1.msra.mxu0 0.0
    %884 = vmatprep.subr.mxu0 0.0
    %885 = vmatpush1.msra.mxu0 0.0
    %886 = vmatprep.subr.mxu0 0.0
    %887 = vmatpush1.msra.mxu0 0.0
    %888 = vmatprep.subr.mxu0 0.0
    %889 = vmatpush1.msra.mxu0 0.0
    %890 = vmatprep.subr.mxu0 0.0
    %891 = vmatpush1.msra.mxu0 0.0
    %892 = vmatprep.subr.mxu0 0.0
    %893 = vmatpush1.msra.mxu0 0.0
    %894 = vmatprep.subr.mxu0 0.0
    %895 = vmatpush1.msra.mxu0 0.0
    %896 = vmatprep.subr.mxu0 0.0
    %897 = vmatpush1.msra.mxu0 0.0
    %898 = vmatprep.subr.mxu0 0.0
    %899 = vmatpush1.msra.mxu0 0.0
    %900 = vmatprep.subr.mxu0 0.0
    %901 = vmatpush1.msra.mxu0 0.0
    %902 = vmatprep.subr.mxu0 0.0
    %903 = vmatpush1.msra.mxu0 0.0
    %904 = vmatprep.subr.mxu0 0.0
    %905 = vmatpush1.msra.mxu0 0.0
    %906 = vmatprep.subr.mxu0 0.0
    %907 = vmatpush1.msra.mxu0 0.0
    %908 = vmatprep.mubr.f32.mxu0 0.0
    %909 = vmatmul.mubr.f32.gmra.mrb[0].mxu0 %v840
    %v910 = vpop.f32.mrb[0].mxu0
    %v911 = vadd.f32 0.0, %v910
    %v912 = vpop.f32.mrb[0].mxu0
    %913 = vmatprep.mubr.f32.mxu0 0.0
    %914 = vmatmul.mubr.f32.gmra.mrb[0].mxu0 %v842
    %v915 = vpop.f32.mrb[0].mxu0
    %v916 = vadd.f32 0.0, %v915
    %v917 = vpop.f32.mrb[0].mxu0
    %918 = vdwg.mxu0
    %v919 = vadd.f32 %v832, %v911
    %v920 = vadd.f32 %v833, %v916
    %v921 = vxor.u32 %v919, 2147483648
    %v922 = vxor.u32 %v920, 2147483648
    %v923 = vmul.f32 %v921, 1.442695
    %v924 = vpow.pop %v923
    %v925 = vmul.f32 %v922, 1.442695
    %v926 = vpow.pop %v925
    %v927 = vadd.f32 %v924, 1.0
    %v928 = vadd.f32 %v926, 1.0
    %v929 = vrcp.pop %v927
    %v930 = vmul.f32 1.0, %v929
    %v931 = vrcp.pop %v928
    %v932 = vmul.f32 1.0, %v931
    %v933 = vtanh.pop %v919
    %v934 = vtanh.pop %v920
    %v935 = vmul.f32 %v930, %v817
    %v936 = vmul.f32 %v932, %v818
    %939 = vrot.lane.b32.xlu0 %v933, 32
    %v940 = vpop.permute.xlu0 %939
    %941 = vrot.lane.b32.xlu0 %v934, 32
    %v942 = vpop.permute.xlu0 %941
    %v945 = vmul.f32 %v930, %v940
    %v946 = vmul.f32 %v932, %v942
    %949 = vrot.lane.b32.xlu0 %v945, 32
    %v950 = vpop.permute.xlu0 %949
    %951 = vrot.lane.b32.xlu0 %v946, 32
    %v952 = vpop.permute.xlu0 %951
    %v955 = vadd.f32 %v935, %v950
    %v956 = vadd.f32 %v936, %v952
    %v957 = vtanh.pop %v955
    %v958 = vtanh.pop %v956
    %961 = vrot.lane.b32.xlu0 %v957, 32
    %v962 = vpop.permute.xlu0 %961
    %963 = vrot.lane.b32.xlu0 %v958, 32
    %v964 = vpop.permute.xlu0 %963
    %v967 = vmul.f32 %v930, %v962
    %v968 = vmul.f32 %v932, %v964
    %s969 = scalar_lea.vmem %s0, 112
    %v970 = vld [vmem:[%s969] sm:$0xff]
    %v971 = vld [vmem:[%s969 + $0x8] sm:$0xff]
    %974 = vrot.lane.b32.xlu0 %v967, 64
    %v975 = vpop.permute.xlu0 %974
    %976 = vrot.lane.b32.xlu0 %v968, 64
    %v977 = vpop.permute.xlu0 %976
    %v978 = vsel %vm141, %v975, 0
    %v980 = vsel %vm141, %v977, 0
    %982 = vmatprep.subr.mxu0 0.0
    %983 = vmatpush1.msra.mxu0 %v54
    %984 = vmatprep.subr.mxu0 0.0
    %985 = vmatpush1.msra.mxu0 %v55
    %986 = vmatprep.subr.mxu0 0.0
    %987 = vmatpush1.msra.mxu0 %v56
    %988 = vmatprep.subr.mxu0 0.0
    %989 = vmatpush1.msra.mxu0 %v57
    %990 = vmatprep.subr.mxu0 0.0
    %991 = vmatpush1.msra.mxu0 0.0
    %992 = vmatprep.subr.mxu0 0.0
    %993 = vmatpush1.msra.mxu0 0.0
    %994 = vmatprep.subr.mxu0 0.0
    %995 = vmatpush1.msra.mxu0 0.0
    %996 = vmatprep.subr.mxu0 0.0
    %997 = vmatpush1.msra.mxu0 0.0
    %998 = vmatprep.subr.mxu0 0.0
    %999 = vmatpush1.msra.mxu0 0.0
    %1000 = vmatprep.subr.mxu0 0.0
    %1001 = vmatpush1.msra.mxu0 0.0
    %1002 = vmatprep.subr.mxu0 0.0
    %1003 = vmatpush1.msra.mxu0 0.0
    %1004 = vmatprep.subr.mxu0 0.0
    %1005 = vmatpush1.msra.mxu0 0.0
    %1006 = vmatprep.subr.mxu0 0.0
    %1007 = vmatpush1.msra.mxu0 0.0
    %1008 = vmatprep.subr.mxu0 0.0
    %1009 = vmatpush1.msra.mxu0 0.0
    %1010 = vmatprep.subr.mxu0 0.0
    %1011 = vmatpush1.msra.mxu0 0.0
    %1012 = vmatprep.subr.mxu0 0.0
    %1013 = vmatpush1.msra.mxu0 0.0
    %1014 = vmatprep.subr.mxu0 0.0
    %1015 = vmatpush1.msra.mxu0 0.0
    %1016 = vmatprep.subr.mxu0 0.0
    %1017 = vmatpush1.msra.mxu0 0.0
    %1018 = vmatprep.subr.mxu0 0.0
    %1019 = vmatpush1.msra.mxu0 0.0
    %1020 = vmatprep.subr.mxu0 0.0
    %1021 = vmatpush1.msra.mxu0 0.0
    %1022 = vmatprep.subr.mxu0 0.0
    %1023 = vmatpush1.msra.mxu0 0.0
    %1024 = vmatprep.subr.mxu0 0.0
    %1025 = vmatpush1.msra.mxu0 0.0
    %1026 = vmatprep.subr.mxu0 0.0
    %1027 = vmatpush1.msra.mxu0 0.0
    %1028 = vmatprep.subr.mxu0 0.0
    %1029 = vmatpush1.msra.mxu0 0.0
    %1030 = vmatprep.subr.mxu0 0.0
    %1031 = vmatpush1.msra.mxu0 0.0
    %1032 = vmatprep.subr.mxu0 0.0
    %1033 = vmatpush1.msra.mxu0 0.0
    %1034 = vmatprep.subr.mxu0 0.0
    %1035 = vmatpush1.msra.mxu0 0.0
    %1036 = vmatprep.subr.mxu0 0.0
    %1037 = vmatpush1.msra.mxu0 0.0
    %1038 = vmatprep.subr.mxu0 0.0
    %1039 = vmatpush1.msra.mxu0 0.0
    %1040 = vmatprep.subr.mxu0 0.0
    %1041 = vmatpush1.msra.mxu0 0.0
    %1042 = vmatprep.subr.mxu0 0.0
    %1043 = vmatpush1.msra.mxu0 0.0
    %1044 = vmatprep.subr.mxu0 0.0
    %1045 = vmatpush1.msra.mxu0 0.0
    %1046 = vmatprep.mubr.f32.mxu0 0.0
    %1047 = vmatmul.mubr.f32.gmra.mrb[0].mxu0 %v978
    %v1048 = vpop.f32.mrb[0].mxu0
    %v1049 = vadd.f32 0.0, %v1048
    %v1050 = vpop.f32.mrb[0].mxu0
    %1051 = vmatprep.mubr.f32.mxu0 0.0
    %1052 = vmatmul.mubr.f32.gmra.mrb[0].mxu0 %v980
    %v1053 = vpop.f32.mrb[0].mxu0
    %v1054 = vadd.f32 0.0, %v1053
    %v1055 = vpop.f32.mrb[0].mxu0
    %1056 = vdwg.mxu0
    %v1057 = vadd.f32 %v970, %v1049
    %v1058 = vadd.f32 %v971, %v1054
    %v1059 = vxor.u32 %v1057, 2147483648
    %v1060 = vxor.u32 %v1058, 2147483648
    %v1061 = vmul.f32 %v1059, 1.442695
    %v1062 = vpow.pop %v1061
    %v1063 = vmul.f32 %v1060, 1.442695
    %v1064 = vpow.pop %v1063
    %v1065 = vadd.f32 %v1062, 1.0
    %v1066 = vadd.f32 %v1064, 1.0
    %v1067 = vrcp.pop %v1065
    %v1068 = vmul.f32 1.0, %v1067
    %v1069 = vrcp.pop %v1066
    %v1070 = vmul.f32 1.0, %v1069
    %v1071 = vtanh.pop %v1057
    %v1072 = vtanh.pop %v1058
    %v1073 = vmul.f32 %v1068, %v955
    %v1074 = vmul.f32 %v1070, %v956
    %1077 = vrot.lane.b32.xlu0 %v1071, 32
    %v1078 = vpop.permute.xlu0 %1077
    %1079 = vrot.lane.b32.xlu0 %v1072, 32
    %v1080 = vpop.permute.xlu0 %1079
    %v1083 = vmul.f32 %v1068, %v1078
    %v1084 = vmul.f32 %v1070, %v1080
    %1087 = vrot.lane.b32.xlu0 %v1083, 32
    %v1088 = vpop.permute.xlu0 %1087
    %1089 = vrot.lane.b32.xlu0 %v1084, 32
    %v1090 = vpop.permute.xlu0 %1089
    %v1093 = vadd.f32 %v1073, %v1088
    %v1094 = vadd.f32 %v1074, %v1090
    %v1095 = vtanh.pop %v1093
    %v1096 = vtanh.pop %v1094
    %1099 = vrot.lane.b32.xlu0 %v1095, 32
    %v1100 = vpop.permute.xlu0 %1099
    %1101 = vrot.lane.b32.xlu0 %v1096, 32
    %v1102 = vpop.permute.xlu0 %1101
    %v1105 = vmul.f32 %v1068, %v1100
    %v1106 = vmul.f32 %v1070, %v1102
    %1108 = vrot.lane.b32.xlu0 %v1105, 64
    %v1109 = vpop.permute.xlu0 %1108
    %1112 = vrot.lane.b32.xlu0 %v1106, 96
    %v1113 = vpop.permute.xlu0 %1112
    %v1115 = vsel %vm141, %v1109, %v1113
    %1117 = vrot.lane.b32.xlu0 %v1093, 96
    %v1118 = vpop.permute.xlu0 %1117
    %v1120 = vsel %vm141, %v1118, %v1094
    %v1121 = vlaneseq
    %v1122 = vand.u32 %v1121, 127
    %v1123 = vld [vmem:[%s7] sm:$0x3]
    %v1125 = vlaneseq
    %v1126 = vshrl.u32 %v1125, 7
    %v1127 = vsub.s32 0, %v1126
    %v1128 = vrot.slane %v1123, %v1127
    %v1129 = vlaneseq
    %v1130 = vshrl.u32 %v1129, 7
    %v1131 = vsub.s32 1, %v1130
    %v1132 = vrot.slane %v1123, %v1131
    %vm1135 = vcmask 523264
    %v1137 = vsel %vm1135, %v1115, 0
    %1139 = vmatprep.subr.mxu0 %v59
    %1140 = vmatpush1.msra.mxu0 %v58
    %1141 = vmatprep.subr.mxu0 %v61
    %1142 = vmatpush1.msra.mxu0 %v60
    %1143 = vmatprep.subr.mxu0 %v63
    %1144 = vmatpush1.msra.mxu0 %v62
    %1145 = vmatprep.subr.mxu0 %v65
    %1146 = vmatpush1.msra.mxu0 %v64
    %1147 = vmatprep.subr.mxu0 %v67
    %1148 = vmatpush1.msra.mxu0 %v66
    %1149 = vmatprep.subr.mxu0 %v69
    %1150 = vmatpush1.msra.mxu0 %v68
    %1151 = vmatprep.subr.mxu0 %v71
    %1152 = vmatpush1.msra.mxu0 %v70
    %1153 = vmatprep.subr.mxu0 %v73
    %1154 = vmatpush1.msra.mxu0 %v72
    %1155 = vmatprep.subr.mxu0 0.0
    %1156 = vmatpush1.msra.mxu0 0.0
    %1157 = vmatprep.subr.mxu0 0.0
    %1158 = vmatpush1.msra.mxu0 0.0
    %1159 = vmatprep.subr.mxu0 0.0
    %1160 = vmatpush1.msra.mxu0 0.0
    %1161 = vmatprep.subr.mxu0 0.0
    %1162 = vmatpush1.msra.mxu0 0.0
    %1163 = vmatprep.subr.mxu0 0.0
    %1164 = vmatpush1.msra.mxu0 0.0
    %1165 = vmatprep.subr.mxu0 0.0
    %1166 = vmatpush1.msra.mxu0 0.0
    %1167 = vmatprep.subr.mxu0 0.0
    %1168 = vmatpush1.msra.mxu0 0.0
    %1169 = vmatprep.subr.mxu0 0.0
    %1170 = vmatpush1.msra.mxu0 0.0
    %1171 = vmatprep.subr.mxu0 0.0
    %1172 = vmatpush1.msra.mxu0 0.0
    %1173 = vmatprep.subr.mxu0 0.0
    %1174 = vmatpush1.msra.mxu0 0.0
    %1175 = vmatprep.subr.mxu0 0.0
    %1176 = vmatpush1.msra.mxu0 0.0
    %1177 = vmatprep.subr.mxu0 0.0
    %1178 = vmatpush1.msra.mxu0 0.0
    %1179 = vmatprep.subr.mxu0 0.0
    %1180 = vmatpush1.msra.mxu0 0.0
    %1181 = vmatprep.subr.mxu0 0.0
    %1182 = vmatpush1.msra.mxu0 0.0
    %1183 = vmatprep.subr.mxu0 0.0
    %1184 = vmatpush1.msra.mxu0 0.0
    %1185 = vmatprep.subr.mxu0 0.0
    %1186 = vmatpush1.msra.mxu0 0.0
    %1187 = vmatprep.subr.mxu0 0.0
    %1188 = vmatpush1.msra.mxu0 0.0
    %1189 = vmatprep.subr.mxu0 0.0
    %1190 = vmatpush1.msra.mxu0 0.0
    %1191 = vmatprep.subr.mxu0 0.0
    %1192 = vmatpush1.msra.mxu0 0.0
    %1193 = vmatprep.subr.mxu0 0.0
    %1194 = vmatpush1.msra.mxu0 0.0
    %1195 = vmatprep.subr.mxu0 0.0
    %1196 = vmatpush1.msra.mxu0 0.0
    %1197 = vmatprep.subr.mxu0 0.0
    %1198 = vmatpush1.msra.mxu0 0.0
    %1199 = vmatprep.subr.mxu0 0.0
    %1200 = vmatpush1.msra.mxu0 0.0
    %1201 = vmatprep.subr.mxu0 0.0
    %1202 = vmatpush1.msra.mxu0 0.0
    %1203 = vmatprep.mubr.f32.mxu0 0.0
    %1204 = vmatmul.mubr.f32.gmra.mrb[0].mxu0 %v1137
    %v1205 = vpop.f32.mrb[0].mxu0
    %v1206 = vadd.f32 0.0, %v1205
    %v1207 = vpop.f32.mrb[0].mxu0
    %v1208 = vadd.f32 0.0, %v1207
    %1209 = vdwg.mxu0
    %v1210 = vadd.f32 %v1128, %v1206
    %v1211 = vadd.f32 %v1132, %v1208
    %v1212 = vxor.u32 %v1210, 2147483648
    %v1213 = vxor.u32 %v1211, 2147483648
    %v1214 = vmul.f32 %v1212, 1.442695
    %v1215 = vpow.pop %v1214
    %v1216 = vmul.f32 %v1213, 1.442695
    %v1217 = vpow.pop %v1216
    %v1218 = vadd.f32 %v1215, 1.0
    %v1219 = vadd.f32 %v1217, 1.0
    %v1220 = vrcp.pop %v1218
    %v1221 = vmul.f32 1.0, %v1220
    %v1222 = vrcp.pop %v1219
    %v1223 = vmul.f32 1.0, %v1222
    %v1224 = vtanh.pop %v1211
    %1226 = vrot.lane.b32.xlu0 %v1120, 64
    %v1227 = vpop.permute.xlu0 %1226
    %v1229 = vmul.f32 %v1221, %v1227
    %1231 = vrot.lane.b32.xlu0 %v1224, 64
    %v1232 = vpop.permute.xlu0 %1231
    %v1234 = vmul.f32 %v1221, %v1232
    %1236 = vrot.lane.b32.xlu0 %v1234, 64
    %v1237 = vpop.permute.xlu0 %1236
    %v1239 = vadd.f32 %v1229, %v1237
    %v1240 = vtanh.pop %v1239
    %1242 = vrot.lane.b32.xlu0 %v1240, 64
    %v1243 = vpop.permute.xlu0 %1242
    %v1245 = vmul.f32 %v1223, %v1243
    %v1246 = vld [vmem:[%s5] sm:$0xff]
    %v1248 = vsel %vm1135, %v1245, 0
    %1250 = vmatprep.subr.mxu0 0.0
    %1251 = vmatpush1.msra.mxu0 %v74
    %1252 = vmatprep.subr.mxu0 0.0
    %1253 = vmatpush1.msra.mxu0 %v75
    %1254 = vmatprep.subr.mxu0 0.0
    %1255 = vmatpush1.msra.mxu0 %v76
    %1256 = vmatprep.subr.mxu0 0.0
    %1257 = vmatpush1.msra.mxu0 %v77
    %1258 = vmatprep.subr.mxu0 0.0
    %1259 = vmatpush1.msra.mxu0 %v78
    %1260 = vmatprep.subr.mxu0 0.0
    %1261 = vmatpush1.msra.mxu0 %v79
    %1262 = vmatprep.subr.mxu0 0.0
    %1263 = vmatpush1.msra.mxu0 %v80
    %1264 = vmatprep.subr.mxu0 0.0
    %1265 = vmatpush1.msra.mxu0 %v81
    %1266 = vmatprep.subr.mxu0 0.0
    %1267 = vmatpush1.msra.mxu0 0.0
    %1268 = vmatprep.subr.mxu0 0.0
    %1269 = vmatpush1.msra.mxu0 0.0
    %1270 = vmatprep.subr.mxu0 0.0
    %1271 = vmatpush1.msra.mxu0 0.0
    %1272 = vmatprep.subr.mxu0 0.0
    %1273 = vmatpush1.msra.mxu0 0.0
    %1274 = vmatprep.subr.mxu0 0.0
    %1275 = vmatpush1.msra.mxu0 0.0
    %1276 = vmatprep.subr.mxu0 0.0
    %1277 = vmatpush1.msra.mxu0 0.0
    %1278 = vmatprep.subr.mxu0 0.0
    %1279 = vmatpush1.msra.mxu0 0.0
    %1280 = vmatprep.subr.mxu0 0.0
    %1281 = vmatpush1.msra.mxu0 0.0
    %1282 = vmatprep.subr.mxu0 0.0
    %1283 = vmatpush1.msra.mxu0 0.0
    %1284 = vmatprep.subr.mxu0 0.0
    %1285 = vmatpush1.msra.mxu0 0.0
    %1286 = vmatprep.subr.mxu0 0.0
    %1287 = vmatpush1.msra.mxu0 0.0
    %1288 = vmatprep.subr.mxu0 0.0
    %1289 = vmatpush1.msra.mxu0 0.0
    %1290 = vmatprep.subr.mxu0 0.0
    %1291 = vmatpush1.msra.mxu0 0.0
    %1292 = vmatprep.subr.mxu0 0.0
    %1293 = vmatpush1.msra.mxu0 0.0
    %1294 = vmatprep.subr.mxu0 0.0
    %1295 = vmatpush1.msra.mxu0 0.0
    %1296 = vmatprep.subr.mxu0 0.0
    %1297 = vmatpush1.msra.mxu0 0.0
    %1298 = vmatprep.subr.mxu0 0.0
    %1299 = vmatpush1.msra.mxu0 0.0
    %1300 = vmatprep.subr.mxu0 0.0
    %1301 = vmatpush1.msra.mxu0 0.0
    %1302 = vmatprep.subr.mxu0 0.0
    %1303 = vmatpush1.msra.mxu0 0.0
    %1304 = vmatprep.subr.mxu0 0.0
    %1305 = vmatpush1.msra.mxu0 0.0
    %1306 = vmatprep.subr.mxu0 0.0
    %1307 = vmatpush1.msra.mxu0 0.0
    %1308 = vmatprep.subr.mxu0 0.0
    %1309 = vmatpush1.msra.mxu0 0.0
    %1310 = vmatprep.subr.mxu0 0.0
    %1311 = vmatpush1.msra.mxu0 0.0
    %1312 = vmatprep.subr.mxu0 0.0
    %1313 = vmatpush1.msra.mxu0 0.0
    %1314 = vmatprep.mubr.f32.mxu0 0.0
    %1315 = vmatmul.mubr.f32.gmra.mrb[0].mxu0 %v1248
    %v1316 = vpop.f32.mrb[0].mxu0
    %v1317 = vadd.f32 0.0, %v1316
    %v1318 = vpop.f32.mrb[0].mxu0
    %1319 = vdwg.mxu0
    %v1320 = vadd.f32 %v1246, %v1317
    %v1321 = vtanh.pop %v1320
    %v1323 = vsel %vm1135, %v1321, 0
    %1325 = vmatprep.subr.mxu0 0.0
    %1326 = vmatpush1.msra.mxu0 %v82
    %1327 = vmatprep.subr.mxu0 0.0
    %1328 = vmatpush1.msra.mxu0 %v83
    %1329 = vmatprep.subr.mxu0 0.0
    %1330 = vmatpush1.msra.mxu0 %v84
    %1331 = vmatprep.subr.mxu0 0.0
    %1332 = vmatpush1.msra.mxu0 %v85
    %1333 = vmatprep.subr.mxu0 0.0
    %1334 = vmatpush1.msra.mxu0 %v86
    %1335 = vmatprep.subr.mxu0 0.0
    %1336 = vmatpush1.msra.mxu0 %v87
    %1337 = vmatprep.subr.mxu0 0.0
    %1338 = vmatpush1.msra.mxu0 %v88
    %1339 = vmatprep.subr.mxu0 0.0
    %1340 = vmatpush1.msra.mxu0 %v89
    %1341 = vmatprep.subr.mxu0 0.0
    %1342 = vmatpush1.msra.mxu0 0.0
    %1343 = vmatprep.subr.mxu0 0.0
    %1344 = vmatpush1.msra.mxu0 0.0
    %1345 = vmatprep.subr.mxu0 0.0
    %1346 = vmatpush1.msra.mxu0 0.0
    %1347 = vmatprep.subr.mxu0 0.0
    %1348 = vmatpush1.msra.mxu0 0.0
    %1349 = vmatprep.subr.mxu0 0.0
    %1350 = vmatpush1.msra.mxu0 0.0
    %1351 = vmatprep.subr.mxu0 0.0
    %1352 = vmatpush1.msra.mxu0 0.0
    %1353 = vmatprep.subr.mxu0 0.0
    %1354 = vmatpush1.msra.mxu0 0.0
    %1355 = vmatprep.subr.mxu0 0.0
    %1356 = vmatpush1.msra.mxu0 0.0
    %1357 = vmatprep.subr.mxu0 0.0
    %1358 = vmatpush1.msra.mxu0 0.0
    %1359 = vmatprep.subr.mxu0 0.0
    %1360 = vmatpush1.msra.mxu0 0.0
    %1361 = vmatprep.subr.mxu0 0.0
    %1362 = vmatpush1.msra.mxu0 0.0
    %1363 = vmatprep.subr.mxu0 0.0
    %1364 = vmatpush1.msra.mxu0 0.0
    %1365 = vmatprep.subr.mxu0 0.0
    %1366 = vmatpush1.msra.mxu0 0.0
    %1367 = vmatprep.subr.mxu0 0.0
    %1368 = vmatpush1.msra.mxu0 0.0
    %1369 = vmatprep.subr.mxu0 0.0
    %1370 = vmatpush1.msra.mxu0 0.0
    %1371 = vmatprep.subr.mxu0 0.0
    %1372 = vmatpush1.msra.mxu0 0.0
    %1373 = vmatprep.subr.mxu0 0.0
    %1374 = vmatpush1.msra.mxu0 0.0
    %1375 = vmatprep.subr.mxu0 0.0
    %1376 = vmatpush1.msra.mxu0 0.0
    %1377 = vmatprep.subr.mxu0 0.0
    %1378 = vmatpush1.msra.mxu0 0.0
    %1379 = vmatprep.subr.mxu0 0.0
    %1380 = vmatpush1.msra.mxu0 0.0
    %1381 = vmatprep.subr.mxu0 0.0
    %1382 = vmatpush1.msra.mxu0 0.0
    %1383 = vmatprep.subr.mxu0 0.0
    %1384 = vmatpush1.msra.mxu0 0.0
    %1385 = vmatprep.subr.mxu0 0.0
    %1386 = vmatpush1.msra.mxu0 0.0
    %1387 = vmatprep.subr.mxu0 0.0
    %1388 = vmatpush1.msra.mxu0 0.0
    %1389 = vmatprep.mubr.f32.mxu0 0.0
    %1390 = vmatmul.mubr.f32.gmra.mrb[0].mxu0 %v1323
    %v1391 = vpop.f32.mrb[0].mxu0
    %v1392 = vadd.f32 0.0, %v1391
    %v1393 = vpop.f32.mrb[0].mxu0
    %1394 = vdwg.mxu0
    %vm1395 = vcmask 15360
    %v1396 = vsel %vm1395, %v1392, -inf
    %1397 = vmax.xlane.f32.xlu0 %v1396
    %v1398 = vpop.xlane.xlu0 %1397
    %v1399 = vsub.f32 %v1392, %v1398
    %v1400 = vmul.f32 %v1399, 1.442695
    %v1401 = vpow.pop %v1400
    %v1402 = vsel %vm1395, %v1401, 0.0
    %1403 = vadd.xlane.f32.xlu0 %v1402
    %v1404 = vpop.xlane.xlu0 %1403
    %v1405 = vrcp.pop %v1404
    %v1406 = vmul.f32 %v1401, %v1405
    %1407 = vst.msk [vmem:[%s11] sm:$0xff] %vm1395, %v1406
    %v1408 = vld [vmem:[%s8] sm:$0xff]
    %v1409 = vadd.f32 %v1392, %v1408
    %v1410 = vsel %vm1395, %v1409, -inf
    %1411 = vmax.xlane.f32.xlu0 %v1410
    %v1412 = vpop.xlane.xlu0 %1411
    %vm1413 = vcmp.ge.f32.partialorder %v1409, %v1412
    %v1414 = vsel %vm1413, %v1122, 2
    %v1415 = vsel %vm1395, %v1414, 2147483647
    %v1416 = vand.u32 %v1415, 65535
    %v1417 = vshra.s32 %v1415, 16
    %v1418 = vcvt.s32.f32 %v1416
    %v1419 = vcvt.s32.f32 %v1417
    %1420 = vmin.xlane.f32.xlu0 %v1419
    %v1421 = vpop.xlane.xlu0 %1420
    %vm1422 = vcmp.eq.f32.partialorder %v1419, %v1421
    %v1423 = vsel %vm1422, %v1418, inf
    %1424 = vmin.xlane.f32.xlu0 %v1423
    %v1425 = vpop.xlane.xlu0 %1424
    %v1426 = vcvt.f32.s32 %v1425
    %v1427 = vcvt.f32.s32 %v1421
    %v1428 = vshll.u32 %v1427, 16
    %v1429 = vadd.s32 %v1428, %v1426
    %s1430 = sld [smem:[#allocation2]]
    %p1431 = scmp.gt.s32.totalorder %s1430, 0
    %v1432 = vld [vmem:[%s9] sm:$0xff]
    %s1433 = scalar_select %p1431, 1, 0
    %v1434 = vstv %s1433
    %vm1435 = vcmp.eq.s32.totalorder %v1434, 1
    %v1436 = vsel %vm1435, %v1432, %v1429
    %vm1437 = vcmask 7168
    %1438 = vst.msk [vmem:[#allocation5] sm:$0xff] %vm1437, %v1436
    %1439 = vset.pattern.permute.xlu0 0
    %1440 = vperm.xlu0 %1439, %v1436
    %v1441 = vpop.permute.xlu0 %1440
    %vm1442 = vcmp.eq.s32.totalorder %v1122, %v1441
    %v1443 = vsel %vm1442, 1, 0
    %v1444 = vcvt.s32.f32 %v1443
    %1445 = vmatprep.subr.mxu0 %v59
    %1446 = vmatpush1.msra.mxu0 %v58
    %1447 = vmatprep.subr.mxu0 %v61
    %1448 = vmatpush1.msra.mxu0 %v60
    %1449 = vmatprep.subr.mxu0 %v63
    %1450 = vmatpush1.msra.mxu0 %v62
    %1451 = vmatprep.subr.mxu0 %v65
    %1452 = vmatpush1.msra.mxu0 %v64
    %1453 = vmatprep.subr.mxu0 %v67
    %1454 = vmatpush1.msra.mxu0 %v66
    %1455 = vmatprep.subr.mxu0 %v69
    %1456 = vmatpush1.msra.mxu0 %v68
    %1457 = vmatprep.subr.mxu0 %v71
    %1458 = vmatpush1.msra.mxu0 %v70
    %1459 = vmatprep.subr.mxu0 %v73
    %1460 = vmatpush1.msra.mxu0 %v72
    %1461 = vmatprep.subr.mxu0 0.0
    %1462 = vmatpush1.msra.mxu0 0.0
    %1463 = vmatprep.subr.mxu0 0.0
    %1464 = vmatpush1.msra.mxu0 0.0
    %1465 = vmatprep.subr.mxu0 0.0
    %1466 = vmatpush1.msra.mxu0 0.0
    %1467 = vmatprep.subr.mxu0 0.0
    %1468 = vmatpush1.msra.mxu0 0.0
    %1469 = vmatprep.subr.mxu0 0.0
    %1470 = vmatpush1.msra.mxu0 0.0
    %1471 = vmatprep.subr.mxu0 0.0
    %1472 = vmatpush1.msra.mxu0 0.0
    %1473 = vmatprep.subr.mxu0 0.0
    %1474 = vmatpush1.msra.mxu0 0.0
    %1475 = vmatprep.subr.mxu0 0.0
    %1476 = vmatpush1.msra.mxu0 0.0
    %1477 = vmatprep.subr.mxu0 0.0
    %1478 = vmatpush1.msra.mxu0 0.0
    %1479 = vmatprep.subr.mxu0 0.0
    %1480 = vmatpush1.msra.mxu0 0.0
    %1481 = vmatprep.subr.mxu0 0.0
    %1482 = vmatpush1.msra.mxu0 0.0
    %1483 = vmatprep.subr.mxu0 0.0
    %1484 = vmatpush1.msra.mxu0 0.0
    %1485 = vmatprep.subr.mxu0 0.0
    %1486 = vmatpush1.msra.mxu0 0.0
    %1487 = vmatprep.subr.mxu0 0.0
    %1488 = vmatpush1.msra.mxu0 0.0
    %1489 = vmatprep.subr.mxu0 0.0
    %1490 = vmatpush1.msra.mxu0 0.0
    %1491 = vmatprep.subr.mxu0 0.0
    %1492 = vmatpush1.msra.mxu0 0.0
    %1493 = vmatprep.subr.mxu0 0.0
    %1494 = vmatpush1.msra.mxu0 0.0
    %1495 = vmatprep.subr.mxu0 0.0
    %1496 = vmatpush1.msra.mxu0 0.0
    %1497 = vmatprep.subr.mxu0 0.0
    %1498 = vmatpush1.msra.mxu0 0.0
    %1499 = vmatprep.subr.mxu0 0.0
    %1500 = vmatpush1.msra.mxu0 0.0
    %1501 = vmatprep.subr.mxu0 0.0
    %1502 = vmatpush1.msra.mxu0 0.0
    %1503 = vmatprep.subr.mxu0 0.0
    %1504 = vmatpush1.msra.mxu0 0.0
    %1505 = vmatprep.subr.mxu0 0.0
    %1506 = vmatpush1.msra.mxu0 0.0
    %1507 = vmatprep.subr.mxu0 0.0
    %1508 = vmatpush1.msra.mxu0 0.0
    %1509 = vmatprep.mubr.f32.mxu0 0.0
    %1510 = vmatmul.mubr.f32.gmra.mrb[0].mxu0 %v1248
    %v1511 = vpop.f32.mrb[0].mxu0
    %v1512 = vadd.f32 0.0, %v1511
    %v1513 = vpop.f32.mrb[0].mxu0
    %v1514 = vadd.f32 0.0, %v1513
    %1515 = vdwg.mxu0
    %vm1516 = vcmask 130048
    %v1518 = vsel %vm1516, %v1444, 0
    %1520 = vmatprep.subr.mxu0 %v91
    %1521 = vmatpush1.msra.mxu0 %v90
    %1522 = vmatprep.subr.mxu0 %v93
    %1523 = vmatpush1.msra.mxu0 %v92
    %1524 = vmatprep.subr.mxu0 0.0
    %1525 = vmatpush1.msra.mxu0 0.0
    %1526 = vmatprep.subr.mxu0 0.0
    %1527 = vmatpush1.msra.mxu0 0.0
    %1528 = vmatprep.subr.mxu0 0.0
    %1529 = vmatpush1.msra.mxu0 0.0
    %1530 = vmatprep.subr.mxu0 0.0
    %1531 = vmatpush1.msra.mxu0 0.0
    %1532 = vmatprep.subr.mxu0 0.0
    %1533 = vmatpush1.msra.mxu0 0.0
    %1534 = vmatprep.subr.mxu0 0.0
    %1535 = vmatpush1.msra.mxu0 0.0
    %1536 = vmatprep.subr.mxu0 0.0
    %1537 = vmatpush1.msra.mxu0 0.0
    %1538 = vmatprep.subr.mxu0 0.0
    %1539 = vmatpush1.msra.mxu0 0.0
    %1540 = vmatprep.subr.mxu0 0.0
    %1541 = vmatpush1.msra.mxu0 0.0
    %1542 = vmatprep.subr.mxu0 0.0
    %1543 = vmatpush1.msra.mxu0 0.0
    %1544 = vmatprep.subr.mxu0 0.0
    %1545 = vmatpush1.msra.mxu0 0.0
    %1546 = vmatprep.subr.mxu0 0.0
    %1547 = vmatpush1.msra.mxu0 0.0
    %1548 = vmatprep.subr.mxu0 0.0
    %1549 = vmatpush1.msra.mxu0 0.0
    %1550 = vmatprep.subr.mxu0 0.0
    %1551 = vmatpush1.msra.mxu0 0.0
    %1552 = vmatprep.subr.mxu0 0.0
    %1553 = vmatpush1.msra.mxu0 0.0
    %1554 = vmatprep.subr.mxu0 0.0
    %1555 = vmatpush1.msra.mxu0 0.0
    %1556 = vmatprep.subr.mxu0 0.0
    %1557 = vmatpush1.msra.mxu0 0.0
    %1558 = vmatprep.subr.mxu0 0.0
    %1559 = vmatpush1.msra.mxu0 0.0
    %1560 = vmatprep.subr.mxu0 0.0
    %1561 = vmatpush1.msra.mxu0 0.0
    %1562 = vmatprep.subr.mxu0 0.0
    %1563 = vmatpush1.msra.mxu0 0.0
    %1564 = vmatprep.subr.mxu0 0.0
    %1565 = vmatpush1.msra.mxu0 0.0
    %1566 = vmatprep.subr.mxu0 0.0
    %1567 = vmatpush1.msra.mxu0 0.0
    %1568 = vmatprep.subr.mxu0 0.0
    %1569 = vmatpush1.msra.mxu0 0.0
    %1570 = vmatprep.subr.mxu0 0.0
    %1571 = vmatpush1.msra.mxu0 0.0
    %1572 = vmatprep.subr.mxu0 0.0
    %1573 = vmatpush1.msra.mxu0 0.0
    %1574 = vmatprep.subr.mxu0 0.0
    %1575 = vmatpush1.msra.mxu0 0.0
    %1576 = vmatprep.subr.mxu0 0.0
    %1577 = vmatpush1.msra.mxu0 0.0
    %1578 = vmatprep.subr.mxu0 0.0
    %1579 = vmatpush1.msra.mxu0 0.0
    %1580 = vmatprep.subr.mxu0 0.0
    %1581 = vmatpush1.msra.mxu0 0.0
    %1582 = vmatprep.subr.mxu0 0.0
    %1583 = vmatpush1.msra.mxu0 0.0
    %1584 = vmatprep.mubr.f32.mxu0 0.0
    %1585 = vmatmul.mubr.f32.gmra.mrb[0].mxu0 %v1518
    %v1586 = vpop.f32.mrb[0].mxu0
    %v1587 = vadd.f32 %v1512, %v1586
    %v1588 = vpop.f32.mrb[0].mxu0
    %v1589 = vadd.f32 %v1514, %v1588
    %1590 = vdwg.mxu0
    %v1591 = vxor.u32 %v1587, 2147483648
    %v1592 = vxor.u32 %v1589, 2147483648
    %v1593 = vmul.f32 %v1591, 1.442695
    %v1594 = vpow.pop %v1593
    %v1595 = vmul.f32 %v1592, 1.442695
    %v1596 = vpow.pop %v1595
    %v1597 = vadd.f32 %v1594, 1.0
    %v1598 = vadd.f32 %v1596, 1.0
    %v1599 = vrcp.pop %v1597
    %v1600 = vmul.f32 1.0, %v1599
    %v1601 = vrcp.pop %v1598
    %v1602 = vmul.f32 1.0, %v1601
    %v1603 = vtanh.pop %v1589
    %v1604 = vmul.f32 %v1600, %v1239
    %1606 = vrot.lane.b32.xlu0 %v1603, 64
    %v1607 = vpop.permute.xlu0 %1606
    %v1609 = vmul.f32 %v1600, %v1607
    %1611 = vrot.lane.b32.xlu0 %v1609, 64
    %v1612 = vpop.permute.xlu0 %1611
    %v1614 = vadd.f32 %v1604, %v1612
    %v1615 = vtanh.pop %v1614
    %1617 = vrot.lane.b32.xlu0 %v1615, 64
    %v1618 = vpop.permute.xlu0 %1617
    %v1620 = vmul.f32 %v1602, %v1618
    %s1621 = scalar_lea.vmem %s5, 8
    %v1622 = vld [vmem:[%s1621] sm:$0xff]
    %v1624 = vsel %vm1135, %v1620, 0
    %1626 = vmatprep.subr.mxu0 0.0
    %1627 = vmatpush1.msra.mxu0 %v74
    %1628 = vmatprep.subr.mxu0 0.0
    %1629 = vmatpush1.msra.mxu0 %v75
    %1630 = vmatprep.subr.mxu0 0.0
    %1631 = vmatpush1.msra.mxu0 %v76
    %1632 = vmatprep.subr.mxu0 0.0
    %1633 = vmatpush1.msra.mxu0 %v77
    %1634 = vmatprep.subr.mxu0 0.0
    %1635 = vmatpush1.msra.mxu0 %v78
    %1636 = vmatprep.subr.mxu0 0.0
    %1637 = vmatpush1.msra.mxu0 %v79
    %1638 = vmatprep.subr.mxu0 0.0
    %1639 = vmatpush1.msra.mxu0 %v80
    %1640 = vmatprep.subr.mxu0 0.0
    %1641 = vmatpush1.msra.mxu0 %v81
    %1642 = vmatprep.subr.mxu0 0.0
    %1643 = vmatpush1.msra.mxu0 0.0
    %1644 = vmatprep.subr.mxu0 0.0
    %1645 = vmatpush1.msra.mxu0 0.0
    %1646 = vmatprep.subr.mxu0 0.0
    %1647 = vmatpush1.msra.mxu0 0.0
    %1648 = vmatprep.subr.mxu0 0.0
    %1649 = vmatpush1.msra.mxu0 0.0
    %1650 = vmatprep.subr.mxu0 0.0
    %1651 = vmatpush1.msra.mxu0 0.0
    %1652 = vmatprep.subr.mxu0 0.0
    %1653 = vmatpush1.msra.mxu0 0.0
    %1654 = vmatprep.subr.mxu0 0.0
    %1655 = vmatpush1.msra.mxu0 0.0
    %1656 = vmatprep.subr.mxu0 0.0
    %1657 = vmatpush1.msra.mxu0 0.0
    %1658 = vmatprep.subr.mxu0 0.0
    %1659 = vmatpush1.msra.mxu0 0.0
    %1660 = vmatprep.subr.mxu0 0.0
    %1661 = vmatpush1.msra.mxu0 0.0
    %1662 = vmatprep.subr.mxu0 0.0
    %1663 = vmatpush1.msra.mxu0 0.0
    %1664 = vmatprep.subr.mxu0 0.0
    %1665 = vmatpush1.msra.mxu0 0.0
    %1666 = vmatprep.subr.mxu0 0.0
    %1667 = vmatpush1.msra.mxu0 0.0
    %1668 = vmatprep.subr.mxu0 0.0
    %1669 = vmatpush1.msra.mxu0 0.0
    %1670 = vmatprep.subr.mxu0 0.0
    %1671 = vmatpush1.msra.mxu0 0.0
    %1672 = vmatprep.subr.mxu0 0.0
    %1673 = vmatpush1.msra.mxu0 0.0
    %1674 = vmatprep.subr.mxu0 0.0
    %1675 = vmatpush1.msra.mxu0 0.0
    %1676 = vmatprep.subr.mxu0 0.0
    %1677 = vmatpush1.msra.mxu0 0.0
    %1678 = vmatprep.subr.mxu0 0.0
    %1679 = vmatpush1.msra.mxu0 0.0
    %1680 = vmatprep.subr.mxu0 0.0
    %1681 = vmatpush1.msra.mxu0 0.0
    %1682 = vmatprep.subr.mxu0 0.0
    %1683 = vmatpush1.msra.mxu0 0.0
    %1684 = vmatprep.subr.mxu0 0.0
    %1685 = vmatpush1.msra.mxu0 0.0
    %1686 = vmatprep.subr.mxu0 0.0
    %1687 = vmatpush1.msra.mxu0 0.0
    %1688 = vmatprep.subr.mxu0 0.0
    %1689 = vmatpush1.msra.mxu0 0.0
    %1690 = vmatprep.mubr.f32.mxu0 0.0
    %1691 = vmatmul.mubr.f32.gmra.mrb[0].mxu0 %v1624
    %v1692 = vpop.f32.mrb[0].mxu0
    %v1693 = vadd.f32 0.0, %v1692
    %v1694 = vpop.f32.mrb[0].mxu0
    %1695 = vdwg.mxu0
    %v1696 = vadd.f32 %v1622, %v1693
    %v1697 = vtanh.pop %v1696
    %v1699 = vsel %vm1135, %v1697, 0
    %1701 = vmatprep.subr.mxu0 0.0
    %1702 = vmatpush1.msra.mxu0 %v82
    %1703 = vmatprep.subr.mxu0 0.0
    %1704 = vmatpush1.msra.mxu0 %v83
    %1705 = vmatprep.subr.mxu0 0.0
    %1706 = vmatpush1.msra.mxu0 %v84
    %1707 = vmatprep.subr.mxu0 0.0
    %1708 = vmatpush1.msra.mxu0 %v85
    %1709 = vmatprep.subr.mxu0 0.0
    %1710 = vmatpush1.msra.mxu0 %v86
    %1711 = vmatprep.subr.mxu0 0.0
    %1712 = vmatpush1.msra.mxu0 %v87
    %1713 = vmatprep.subr.mxu0 0.0
    %1714 = vmatpush1.msra.mxu0 %v88
    %1715 = vmatprep.subr.mxu0 0.0
    %1716 = vmatpush1.msra.mxu0 %v89
    %1717 = vmatprep.subr.mxu0 0.0
    %1718 = vmatpush1.msra.mxu0 0.0
    %1719 = vmatprep.subr.mxu0 0.0
    %1720 = vmatpush1.msra.mxu0 0.0
    %1721 = vmatprep.subr.mxu0 0.0
    %1722 = vmatpush1.msra.mxu0 0.0
    %1723 = vmatprep.subr.mxu0 0.0
    %1724 = vmatpush1.msra.mxu0 0.0
    %1725 = vmatprep.subr.mxu0 0.0
    %1726 = vmatpush1.msra.mxu0 0.0
    %1727 = vmatprep.subr.mxu0 0.0
    %1728 = vmatpush1.msra.mxu0 0.0
    %1729 = vmatprep.subr.mxu0 0.0
    %1730 = vmatpush1.msra.mxu0 0.0
    %1731 = vmatprep.subr.mxu0 0.0
    %1732 = vmatpush1.msra.mxu0 0.0
    %1733 = vmatprep.subr.mxu0 0.0
    %1734 = vmatpush1.msra.mxu0 0.0
    %1735 = vmatprep.subr.mxu0 0.0
    %1736 = vmatpush1.msra.mxu0 0.0
    %1737 = vmatprep.subr.mxu0 0.0
    %1738 = vmatpush1.msra.mxu0 0.0
    %1739 = vmatprep.subr.mxu0 0.0
    %1740 = vmatpush1.msra.mxu0 0.0
    %1741 = vmatprep.subr.mxu0 0.0
    %1742 = vmatpush1.msra.mxu0 0.0
    %1743 = vmatprep.subr.mxu0 0.0
    %1744 = vmatpush1.msra.mxu0 0.0
    %1745 = vmatprep.subr.mxu0 0.0
    %1746 = vmatpush1.msra.mxu0 0.0
    %1747 = vmatprep.subr.mxu0 0.0
    %1748 = vmatpush1.msra.mxu0 0.0
    %1749 = vmatprep.subr.mxu0 0.0
    %1750 = vmatpush1.msra.mxu0 0.0
    %1751 = vmatprep.subr.mxu0 0.0
    %1752 = vmatpush1.msra.mxu0 0.0
    %1753 = vmatprep.subr.mxu0 0.0
    %1754 = vmatpush1.msra.mxu0 0.0
    %1755 = vmatprep.subr.mxu0 0.0
    %1756 = vmatpush1.msra.mxu0 0.0
    %1757 = vmatprep.subr.mxu0 0.0
    %1758 = vmatpush1.msra.mxu0 0.0
    %1759 = vmatprep.subr.mxu0 0.0
    %1760 = vmatpush1.msra.mxu0 0.0
    %1761 = vmatprep.subr.mxu0 0.0
    %1762 = vmatpush1.msra.mxu0 0.0
    %1763 = vmatprep.subr.mxu0 0.0
    %1764 = vmatpush1.msra.mxu0 0.0
    %1765 = vmatprep.mubr.f32.mxu0 0.0
    %1766 = vmatmul.mubr.f32.gmra.mrb[0].mxu0 %v1699
    %v1767 = vpop.f32.mrb[0].mxu0
    %v1768 = vadd.f32 0.0, %v1767
    %v1769 = vpop.f32.mrb[0].mxu0
    %1770 = vdwg.mxu0
    %v1771 = vsel %vm1395, %v1768, -inf
    %1772 = vmax.xlane.f32.xlu0 %v1771
    %v1773 = vpop.xlane.xlu0 %1772
    %v1774 = vsub.f32 %v1768, %v1773
    %v1775 = vmul.f32 %v1774, 1.442695
    %v1776 = vpow.pop %v1775
    %v1777 = vsel %vm1395, %v1776, 0.0
    %1778 = vadd.xlane.f32.xlu0 %v1777
    %v1779 = vpop.xlane.xlu0 %1778
    %v1780 = vrcp.pop %v1779
    %v1781 = vmul.f32 %v1776, %v1780
    %1783 = vrot.lane.b32.xlu0 %v1781, 2
    %v1784 = vpop.permute.xlu0 %1783
    %vm1786 = vcmask 31760
    %1787 = vst.msk [vmem:[%s11] sm:$0xff] %vm1786, %v1784
    %s1788 = scalar_lea.vmem %s8, 8
    %v1789 = vld [vmem:[%s1788] sm:$0xff]
    %v1790 = vadd.f32 %v1768, %v1789
    %v1791 = vsel %vm1395, %v1790, -inf
    %1792 = vmax.xlane.f32.xlu0 %v1791
    %v1793 = vpop.xlane.xlu0 %1792
    %vm1794 = vcmp.ge.f32.partialorder %v1790, %v1793
    %v1795 = vsel %vm1794, %v1122, 2
    %v1796 = vsel %vm1395, %v1795, 2147483647
    %v1797 = vand.u32 %v1796, 65535
    %v1798 = vshra.s32 %v1796, 16
    %v1799 = vcvt.s32.f32 %v1797
    %v1800 = vcvt.s32.f32 %v1798
    %1801 = vmin.xlane.f32.xlu0 %v1800
    %v1802 = vpop.xlane.xlu0 %1801
    %vm1803 = vcmp.eq.f32.partialorder %v1800, %v1802
    %v1804 = vsel %vm1803, %v1799, inf
    %1805 = vmin.xlane.f32.xlu0 %v1804
    %v1806 = vpop.xlane.xlu0 %1805
    %v1807 = vcvt.f32.s32 %v1806
    %v1808 = vcvt.f32.s32 %v1802
    %v1809 = vshll.u32 %v1808, 16
    %v1810 = vadd.s32 %v1809, %v1807
    %s1811 = sld [smem:[#allocation2 + $0x1]]
    %p1812 = scmp.gt.s32.totalorder %s1811, 0
    %s1813 = scalar_lea.vmem %s9, 8
    %v1814 = vld [vmem:[%s1813] sm:$0xff]
    %s1815 = scalar_select %p1812, 1, 0
    %v1816 = vstv %s1815
    %vm1817 = vcmp.eq.s32.totalorder %v1816, 1
    %v1818 = vsel %vm1817, %v1814, %v1810
    %1819 = vrot.lane.b32.xlu0 %v1818, 1
    %v1820 = vpop.permute.xlu0 %1819
    %vm1821 = vcmask 15368
    %1822 = vst.msk [vmem:[#allocation5] sm:$0xff] %vm1821, %v1820
    %1823 = vset.pattern.permute.xlu0 0
    %1824 = vperm.xlu0 %1823, %v1818
    %v1825 = vpop.permute.xlu0 %1824
    %vm1826 = vcmp.eq.s32.totalorder %v1122, %v1825
    %v1827 = vsel %vm1826, 1, 0
    %v1828 = vcvt.s32.f32 %v1827
    %1829 = vmatprep.subr.mxu0 %v59
    %1830 = vmatpush1.msra.mxu0 %v58
    %1831 = vmatprep.subr.mxu0 %v61
    %1832 = vmatpush1.msra.mxu0 %v60
    %1833 = vmatprep.subr.mxu0 %v63
    %1834 = vmatpush1.msra.mxu0 %v62
    %1835 = vmatprep.subr.mxu0 %v65
    %1836 = vmatpush1.msra.mxu0 %v64
    %1837 = vmatprep.subr.mxu0 %v67
    %1838 = vmatpush1.msra.mxu0 %v66
    %1839 = vmatprep.subr.mxu0 %v69
    %1840 = vmatpush1.msra.mxu0 %v68
    %1841 = vmatprep.subr.mxu0 %v71
    %1842 = vmatpush1.msra.mxu0 %v70
    %1843 = vmatprep.subr.mxu0 %v73
    %1844 = vmatpush1.msra.mxu0 %v72
    %1845 = vmatprep.subr.mxu0 0.0
    %1846 = vmatpush1.msra.mxu0 0.0
    %1847 = vmatprep.subr.mxu0 0.0
    %1848 = vmatpush1.msra.mxu0 0.0
    %1849 = vmatprep.subr.mxu0 0.0
    %1850 = vmatpush1.msra.mxu0 0.0
    %1851 = vmatprep.subr.mxu0 0.0
    %1852 = vmatpush1.msra.mxu0 0.0
    %1853 = vmatprep.subr.mxu0 0.0
    %1854 = vmatpush1.msra.mxu0 0.0
    %1855 = vmatprep.subr.mxu0 0.0
    %1856 = vmatpush1.msra.mxu0 0.0
    %1857 = vmatprep.subr.mxu0 0.0
    %1858 = vmatpush1.msra.mxu0 0.0
    %1859 = vmatprep.subr.mxu0 0.0
    %1860 = vmatpush1.msra.mxu0 0.0
    %1861 = vmatprep.subr.mxu0 0.0
    %1862 = vmatpush1.msra.mxu0 0.0
    %1863 = vmatprep.subr.mxu0 0.0
    %1864 = vmatpush1.msra.mxu0 0.0
    %1865 = vmatprep.subr.mxu0 0.0
    %1866 = vmatpush1.msra.mxu0 0.0
    %1867 = vmatprep.subr.mxu0 0.0
    %1868 = vmatpush1.msra.mxu0 0.0
    %1869 = vmatprep.subr.mxu0 0.0
    %1870 = vmatpush1.msra.mxu0 0.0
    %1871 = vmatprep.subr.mxu0 0.0
    %1872 = vmatpush1.msra.mxu0 0.0
    %1873 = vmatprep.subr.mxu0 0.0
    %1874 = vmatpush1.msra.mxu0 0.0
    %1875 = vmatprep.subr.mxu0 0.0
    %1876 = vmatpush1.msra.mxu0 0.0
    %1877 = vmatprep.subr.mxu0 0.0
    %1878 = vmatpush1.msra.mxu0 0.0
    %1879 = vmatprep.subr.mxu0 0.0
    %1880 = vmatpush1.msra.mxu0 0.0
    %1881 = vmatprep.subr.mxu0 0.0
    %1882 = vmatpush1.msra.mxu0 0.0
    %1883 = vmatprep.subr.mxu0 0.0
    %1884 = vmatpush1.msra.mxu0 0.0
    %1885 = vmatprep.subr.mxu0 0.0
    %1886 = vmatpush1.msra.mxu0 0.0
    %1887 = vmatprep.subr.mxu0 0.0
    %1888 = vmatpush1.msra.mxu0 0.0
    %1889 = vmatprep.subr.mxu0 0.0
    %1890 = vmatpush1.msra.mxu0 0.0
    %1891 = vmatprep.subr.mxu0 0.0
    %1892 = vmatpush1.msra.mxu0 0.0
    %1893 = vmatprep.mubr.f32.mxu0 0.0
    %1894 = vmatmul.mubr.f32.gmra.mrb[0].mxu0 %v1624
    %v1895 = vpop.f32.mrb[0].mxu0
    %v1896 = vadd.f32 0.0, %v1895
    %v1897 = vpop.f32.mrb[0].mxu0
    %v1898 = vadd.f32 0.0, %v1897
    %1899 = vdwg.mxu0
    %v1901 = vsel %vm1516, %v1828, 0
    %1903 = vmatprep.subr.mxu0 %v91
    %1904 = vmatpush1.msra.mxu0 %v90
    %1905 = vmatprep.subr.mxu0 %v93
    %1906 = vmatpush1.msra.mxu0 %v92
    %1907 = vmatprep.subr.mxu0 0.0
    %1908 = vmatpush1.msra.mxu0 0.0
    %1909 = vmatprep.subr.mxu0 0.0
    %1910 = vmatpush1.msra.mxu0 0.0
    %1911 = vmatprep.subr.mxu0 0.0
    %1912 = vmatpush1.msra.mxu0 0.0
    %1913 = vmatprep.subr.mxu0 0.0
    %1914 = vmatpush1.msra.mxu0 0.0
    %1915 = vmatprep.subr.mxu0 0.0
    %1916 = vmatpush1.msra.mxu0 0.0
    %1917 = vmatprep.subr.mxu0 0.0
    %1918 = vmatpush1.msra.mxu0 0.0
    %1919 = vmatprep.subr.mxu0 0.0
    %1920 = vmatpush1.msra.mxu0 0.0
    %1921 = vmatprep.subr.mxu0 0.0
    %1922 = vmatpush1.msra.mxu0 0.0
    %1923 = vmatprep.subr.mxu0 0.0
    %1924 = vmatpush1.msra.mxu0 0.0
    %1925 = vmatprep.subr.mxu0 0.0
    %1926 = vmatpush1.msra.mxu0 0.0
    %1927 = vmatprep.subr.mxu0 0.0
    %1928 = vmatpush1.msra.mxu0 0.0
    %1929 = vmatprep.subr.mxu0 0.0
    %1930 = vmatpush1.msra.mxu0 0.0
    %1931 = vmatprep.subr.mxu0 0.0
    %1932 = vmatpush1.msra.mxu0 0.0
    %1933 = vmatprep.subr.mxu0 0.0
    %1934 = vmatpush1.msra.mxu0 0.0
    %1935 = vmatprep.subr.mxu0 0.0
    %1936 = vmatpush1.msra.mxu0 0.0
    %1937 = vmatprep.subr.mxu0 0.0
    %1938 = vmatpush1.msra.mxu0 0.0
    %1939 = vmatprep.subr.mxu0 0.0
    %1940 = vmatpush1.msra.mxu0 0.0
    %1941 = vmatprep.subr.mxu0 0.0
    %1942 = vmatpush1.msra.mxu0 0.0
    %1943 = vmatprep.subr.mxu0 0.0
    %1944 = vmatpush1.msra.mxu0 0.0
    %1945 = vmatprep.subr.mxu0 0.0
    %1946 = vmatpush1.msra.mxu0 0.0
    %1947 = vmatprep.subr.mxu0 0.0
    %1948 = vmatpush1.msra.mxu0 0.0
    %1949 = vmatprep.subr.mxu0 0.0
    %1950 = vmatpush1.msra.mxu0 0.0
    %1951 = vmatprep.subr.mxu0 0.0
    %1952 = vmatpush1.msra.mxu0 0.0
    %1953 = vmatprep.subr.mxu0 0.0
    %1954 = vmatpush1.msra.mxu0 0.0
    %1955 = vmatprep.subr.mxu0 0.0
    %1956 = vmatpush1.msra.mxu0 0.0
    %1957 = vmatprep.subr.mxu0 0.0
    %1958 = vmatpush1.msra.mxu0 0.0
    %1959 = vmatprep.subr.mxu0 0.0
    %1960 = vmatpush1.msra.mxu0 0.0
    %1961 = vmatprep.subr.mxu0 0.0
    %1962 = vmatpush1.msra.mxu0 0.0
    %1963 = vmatprep.subr.mxu0 0.0
    %1964 = vmatpush1.msra.mxu0 0.0
    %1965 = vmatprep.subr.mxu0 0.0
    %1966 = vmatpush1.msra.mxu0 0.0
    %1967 = vmatprep.mubr.f32.mxu0 0.0
    %1968 = vmatmul.mubr.f32.gmra.mrb[0].mxu0 %v1901
    %v1969 = vpop.f32.mrb[0].mxu0
    %v1970 = vadd.f32 %v1896, %v1969
    %v1971 = vpop.f32.mrb[0].mxu0
    %v1972 = vadd.f32 %v1898, %v1971
    %1973 = vdwg.mxu0
    %v1974 = vxor.u32 %v1970, 2147483648
    %v1975 = vxor.u32 %v1972, 2147483648
    %v1976 = vmul.f32 %v1974, 1.442695
    %v1977 = vpow.pop %v1976
    %v1978 = vmul.f32 %v1975, 1.442695
    %v1979 = vpow.pop %v1978
    %v1980 = vadd.f32 %v1977, 1.0
    %v1981 = vadd.f32 %v1979, 1.0
    %v1982 = vrcp.pop %v1980
    %v1983 = vmul.f32 1.0, %v1982
    %v1984 = vrcp.pop %v1981
    %v1985 = vmul.f32 1.0, %v1984
    %v1986 = vtanh.pop %v1972
    %v1987 = vmul.f32 %v1983, %v1614
    %1989 = vrot.lane.b32.xlu0 %v1986, 64
    %v1990 = vpop.permute.xlu0 %1989
    %v1992 = vmul.f32 %v1983, %v1990
    %1994 = vrot.lane.b32.xlu0 %v1992, 64
    %v1995 = vpop.permute.xlu0 %1994
    %v1997 = vadd.f32 %v1987, %v1995
    %v1998 = vtanh.pop %v1997
    %2000 = vrot.lane.b32.xlu0 %v1998, 64
    %v2001 = vpop.permute.xlu0 %2000
    %v2003 = vmul.f32 %v1985, %v2001
    %s2004 = scalar_lea.vmem %s5, 16
    %v2005 = vld [vmem:[%s2004] sm:$0xff]
    %v2007 = vsel %vm1135, %v2003, 0
    %2009 = vmatprep.subr.mxu0 0.0
    %2010 = vmatpush1.msra.mxu0 %v74
    %2011 = vmatprep.subr.mxu0 0.0
    %2012 = vmatpush1.msra.mxu0 %v75
    %2013 = vmatprep.subr.mxu0 0.0
    %2014 = vmatpush1.msra.mxu0 %v76
    %2015 = vmatprep.subr.mxu0 0.0
    %2016 = vmatpush1.msra.mxu0 %v77
    %2017 = vmatprep.subr.mxu0 0.0
    %2018 = vmatpush1.msra.mxu0 %v78
    %2019 = vmatprep.subr.mxu0 0.0
    %2020 = vmatpush1.msra.mxu0 %v79
    %2021 = vmatprep.subr.mxu0 0.0
    %2022 = vmatpush1.msra.mxu0 %v80
    %2023 = vmatprep.subr.mxu0 0.0
    %2024 = vmatpush1.msra.mxu0 %v81
    %2025 = vmatprep.subr.mxu0 0.0
    %2026 = vmatpush1.msra.mxu0 0.0
    %2027 = vmatprep.subr.mxu0 0.0
    %2028 = vmatpush1.msra.mxu0 0.0
    %2029 = vmatprep.subr.mxu0 0.0
    %2030 = vmatpush1.msra.mxu0 0.0
    %2031 = vmatprep.subr.mxu0 0.0
    %2032 = vmatpush1.msra.mxu0 0.0
    %2033 = vmatprep.subr.mxu0 0.0
    %2034 = vmatpush1.msra.mxu0 0.0
    %2035 = vmatprep.subr.mxu0 0.0
    %2036 = vmatpush1.msra.mxu0 0.0
    %2037 = vmatprep.subr.mxu0 0.0
    %2038 = vmatpush1.msra.mxu0 0.0
    %2039 = vmatprep.subr.mxu0 0.0
    %2040 = vmatpush1.msra.mxu0 0.0
    %2041 = vmatprep.subr.mxu0 0.0
    %2042 = vmatpush1.msra.mxu0 0.0
    %2043 = vmatprep.subr.mxu0 0.0
    %2044 = vmatpush1.msra.mxu0 0.0
    %2045 = vmatprep.subr.mxu0 0.0
    %2046 = vmatpush1.msra.mxu0 0.0
    %2047 = vmatprep.subr.mxu0 0.0
    %2048 = vmatpush1.msra.mxu0 0.0
    %2049 = vmatprep.subr.mxu0 0.0
    %2050 = vmatpush1.msra.mxu0 0.0
    %2051 = vmatprep.subr.mxu0 0.0
    %2052 = vmatpush1.msra.mxu0 0.0
    %2053 = vmatprep.subr.mxu0 0.0
    %2054 = vmatpush1.msra.mxu0 0.0
    %2055 = vmatprep.subr.mxu0 0.0
    %2056 = vmatpush1.msra.mxu0 0.0
    %2057 = vmatprep.subr.mxu0 0.0
    %2058 = vmatpush1.msra.mxu0 0.0
    %2059 = vmatprep.subr.mxu0 0.0
    %2060 = vmatpush1.msra.mxu0 0.0
    %2061 = vmatprep.subr.mxu0 0.0
    %2062 = vmatpush1.msra.mxu0 0.0
    %2063 = vmatprep.subr.mxu0 0.0
    %2064 = vmatpush1.msra.mxu0 0.0
    %2065 = vmatprep.subr.mxu0 0.0
    %2066 = vmatpush1.msra.mxu0 0.0
    %2067 = vmatprep.subr.mxu0 0.0
    %2068 = vmatpush1.msra.mxu0 0.0
    %2069 = vmatprep.subr.mxu0 0.0
    %2070 = vmatpush1.msra.mxu0 0.0
    %2071 = vmatprep.subr.mxu0 0.0
    %2072 = vmatpush1.msra.mxu0 0.0
    %2073 = vmatprep.mubr.f32.mxu0 0.0
    %2074 = vmatmul.mubr.f32.gmra.mrb[0].mxu0 %v2007
    %v2075 = vpop.f32.mrb[0].mxu0
    %v2076 = vadd.f32 0.0, %v2075
    %v2077 = vpop.f32.mrb[0].mxu0
    %2078 = vdwg.mxu0
    %v2079 = vadd.f32 %v2005, %v2076
    %v2080 = vtanh.pop %v2079
    %v2082 = vsel %vm1135, %v2080, 0
    %2084 = vmatprep.subr.mxu0 0.0
    %2085 = vmatpush1.msra.mxu0 %v82
    %2086 = vmatprep.subr.mxu0 0.0
    %2087 = vmatpush1.msra.mxu0 %v83
    %2088 = vmatprep.subr.mxu0 0.0
    %2089 = vmatpush1.msra.mxu0 %v84
    %2090 = vmatprep.subr.mxu0 0.0
    %2091 = vmatpush1.msra.mxu0 %v85
    %2092 = vmatprep.subr.mxu0 0.0
    %2093 = vmatpush1.msra.mxu0 %v86
    %2094 = vmatprep.subr.mxu0 0.0
    %2095 = vmatpush1.msra.mxu0 %v87
    %2096 = vmatprep.subr.mxu0 0.0
    %2097 = vmatpush1.msra.mxu0 %v88
    %2098 = vmatprep.subr.mxu0 0.0
    %2099 = vmatpush1.msra.mxu0 %v89
    %2100 = vmatprep.subr.mxu0 0.0
    %2101 = vmatpush1.msra.mxu0 0.0
    %2102 = vmatprep.subr.mxu0 0.0
    %2103 = vmatpush1.msra.mxu0 0.0
    %2104 = vmatprep.subr.mxu0 0.0
    %2105 = vmatpush1.msra.mxu0 0.0
    %2106 = vmatprep.subr.mxu0 0.0
    %2107 = vmatpush1.msra.mxu0 0.0
    %2108 = vmatprep.subr.mxu0 0.0
    %2109 = vmatpush1.msra.mxu0 0.0
    %2110 = vmatprep.subr.mxu0 0.0
    %2111 = vmatpush1.msra.mxu0 0.0
    %2112 = vmatprep.subr.mxu0 0.0
    %2113 = vmatpush1.msra.mxu0 0.0
    %2114 = vmatprep.subr.mxu0 0.0
    %2115 = vmatpush1.msra.mxu0 0.0
    %2116 = vmatprep.subr.mxu0 0.0
    %2117 = vmatpush1.msra.mxu0 0.0
    %2118 = vmatprep.subr.mxu0 0.0
    %2119 = vmatpush1.msra.mxu0 0.0
    %2120 = vmatprep.subr.mxu0 0.0
    %2121 = vmatpush1.msra.mxu0 0.0
    %2122 = vmatprep.subr.mxu0 0.0
    %2123 = vmatpush1.msra.mxu0 0.0
    %2124 = vmatprep.subr.mxu0 0.0
    %2125 = vmatpush1.msra.mxu0 0.0
    %2126 = vmatprep.subr.mxu0 0.0
    %2127 = vmatpush1.msra.mxu0 0.0
    %2128 = vmatprep.subr.mxu0 0.0
    %2129 = vmatpush1.msra.mxu0 0.0
    %2130 = vmatprep.subr.mxu0 0.0
    %2131 = vmatpush1.msra.mxu0 0.0
    %2132 = vmatprep.subr.mxu0 0.0
    %2133 = vmatpush1.msra.mxu0 0.0
    %2134 = vmatprep.subr.mxu0 0.0
    %2135 = vmatpush1.msra.mxu0 0.0
    %2136 = vmatprep.subr.mxu0 0.0
    %2137 = vmatpush1.msra.mxu0 0.0
    %2138 = vmatprep.subr.mxu0 0.0
    %2139 = vmatpush1.msra.mxu0 0.0
    %2140 = vmatprep.subr.mxu0 0.0
    %2141 = vmatpush1.msra.mxu0 0.0
    %2142 = vmatprep.subr.mxu0 0.0
    %2143 = vmatpush1.msra.mxu0 0.0
    %2144 = vmatprep.subr.mxu0 0.0
    %2145 = vmatpush1.msra.mxu0 0.0
    %2146 = vmatprep.subr.mxu0 0.0
    %2147 = vmatpush1.msra.mxu0 0.0
    %2148 = vmatprep.mubr.f32.mxu0 0.0
    %2149 = vmatmul.mubr.f32.gmra.mrb[0].mxu0 %v2082
    %v2150 = vpop.f32.mrb[0].mxu0
    %v2151 = vadd.f32 0.0, %v2150
    %v2152 = vpop.f32.mrb[0].mxu0
    %2153 = vdwg.mxu0
    %v2154 = vsel %vm1395, %v2151, -inf
    %2155 = vmax.xlane.f32.xlu0 %v2154
    %v2156 = vpop.xlane.xlu0 %2155
    %v2157 = vsub.f32 %v2151, %v2156
    %v2158 = vmul.f32 %v2157, 1.442695
    %v2159 = vpow.pop %v2158
    %v2160 = vsel %vm1395, %v2159, 0.0
    %2161 = vadd.xlane.f32.xlu0 %v2160
    %v2162 = vpop.xlane.xlu0 %2161
    %v2163 = vrcp.pop %v2162
    %v2164 = vmul.f32 %v2159, %v2163
    %2166 = vrot.lane.b32.xlu0 %v2164, 4
    %v2167 = vpop.permute.xlu0 %2166
    %vm2169 = vcmask 48160
    %2170 = vst.msk [vmem:[%s11] sm:$0xff] %vm2169, %v2167
    %s2171 = scalar_lea.vmem %s8, 16
    %v2172 = vld [vmem:[%s2171] sm:$0xff]
    %v2173 = vadd.f32 %v2151, %v2172
    %v2174 = vsel %vm1395, %v2173, -inf
    %2175 = vmax.xlane.f32.xlu0 %v2174
    %v2176 = vpop.xlane.xlu0 %2175
    %vm2177 = vcmp.ge.f32.partialorder %v2173, %v2176
    %v2178 = vsel %vm2177, %v1122, 2
    %v2179 = vsel %vm1395, %v2178, 2147483647
    %v2180 = vand.u32 %v2179, 65535
    %v2181 = vshra.s32 %v2179, 16
    %v2182 = vcvt.s32.f32 %v2180
    %v2183 = vcvt.s32.f32 %v2181
    %2184 = vmin.xlane.f32.xlu0 %v2183
    %v2185 = vpop.xlane.xlu0 %2184
    %vm2186 = vcmp.eq.f32.partialorder %v2183, %v2185
    %v2187 = vsel %vm2186, %v2182, inf
    %2188 = vmin.xlane.f32.xlu0 %v2187
    %v2189 = vpop.xlane.xlu0 %2188
    %v2190 = vcvt.f32.s32 %v2189
    %v2191 = vcvt.f32.s32 %v2185
    %v2192 = vshll.u32 %v2191, 16
    %v2193 = vadd.s32 %v2192, %v2190
    %s2194 = sld [smem:[#allocation2 + $0x2]]
    %p2195 = scmp.gt.s32.totalorder %s2194, 0
    %s2196 = scalar_lea.vmem %s9, 16
    %v2197 = vld [vmem:[%s2196] sm:$0xff]
    %s2198 = scalar_select %p2195, 1, 0
    %v2199 = vstv %s2198
    %vm2200 = vcmp.eq.s32.totalorder %v2199, 1
    %v2201 = vsel %vm2200, %v2197, %v2193
    %2202 = vrot.lane.b32.xlu0 %v2201, 2
    %v2203 = vpop.permute.xlu0 %2202
    %vm2204 = vcmask 23568
    %2205 = vst.msk [vmem:[#allocation5] sm:$0xff] %vm2204, %v2203
    %2206 = vset.pattern.permute.xlu0 0
    %2207 = vperm.xlu0 %2206, %v2201
    %v2208 = vpop.permute.xlu0 %2207
    %vm2209 = vcmp.eq.s32.totalorder %v1122, %v2208
    %v2210 = vsel %vm2209, 1, 0
    %v2211 = vcvt.s32.f32 %v2210
    %2212 = vmatprep.subr.mxu0 %v59
    %2213 = vmatpush1.msra.mxu0 %v58
    %2214 = vmatprep.subr.mxu0 %v61
    %2215 = vmatpush1.msra.mxu0 %v60
    %2216 = vmatprep.subr.mxu0 %v63
    %2217 = vmatpush1.msra.mxu0 %v62
    %2218 = vmatprep.subr.mxu0 %v65
    %2219 = vmatpush1.msra.mxu0 %v64
    %2220 = vmatprep.subr.mxu0 %v67
    %2221 = vmatpush1.msra.mxu0 %v66
    %2222 = vmatprep.subr.mxu0 %v69
    %2223 = vmatpush1.msra.mxu0 %v68
    %2224 = vmatprep.subr.mxu0 %v71
    %2225 = vmatpush1.msra.mxu0 %v70
    %2226 = vmatprep.subr.mxu0 %v73
    %2227 = vmatpush1.msra.mxu0 %v72
    %2228 = vmatprep.subr.mxu0 0.0
    %2229 = vmatpush1.msra.mxu0 0.0
    %2230 = vmatprep.subr.mxu0 0.0
    %2231 = vmatpush1.msra.mxu0 0.0
    %2232 = vmatprep.subr.mxu0 0.0
    %2233 = vmatpush1.msra.mxu0 0.0
    %2234 = vmatprep.subr.mxu0 0.0
    %2235 = vmatpush1.msra.mxu0 0.0
    %2236 = vmatprep.subr.mxu0 0.0
    %2237 = vmatpush1.msra.mxu0 0.0
    %2238 = vmatprep.subr.mxu0 0.0
    %2239 = vmatpush1.msra.mxu0 0.0
    %2240 = vmatprep.subr.mxu0 0.0
    %2241 = vmatpush1.msra.mxu0 0.0
    %2242 = vmatprep.subr.mxu0 0.0
    %2243 = vmatpush1.msra.mxu0 0.0
    %2244 = vmatprep.subr.mxu0 0.0
    %2245 = vmatpush1.msra.mxu0 0.0
    %2246 = vmatprep.subr.mxu0 0.0
    %2247 = vmatpush1.msra.mxu0 0.0
    %2248 = vmatprep.subr.mxu0 0.0
    %2249 = vmatpush1.msra.mxu0 0.0
    %2250 = vmatprep.subr.mxu0 0.0
    %2251 = vmatpush1.msra.mxu0 0.0
    %2252 = vmatprep.subr.mxu0 0.0
    %2253 = vmatpush1.msra.mxu0 0.0
    %2254 = vmatprep.subr.mxu0 0.0
    %2255 = vmatpush1.msra.mxu0 0.0
    %2256 = vmatprep.subr.mxu0 0.0
    %2257 = vmatpush1.msra.mxu0 0.0
    %2258 = vmatprep.subr.mxu0 0.0
    %2259 = vmatpush1.msra.mxu0 0.0
    %2260 = vmatprep.subr.mxu0 0.0
    %2261 = vmatpush1.msra.mxu0 0.0
    %2262 = vmatprep.subr.mxu0 0.0
    %2263 = vmatpush1.msra.mxu0 0.0
    %2264 = vmatprep.subr.mxu0 0.0
    %2265 = vmatpush1.msra.mxu0 0.0
    %2266 = vmatprep.subr.mxu0 0.0
    %2267 = vmatpush1.msra.mxu0 0.0
    %2268 = vmatprep.subr.mxu0 0.0
    %2269 = vmatpush1.msra.mxu0 0.0
    %2270 = vmatprep.subr.mxu0 0.0
    %2271 = vmatpush1.msra.mxu0 0.0
    %2272 = vmatprep.subr.mxu0 0.0
    %2273 = vmatpush1.msra.mxu0 0.0
    %2274 = vmatprep.subr.mxu0 0.0
    %2275 = vmatpush1.msra.mxu0 0.0
    %2276 = vmatprep.mubr.f32.mxu0 0.0
    %2277 = vmatmul.mubr.f32.gmra.mrb[0].mxu0 %v2007
    %v2278 = vpop.f32.mrb[0].mxu0
    %v2279 = vadd.f32 0.0, %v2278
    %v2280 = vpop.f32.mrb[0].mxu0
    %v2281 = vadd.f32 0.0, %v2280
    %2282 = vdwg.mxu0
    %v2284 = vsel %vm1516, %v2211, 0
    %2286 = vmatprep.subr.mxu0 %v91
    %2287 = vmatpush1.msra.mxu0 %v90
    %2288 = vmatprep.subr.mxu0 %v93
    %2289 = vmatpush1.msra.mxu0 %v92
    %2290 = vmatprep.subr.mxu0 0.0
    %2291 = vmatpush1.msra.mxu0 0.0
    %2292 = vmatprep.subr.mxu0 0.0
    %2293 = vmatpush1.msra.mxu0 0.0
    %2294 = vmatprep.subr.mxu0 0.0
    %2295 = vmatpush1.msra.mxu0 0.0
    %2296 = vmatprep.subr.mxu0 0.0
    %2297 = vmatpush1.msra.mxu0 0.0
    %2298 = vmatprep.subr.mxu0 0.0
    %2299 = vmatpush1.msra.mxu0 0.0
    %2300 = vmatprep.subr.mxu0 0.0
    %2301 = vmatpush1.msra.mxu0 0.0
    %2302 = vmatprep.subr.mxu0 0.0
    %2303 = vmatpush1.msra.mxu0 0.0
    %2304 = vmatprep.subr.mxu0 0.0
    %2305 = vmatpush1.msra.mxu0 0.0
    %2306 = vmatprep.subr.mxu0 0.0
    %2307 = vmatpush1.msra.mxu0 0.0
    %2308 = vmatprep.subr.mxu0 0.0
    %2309 = vmatpush1.msra.mxu0 0.0
    %2310 = vmatprep.subr.mxu0 0.0
    %2311 = vmatpush1.msra.mxu0 0.0
    %2312 = vmatprep.subr.mxu0 0.0
    %2313 = vmatpush1.msra.mxu0 0.0
    %2314 = vmatprep.subr.mxu0 0.0
    %2315 = vmatpush1.msra.mxu0 0.0
    %2316 = vmatprep.subr.mxu0 0.0
    %2317 = vmatpush1.msra.mxu0 0.0
    %2318 = vmatprep.subr.mxu0 0.0
    %2319 = vmatpush1.msra.mxu0 0.0
    %2320 = vmatprep.subr.mxu0 0.0
    %2321 = vmatpush1.msra.mxu0 0.0
    %2322 = vmatprep.subr.mxu0 0.0
    %2323 = vmatpush1.msra.mxu0 0.0
    %2324 = vmatprep.subr.mxu0 0.0
    %2325 = vmatpush1.msra.mxu0 0.0
    %2326 = vmatprep.subr.mxu0 0.0
    %2327 = vmatpush1.msra.mxu0 0.0
    %2328 = vmatprep.subr.mxu0 0.0
    %2329 = vmatpush1.msra.mxu0 0.0
    %2330 = vmatprep.subr.mxu0 0.0
    %2331 = vmatpush1.msra.mxu0 0.0
    %2332 = vmatprep.subr.mxu0 0.0
    %2333 = vmatpush1.msra.mxu0 0.0
    %2334 = vmatprep.subr.mxu0 0.0
    %2335 = vmatpush1.msra.mxu0 0.0
    %2336 = vmatprep.subr.mxu0 0.0
    %2337 = vmatpush1.msra.mxu0 0.0
    %2338 = vmatprep.subr.mxu0 0.0
    %2339 = vmatpush1.msra.mxu0 0.0
    %2340 = vmatprep.subr.mxu0 0.0
    %2341 = vmatpush1.msra.mxu0 0.0
    %2342 = vmatprep.subr.mxu0 0.0
    %2343 = vmatpush1.msra.mxu0 0.0
    %2344 = vmatprep.subr.mxu0 0.0
    %2345 = vmatpush1.msra.mxu0 0.0
    %2346 = vmatprep.subr.mxu0 0.0
    %2347 = vmatpush1.msra.mxu0 0.0
    %2348 = vmatprep.subr.mxu0 0.0
    %2349 = vmatpush1.msra.mxu0 0.0
    %2350 = vmatprep.mubr.f32.mxu0 0.0
    %2351 = vmatmul.mubr.f32.gmra.mrb[0].mxu0 %v2284
    %v2352 = vpop.f32.mrb[0].mxu0
    %v2353 = vadd.f32 %v2279, %v2352
    %v2354 = vpop.f32.mrb[0].mxu0
    %v2355 = vadd.f32 %v2281, %v2354
    %2356 = vdwg.mxu0
    %v2357 = vxor.u32 %v2353, 2147483648
    %v2358 = vxor.u32 %v2355, 2147483648
    %v2359 = vmul.f32 %v2357, 1.442695
    %v2360 = vpow.pop %v2359
    %v2361 = vmul.f32 %v2358, 1.442695
    %v2362 = vpow.pop %v2361
    %v2363 = vadd.f32 %v2360, 1.0
    %v2364 = vadd.f32 %v2362, 1.0
    %v2365 = vrcp.pop %v2363
    %v2366 = vmul.f32 1.0, %v2365
    %v2367 = vrcp.pop %v2364
    %v2368 = vmul.f32 1.0, %v2367
    %v2369 = vtanh.pop %v2355
    %v2370 = vmul.f32 %v2366, %v1997
    %2372 = vrot.lane.b32.xlu0 %v2369, 64
    %v2373 = vpop.permute.xlu0 %2372
    %v2375 = vmul.f32 %v2366, %v2373
    %2377 = vrot.lane.b32.xlu0 %v2375, 64
    %v2378 = vpop.permute.xlu0 %2377
    %v2380 = vadd.f32 %v2370, %v2378
    %v2381 = vtanh.pop %v2380
    %2383 = vrot.lane.b32.xlu0 %v2381, 64
    %v2384 = vpop.permute.xlu0 %2383
    %v2386 = vmul.f32 %v2368, %v2384
    %s2387 = scalar_lea.vmem %s5, 24
    %v2388 = vld [vmem:[%s2387] sm:$0xff]
    %v2390 = vsel %vm1135, %v2386, 0
    %2392 = vmatprep.subr.mxu0 0.0
    %2393 = vmatpush1.msra.mxu0 %v74
    %2394 = vmatprep.subr.mxu0 0.0
    %2395 = vmatpush1.msra.mxu0 %v75
    %2396 = vmatprep.subr.mxu0 0.0
    %2397 = vmatpush1.msra.mxu0 %v76
    %2398 = vmatprep.subr.mxu0 0.0
    %2399 = vmatpush1.msra.mxu0 %v77
    %2400 = vmatprep.subr.mxu0 0.0
    %2401 = vmatpush1.msra.mxu0 %v78
    %2402 = vmatprep.subr.mxu0 0.0
    %2403 = vmatpush1.msra.mxu0 %v79
    %2404 = vmatprep.subr.mxu0 0.0
    %2405 = vmatpush1.msra.mxu0 %v80
    %2406 = vmatprep.subr.mxu0 0.0
    %2407 = vmatpush1.msra.mxu0 %v81
    %2408 = vmatprep.subr.mxu0 0.0
    %2409 = vmatpush1.msra.mxu0 0.0
    %2410 = vmatprep.subr.mxu0 0.0
    %2411 = vmatpush1.msra.mxu0 0.0
    %2412 = vmatprep.subr.mxu0 0.0
    %2413 = vmatpush1.msra.mxu0 0.0
    %2414 = vmatprep.subr.mxu0 0.0
    %2415 = vmatpush1.msra.mxu0 0.0
    %2416 = vmatprep.subr.mxu0 0.0
    %2417 = vmatpush1.msra.mxu0 0.0
    %2418 = vmatprep.subr.mxu0 0.0
    %2419 = vmatpush1.msra.mxu0 0.0
    %2420 = vmatprep.subr.mxu0 0.0
    %2421 = vmatpush1.msra.mxu0 0.0
    %2422 = vmatprep.subr.mxu0 0.0
    %2423 = vmatpush1.msra.mxu0 0.0
    %2424 = vmatprep.subr.mxu0 0.0
    %2425 = vmatpush1.msra.mxu0 0.0
    %2426 = vmatprep.subr.mxu0 0.0
    %2427 = vmatpush1.msra.mxu0 0.0
    %2428 = vmatprep.subr.mxu0 0.0
    %2429 = vmatpush1.msra.mxu0 0.0
    %2430 = vmatprep.subr.mxu0 0.0
    %2431 = vmatpush1.msra.mxu0 0.0
    %2432 = vmatprep.subr.mxu0 0.0
    %2433 = vmatpush1.msra.mxu0 0.0
    %2434 = vmatprep.subr.mxu0 0.0
    %2435 = vmatpush1.msra.mxu0 0.0
    %2436 = vmatprep.subr.mxu0 0.0
    %2437 = vmatpush1.msra.mxu0 0.0
    %2438 = vmatprep.subr.mxu0 0.0
    %2439 = vmatpush1.msra.mxu0 0.0
    %2440 = vmatprep.subr.mxu0 0.0
    %2441 = vmatpush1.msra.mxu0 0.0
    %2442 = vmatprep.subr.mxu0 0.0
    %2443 = vmatpush1.msra.mxu0 0.0
    %2444 = vmatprep.subr.mxu0 0.0
    %2445 = vmatpush1.msra.mxu0 0.0
    %2446 = vmatprep.subr.mxu0 0.0
    %2447 = vmatpush1.msra.mxu0 0.0
    %2448 = vmatprep.subr.mxu0 0.0
    %2449 = vmatpush1.msra.mxu0 0.0
    %2450 = vmatprep.subr.mxu0 0.0
    %2451 = vmatpush1.msra.mxu0 0.0
    %2452 = vmatprep.subr.mxu0 0.0
    %2453 = vmatpush1.msra.mxu0 0.0
    %2454 = vmatprep.subr.mxu0 0.0
    %2455 = vmatpush1.msra.mxu0 0.0
    %2456 = vmatprep.mubr.f32.mxu0 0.0
    %2457 = vmatmul.mubr.f32.gmra.mrb[0].mxu0 %v2390
    %v2458 = vpop.f32.mrb[0].mxu0
    %v2459 = vadd.f32 0.0, %v2458
    %v2460 = vpop.f32.mrb[0].mxu0
    %2461 = vdwg.mxu0
    %v2462 = vadd.f32 %v2388, %v2459
    %v2463 = vtanh.pop %v2462
    %v2465 = vsel %vm1135, %v2463, 0
    %2467 = vmatprep.subr.mxu0 0.0
    %2468 = vmatpush1.msra.mxu0 %v82
    %2469 = vmatprep.subr.mxu0 0.0
    %2470 = vmatpush1.msra.mxu0 %v83
    %2471 = vmatprep.subr.mxu0 0.0
    %2472 = vmatpush1.msra.mxu0 %v84
    %2473 = vmatprep.subr.mxu0 0.0
    %2474 = vmatpush1.msra.mxu0 %v85
    %2475 = vmatprep.subr.mxu0 0.0
    %2476 = vmatpush1.msra.mxu0 %v86
    %2477 = vmatprep.subr.mxu0 0.0
    %2478 = vmatpush1.msra.mxu0 %v87
    %2479 = vmatprep.subr.mxu0 0.0
    %2480 = vmatpush1.msra.mxu0 %v88
    %2481 = vmatprep.subr.mxu0 0.0
    %2482 = vmatpush1.msra.mxu0 %v89
    %2483 = vmatprep.subr.mxu0 0.0
    %2484 = vmatpush1.msra.mxu0 0.0
    %2485 = vmatprep.subr.mxu0 0.0
    %2486 = vmatpush1.msra.mxu0 0.0
    %2487 = vmatprep.subr.mxu0 0.0
    %2488 = vmatpush1.msra.mxu0 0.0
    %2489 = vmatprep.subr.mxu0 0.0
    %2490 = vmatpush1.msra.mxu0 0.0
    %2491 = vmatprep.subr.mxu0 0.0
    %2492 = vmatpush1.msra.mxu0 0.0
    %2493 = vmatprep.subr.mxu0 0.0
    %2494 = vmatpush1.msra.mxu0 0.0
    %2495 = vmatprep.subr.mxu0 0.0
    %2496 = vmatpush1.msra.mxu0 0.0
    %2497 = vmatprep.subr.mxu0 0.0
    %2498 = vmatpush1.msra.mxu0 0.0
    %2499 = vmatprep.subr.mxu0 0.0
    %2500 = vmatpush1.msra.mxu0 0.0
    %2501 = vmatprep.subr.mxu0 0.0
    %2502 = vmatpush1.msra.mxu0 0.0
    %2503 = vmatprep.subr.mxu0 0.0
    %2504 = vmatpush1.msra.mxu0 0.0
    %2505 = vmatprep.subr.mxu0 0.0
    %2506 = vmatpush1.msra.mxu0 0.0
    %2507 = vmatprep.subr.mxu0 0.0
    %2508 = vmatpush1.msra.mxu0 0.0
    %2509 = vmatprep.subr.mxu0 0.0
    %2510 = vmatpush1.msra.mxu0 0.0
    %2511 = vmatprep.subr.mxu0 0.0
    %2512 = vmatpush1.msra.mxu0 0.0
    %2513 = vmatprep.subr.mxu0 0.0
    %2514 = vmatpush1.msra.mxu0 0.0
    %2515 = vmatprep.subr.mxu0 0.0
    %2516 = vmatpush1.msra.mxu0 0.0
    %2517 = vmatprep.subr.mxu0 0.0
    %2518 = vmatpush1.msra.mxu0 0.0
    %2519 = vmatprep.subr.mxu0 0.0
    %2520 = vmatpush1.msra.mxu0 0.0
    %2521 = vmatprep.subr.mxu0 0.0
    %2522 = vmatpush1.msra.mxu0 0.0
    %2523 = vmatprep.subr.mxu0 0.0
    %2524 = vmatpush1.msra.mxu0 0.0
    %2525 = vmatprep.subr.mxu0 0.0
    %2526 = vmatpush1.msra.mxu0 0.0
    %2527 = vmatprep.subr.mxu0 0.0
    %2528 = vmatpush1.msra.mxu0 0.0
    %2529 = vmatprep.subr.mxu0 0.0
    %2530 = vmatpush1.msra.mxu0 0.0
    %2531 = vmatprep.mubr.f32.mxu0 0.0
    %2532 = vmatmul.mubr.f32.gmra.mrb[0].mxu0 %v2465
    %v2533 = vpop.f32.mrb[0].mxu0
    %v2534 = vadd.f32 0.0, %v2533
    %v2535 = vpop.f32.mrb[0].mxu0
    %2536 = vdwg.mxu0
    %v2537 = vsel %vm1395, %v2534, -inf
    %2538 = vmax.xlane.f32.xlu0 %v2537
    %v2539 = vpop.xlane.xlu0 %2538
    %v2540 = vsub.f32 %v2534, %v2539
    %v2541 = vmul.f32 %v2540, 1.442695
    %v2542 = vpow.pop %v2541
    %v2543 = vsel %vm1395, %v2542, 0.0
    %2544 = vadd.xlane.f32.xlu0 %v2543
    %v2545 = vpop.xlane.xlu0 %2544
    %v2546 = vrcp.pop %v2545
    %v2547 = vmul.f32 %v2542, %v2546
    %2549 = vrot.lane.b32.xlu0 %v2547, 6
    %v2550 = vpop.permute.xlu0 %2549
    %vm2552 = vcmask 64560
    %2553 = vst.msk [vmem:[%s11] sm:$0xff] %vm2552, %v2550
    %s2554 = scalar_lea.vmem %s8, 24
    %v2555 = vld [vmem:[%s2554] sm:$0xff]
    %v2556 = vadd.f32 %v2534, %v2555
    %v2557 = vsel %vm1395, %v2556, -inf
    %2558 = vmax.xlane.f32.xlu0 %v2557
    %v2559 = vpop.xlane.xlu0 %2558
    %vm2560 = vcmp.ge.f32.partialorder %v2556, %v2559
    %v2561 = vsel %vm2560, %v1122, 2
    %v2562 = vsel %vm1395, %v2561, 2147483647
    %v2563 = vand.u32 %v2562, 65535
    %v2564 = vshra.s32 %v2562, 16
    %v2565 = vcvt.s32.f32 %v2563
    %v2566 = vcvt.s32.f32 %v2564
    %2567 = vmin.xlane.f32.xlu0 %v2566
    %v2568 = vpop.xlane.xlu0 %2567
    %vm2569 = vcmp.eq.f32.partialorder %v2566, %v2568
    %v2570 = vsel %vm2569, %v2565, inf
    %2571 = vmin.xlane.f32.xlu0 %v2570
    %v2572 = vpop.xlane.xlu0 %2571
    %v2573 = vcvt.f32.s32 %v2572
    %v2574 = vcvt.f32.s32 %v2568
    %v2575 = vshll.u32 %v2574, 16
    %v2576 = vadd.s32 %v2575, %v2573
    %s2577 = sld [smem:[#allocation2 + $0x3]]
    %p2578 = scmp.gt.s32.totalorder %s2577, 0
    %s2579 = scalar_lea.vmem %s9, 24
    %v2580 = vld [vmem:[%s2579] sm:$0xff]
    %s2581 = scalar_select %p2578, 1, 0
    %v2582 = vstv %s2581
    %vm2583 = vcmp.eq.s32.totalorder %v2582, 1
    %v2584 = vsel %vm2583, %v2580, %v2576
    %2585 = vrot.lane.b32.xlu0 %v2584, 3
    %v2586 = vpop.permute.xlu0 %2585
    %vm2587 = vcmask 31768
    %2588 = vst.msk [vmem:[#allocation5] sm:$0xff] %vm2587, %v2586
    %2589 = vset.pattern.permute.xlu0 0
    %2590 = vperm.xlu0 %2589, %v2584
    %v2591 = vpop.permute.xlu0 %2590
    %vm2592 = vcmp.eq.s32.totalorder %v1122, %v2591
    %v2593 = vsel %vm2592, 1, 0
    %v2594 = vcvt.s32.f32 %v2593
    %2595 = vmatprep.subr.mxu0 %v59
    %2596 = vmatpush1.msra.mxu0 %v58
    %2597 = vmatprep.subr.mxu0 %v61
    %2598 = vmatpush1.msra.mxu0 %v60
    %2599 = vmatprep.subr.mxu0 %v63
    %2600 = vmatpush1.msra.mxu0 %v62
    %2601 = vmatprep.subr.mxu0 %v65
    %2602 = vmatpush1.msra.mxu0 %v64
    %2603 = vmatprep.subr.mxu0 %v67
    %2604 = vmatpush1.msra.mxu0 %v66
    %2605 = vmatprep.subr.mxu0 %v69
    %2606 = vmatpush1.msra.mxu0 %v68
    %2607 = vmatprep.subr.mxu0 %v71
    %2608 = vmatpush1.msra.mxu0 %v70
    %2609 = vmatprep.subr.mxu0 %v73
    %2610 = vmatpush1.msra.mxu0 %v72
    %2611 = vmatprep.subr.mxu0 0.0
    %2612 = vmatpush1.msra.mxu0 0.0
    %2613 = vmatprep.subr.mxu0 0.0
    %2614 = vmatpush1.msra.mxu0 0.0
    %2615 = vmatprep.subr.mxu0 0.0
    %2616 = vmatpush1.msra.mxu0 0.0
    %2617 = vmatprep.subr.mxu0 0.0
    %2618 = vmatpush1.msra.mxu0 0.0
    %2619 = vmatprep.subr.mxu0 0.0
    %2620 = vmatpush1.msra.mxu0 0.0
    %2621 = vmatprep.subr.mxu0 0.0
    %2622 = vmatpush1.msra.mxu0 0.0
    %2623 = vmatprep.subr.mxu0 0.0
    %2624 = vmatpush1.msra.mxu0 0.0
    %2625 = vmatprep.subr.mxu0 0.0
    %2626 = vmatpush1.msra.mxu0 0.0
    %2627 = vmatprep.subr.mxu0 0.0
    %2628 = vmatpush1.msra.mxu0 0.0
    %2629 = vmatprep.subr.mxu0 0.0
    %2630 = vmatpush1.msra.mxu0 0.0
    %2631 = vmatprep.subr.mxu0 0.0
    %2632 = vmatpush1.msra.mxu0 0.0
    %2633 = vmatprep.subr.mxu0 0.0
    %2634 = vmatpush1.msra.mxu0 0.0
    %2635 = vmatprep.subr.mxu0 0.0
    %2636 = vmatpush1.msra.mxu0 0.0
    %2637 = vmatprep.subr.mxu0 0.0
    %2638 = vmatpush1.msra.mxu0 0.0
    %2639 = vmatprep.subr.mxu0 0.0
    %2640 = vmatpush1.msra.mxu0 0.0
    %2641 = vmatprep.subr.mxu0 0.0
    %2642 = vmatpush1.msra.mxu0 0.0
    %2643 = vmatprep.subr.mxu0 0.0
    %2644 = vmatpush1.msra.mxu0 0.0
    %2645 = vmatprep.subr.mxu0 0.0
    %2646 = vmatpush1.msra.mxu0 0.0
    %2647 = vmatprep.subr.mxu0 0.0
    %2648 = vmatpush1.msra.mxu0 0.0
    %2649 = vmatprep.subr.mxu0 0.0
    %2650 = vmatpush1.msra.mxu0 0.0
    %2651 = vmatprep.subr.mxu0 0.0
    %2652 = vmatpush1.msra.mxu0 0.0
    %2653 = vmatprep.subr.mxu0 0.0
    %2654 = vmatpush1.msra.mxu0 0.0
    %2655 = vmatprep.subr.mxu0 0.0
    %2656 = vmatpush1.msra.mxu0 0.0
    %2657 = vmatprep.subr.mxu0 0.0
    %2658 = vmatpush1.msra.mxu0 0.0
    %2659 = vmatprep.mubr.f32.mxu0 0.0
    %2660 = vmatmul.mubr.f32.gmra.mrb[0].mxu0 %v2390
    %v2661 = vpop.f32.mrb[0].mxu0
    %v2662 = vadd.f32 0.0, %v2661
    %v2663 = vpop.f32.mrb[0].mxu0
    %v2664 = vadd.f32 0.0, %v2663
    %2665 = vdwg.mxu0
    %v2667 = vsel %vm1516, %v2594, 0
    %2669 = vmatprep.subr.mxu0 %v91
    %2670 = vmatpush1.msra.mxu0 %v90
    %2671 = vmatprep.subr.mxu0 %v93
    %2672 = vmatpush1.msra.mxu0 %v92
    %2673 = vmatprep.subr.mxu0 0.0
    %2674 = vmatpush1.msra.mxu0 0.0
    %2675 = vmatprep.subr.mxu0 0.0
    %2676 = vmatpush1.msra.mxu0 0.0
    %2677 = vmatprep.subr.mxu0 0.0
    %2678 = vmatpush1.msra.mxu0 0.0
    %2679 = vmatprep.subr.mxu0 0.0
    %2680 = vmatpush1.msra.mxu0 0.0
    %2681 = vmatprep.subr.mxu0 0.0
    %2682 = vmatpush1.msra.mxu0 0.0
    %2683 = vmatprep.subr.mxu0 0.0
    %2684 = vmatpush1.msra.mxu0 0.0
    %2685 = vmatprep.subr.mxu0 0.0
    %2686 = vmatpush1.msra.mxu0 0.0
    %2687 = vmatprep.subr.mxu0 0.0
    %2688 = vmatpush1.msra.mxu0 0.0
    %2689 = vmatprep.subr.mxu0 0.0
    %2690 = vmatpush1.msra.mxu0 0.0
    %2691 = vmatprep.subr.mxu0 0.0
    %2692 = vmatpush1.msra.mxu0 0.0
    %2693 = vmatprep.subr.mxu0 0.0
    %2694 = vmatpush1.msra.mxu0 0.0
    %2695 = vmatprep.subr.mxu0 0.0
    %2696 = vmatpush1.msra.mxu0 0.0
    %2697 = vmatprep.subr.mxu0 0.0
    %2698 = vmatpush1.msra.mxu0 0.0
    %2699 = vmatprep.subr.mxu0 0.0
    %2700 = vmatpush1.msra.mxu0 0.0
    %2701 = vmatprep.subr.mxu0 0.0
    %2702 = vmatpush1.msra.mxu0 0.0
    %2703 = vmatprep.subr.mxu0 0.0
    %2704 = vmatpush1.msra.mxu0 0.0
    %2705 = vmatprep.subr.mxu0 0.0
    %2706 = vmatpush1.msra.mxu0 0.0
    %2707 = vmatprep.subr.mxu0 0.0
    %2708 = vmatpush1.msra.mxu0 0.0
    %2709 = vmatprep.subr.mxu0 0.0
    %2710 = vmatpush1.msra.mxu0 0.0
    %2711 = vmatprep.subr.mxu0 0.0
    %2712 = vmatpush1.msra.mxu0 0.0
    %2713 = vmatprep.subr.mxu0 0.0
    %2714 = vmatpush1.msra.mxu0 0.0
    %2715 = vmatprep.subr.mxu0 0.0
    %2716 = vmatpush1.msra.mxu0 0.0
    %2717 = vmatprep.subr.mxu0 0.0
    %2718 = vmatpush1.msra.mxu0 0.0
    %2719 = vmatprep.subr.mxu0 0.0
    %2720 = vmatpush1.msra.mxu0 0.0
    %2721 = vmatprep.subr.mxu0 0.0
    %2722 = vmatpush1.msra.mxu0 0.0
    %2723 = vmatprep.subr.mxu0 0.0
    %2724 = vmatpush1.msra.mxu0 0.0
    %2725 = vmatprep.subr.mxu0 0.0
    %2726 = vmatpush1.msra.mxu0 0.0
    %2727 = vmatprep.subr.mxu0 0.0
    %2728 = vmatpush1.msra.mxu0 0.0
    %2729 = vmatprep.subr.mxu0 0.0
    %2730 = vmatpush1.msra.mxu0 0.0
    %2731 = vmatprep.subr.mxu0 0.0
    %2732 = vmatpush1.msra.mxu0 0.0
    %2733 = vmatprep.mubr.f32.mxu0 0.0
    %2734 = vmatmul.mubr.f32.gmra.mrb[0].mxu0 %v2667
    %v2735 = vpop.f32.mrb[0].mxu0
    %v2736 = vadd.f32 %v2662, %v2735
    %v2737 = vpop.f32.mrb[0].mxu0
    %v2738 = vadd.f32 %v2664, %v2737
    %2739 = vdwg.mxu0
    %v2740 = vxor.u32 %v2736, 2147483648
    %v2741 = vxor.u32 %v2738, 2147483648
    %v2742 = vmul.f32 %v2740, 1.442695
    %v2743 = vpow.pop %v2742
    %v2744 = vmul.f32 %v2741, 1.442695
    %v2745 = vpow.pop %v2744
    %v2746 = vadd.f32 %v2743, 1.0
    %v2747 = vadd.f32 %v2745, 1.0
    %v2748 = vrcp.pop %v2746
    %v2749 = vmul.f32 1.0, %v2748
    %v2750 = vrcp.pop %v2747
    %v2751 = vmul.f32 1.0, %v2750
    %v2752 = vtanh.pop %v2738
    %v2753 = vmul.f32 %v2749, %v2380
    %2755 = vrot.lane.b32.xlu0 %v2752, 64
    %v2756 = vpop.permute.xlu0 %2755
    %v2758 = vmul.f32 %v2749, %v2756
    %2760 = vrot.lane.b32.xlu0 %v2758, 64
    %v2761 = vpop.permute.xlu0 %2760
    %v2763 = vadd.f32 %v2753, %v2761
    %v2764 = vtanh.pop %v2763
    %2766 = vrot.lane.b32.xlu0 %v2764, 64
    %v2767 = vpop.permute.xlu0 %2766
    %v2769 = vmul.f32 %v2751, %v2767
    %s2770 = scalar_lea.vmem %s5, 32
    %v2771 = vld [vmem:[%s2770] sm:$0xff]
    %v2773 = vsel %vm1135, %v2769, 0
    %2775 = vmatprep.subr.mxu0 0.0
    %2776 = vmatpush1.msra.mxu0 %v74
    %2777 = vmatprep.subr.mxu0 0.0
    %2778 = vmatpush1.msra.mxu0 %v75
    %2779 = vmatprep.subr.mxu0 0.0
    %2780 = vmatpush1.msra.mxu0 %v76
    %2781 = vmatprep.subr.mxu0 0.0
    %2782 = vmatpush1.msra.mxu0 %v77
    %2783 = vmatprep.subr.mxu0 0.0
    %2784 = vmatpush1.msra.mxu0 %v78
    %2785 = vmatprep.subr.mxu0 0.0
    %2786 = vmatpush1.msra.mxu0 %v79
    %2787 = vmatprep.subr.mxu0 0.0
    %2788 = vmatpush1.msra.mxu0 %v80
    %2789 = vmatprep.subr.mxu0 0.0
    %2790 = vmatpush1.msra.mxu0 %v81
    %2791 = vmatprep.subr.mxu0 0.0
    %2792 = vmatpush1.msra.mxu0 0.0
    %2793 = vmatprep.subr.mxu0 0.0
    %2794 = vmatpush1.msra.mxu0 0.0
    %2795 = vmatprep.subr.mxu0 0.0
    %2796 = vmatpush1.msra.mxu0 0.0
    %2797 = vmatprep.subr.mxu0 0.0
    %2798 = vmatpush1.msra.mxu0 0.0
    %2799 = vmatprep.subr.mxu0 0.0
    %2800 = vmatpush1.msra.mxu0 0.0
    %2801 = vmatprep.subr.mxu0 0.0
    %2802 = vmatpush1.msra.mxu0 0.0
    %2803 = vmatprep.subr.mxu0 0.0
    %2804 = vmatpush1.msra.mxu0 0.0
    %2805 = vmatprep.subr.mxu0 0.0
    %2806 = vmatpush1.msra.mxu0 0.0
    %2807 = vmatprep.subr.mxu0 0.0
    %2808 = vmatpush1.msra.mxu0 0.0
    %2809 = vmatprep.subr.mxu0 0.0
    %2810 = vmatpush1.msra.mxu0 0.0
    %2811 = vmatprep.subr.mxu0 0.0
    %2812 = vmatpush1.msra.mxu0 0.0
    %2813 = vmatprep.subr.mxu0 0.0
    %2814 = vmatpush1.msra.mxu0 0.0
    %2815 = vmatprep.subr.mxu0 0.0
    %2816 = vmatpush1.msra.mxu0 0.0
    %2817 = vmatprep.subr.mxu0 0.0
    %2818 = vmatpush1.msra.mxu0 0.0
    %2819 = vmatprep.subr.mxu0 0.0
    %2820 = vmatpush1.msra.mxu0 0.0
    %2821 = vmatprep.subr.mxu0 0.0
    %2822 = vmatpush1.msra.mxu0 0.0
    %2823 = vmatprep.subr.mxu0 0.0
    %2824 = vmatpush1.msra.mxu0 0.0
    %2825 = vmatprep.subr.mxu0 0.0
    %2826 = vmatpush1.msra.mxu0 0.0
    %2827 = vmatprep.subr.mxu0 0.0
    %2828 = vmatpush1.msra.mxu0 0.0
    %2829 = vmatprep.subr.mxu0 0.0
    %2830 = vmatpush1.msra.mxu0 0.0
    %2831 = vmatprep.subr.mxu0 0.0
    %2832 = vmatpush1.msra.mxu0 0.0
    %2833 = vmatprep.subr.mxu0 0.0
    %2834 = vmatpush1.msra.mxu0 0.0
    %2835 = vmatprep.subr.mxu0 0.0
    %2836 = vmatpush1.msra.mxu0 0.0
    %2837 = vmatprep.subr.mxu0 0.0
    %2838 = vmatpush1.msra.mxu0 0.0
    %2839 = vmatprep.mubr.f32.mxu0 0.0
    %2840 = vmatmul.mubr.f32.gmra.mrb[0].mxu0 %v2773
    %v2841 = vpop.f32.mrb[0].mxu0
    %v2842 = vadd.f32 0.0, %v2841
    %v2843 = vpop.f32.mrb[0].mxu0
    %2844 = vdwg.mxu0
    %v2845 = vadd.f32 %v2771, %v2842
    %v2846 = vtanh.pop %v2845
    %v2848 = vsel %vm1135, %v2846, 0
    %2850 = vmatprep.subr.mxu0 0.0
    %2851 = vmatpush1.msra.mxu0 %v82
    %2852 = vmatprep.subr.mxu0 0.0
    %2853 = vmatpush1.msra.mxu0 %v83
    %2854 = vmatprep.subr.mxu0 0.0
    %2855 = vmatpush1.msra.mxu0 %v84
    %2856 = vmatprep.subr.mxu0 0.0
    %2857 = vmatpush1.msra.mxu0 %v85
    %2858 = vmatprep.subr.mxu0 0.0
    %2859 = vmatpush1.msra.mxu0 %v86
    %2860 = vmatprep.subr.mxu0 0.0
    %2861 = vmatpush1.msra.mxu0 %v87
    %2862 = vmatprep.subr.mxu0 0.0
    %2863 = vmatpush1.msra.mxu0 %v88
    %2864 = vmatprep.subr.mxu0 0.0
    %2865 = vmatpush1.msra.mxu0 %v89
    %2866 = vmatprep.subr.mxu0 0.0
    %2867 = vmatpush1.msra.mxu0 0.0
    %2868 = vmatprep.subr.mxu0 0.0
    %2869 = vmatpush1.msra.mxu0 0.0
    %2870 = vmatprep.subr.mxu0 0.0
    %2871 = vmatpush1.msra.mxu0 0.0
    %2872 = vmatprep.subr.mxu0 0.0
    %2873 = vmatpush1.msra.mxu0 0.0
    %2874 = vmatprep.subr.mxu0 0.0
    %2875 = vmatpush1.msra.mxu0 0.0
    %2876 = vmatprep.subr.mxu0 0.0
    %2877 = vmatpush1.msra.mxu0 0.0
    %2878 = vmatprep.subr.mxu0 0.0
    %2879 = vmatpush1.msra.mxu0 0.0
    %2880 = vmatprep.subr.mxu0 0.0
    %2881 = vmatpush1.msra.mxu0 0.0
    %2882 = vmatprep.subr.mxu0 0.0
    %2883 = vmatpush1.msra.mxu0 0.0
    %2884 = vmatprep.subr.mxu0 0.0
    %2885 = vmatpush1.msra.mxu0 0.0
    %2886 = vmatprep.subr.mxu0 0.0
    %2887 = vmatpush1.msra.mxu0 0.0
    %2888 = vmatprep.subr.mxu0 0.0
    %2889 = vmatpush1.msra.mxu0 0.0
    %2890 = vmatprep.subr.mxu0 0.0
    %2891 = vmatpush1.msra.mxu0 0.0
    %2892 = vmatprep.subr.mxu0 0.0
    %2893 = vmatpush1.msra.mxu0 0.0
    %2894 = vmatprep.subr.mxu0 0.0
    %2895 = vmatpush1.msra.mxu0 0.0
    %2896 = vmatprep.subr.mxu0 0.0
    %2897 = vmatpush1.msra.mxu0 0.0
    %2898 = vmatprep.subr.mxu0 0.0
    %2899 = vmatpush1.msra.mxu0 0.0
    %2900 = vmatprep.subr.mxu0 0.0
    %2901 = vmatpush1.msra.mxu0 0.0
    %2902 = vmatprep.subr.mxu0 0.0
    %2903 = vmatpush1.msra.mxu0 0.0
    %2904 = vmatprep.subr.mxu0 0.0
    %2905 = vmatpush1.msra.mxu0 0.0
    %2906 = vmatprep.subr.mxu0 0.0
    %2907 = vmatpush1.msra.mxu0 0.0
    %2908 = vmatprep.subr.mxu0 0.0
    %2909 = vmatpush1.msra.mxu0 0.0
    %2910 = vmatprep.subr.mxu0 0.0
    %2911 = vmatpush1.msra.mxu0 0.0
    %2912 = vmatprep.subr.mxu0 0.0
    %2913 = vmatpush1.msra.mxu0 0.0
    %2914 = vmatprep.mubr.f32.mxu0 0.0
    %2915 = vmatmul.mubr.f32.gmra.mrb[0].mxu0 %v2848
    %v2916 = vpop.f32.mrb[0].mxu0
    %v2917 = vadd.f32 0.0, %v2916
    %v2918 = vpop.f32.mrb[0].mxu0
    %2919 = vdwg.mxu0
    %v2920 = vsel %vm1395, %v2917, -inf
    %2921 = vmax.xlane.f32.xlu0 %v2920
    %v2922 = vpop.xlane.xlu0 %2921
    %v2923 = vsub.f32 %v2917, %v2922
    %v2924 = vmul.f32 %v2923, 1.442695
    %v2925 = vpow.pop %v2924
    %v2926 = vsel %vm1395, %v2925, 0.0
    %2927 = vadd.xlane.f32.xlu0 %v2926
    %v2928 = vpop.xlane.xlu0 %2927
    %v2929 = vrcp.pop %v2928
    %v2930 = vmul.f32 %v2925, %v2929
    %2932 = vrot.lane.b32.xlu0 %v2930, 8
    %v2933 = vpop.permute.xlu0 %2932
    %vm2935 = vcmask 80960
    %2936 = vst.msk [vmem:[%s11] sm:$0xff] %vm2935, %v2933
    %s2937 = scalar_lea.vmem %s8, 32
    %v2938 = vld [vmem:[%s2937] sm:$0xff]
    %v2939 = vadd.f32 %v2917, %v2938
    %v2940 = vsel %vm1395, %v2939, -inf
    %2941 = vmax.xlane.f32.xlu0 %v2940
    %v2942 = vpop.xlane.xlu0 %2941
    %vm2943 = vcmp.ge.f32.partialorder %v2939, %v2942
    %v2944 = vsel %vm2943, %v1122, 2
    %v2945 = vsel %vm1395, %v2944, 2147483647
    %v2946 = vand.u32 %v2945, 65535
    %v2947 = vshra.s32 %v2945, 16
    %v2948 = vcvt.s32.f32 %v2946
    %v2949 = vcvt.s32.f32 %v2947
    %2950 = vmin.xlane.f32.xlu0 %v2949
    %v2951 = vpop.xlane.xlu0 %2950
    %vm2952 = vcmp.eq.f32.partialorder %v2949, %v2951
    %v2953 = vsel %vm2952, %v2948, inf
    %2954 = vmin.xlane.f32.xlu0 %v2953
    %v2955 = vpop.xlane.xlu0 %2954
    %v2956 = vcvt.f32.s32 %v2955
    %v2957 = vcvt.f32.s32 %v2951
    %v2958 = vshll.u32 %v2957, 16
    %v2959 = vadd.s32 %v2958, %v2956
    %s2960 = sld [smem:[#allocation2 + $0x4]]
    %p2961 = scmp.gt.s32.totalorder %s2960, 0
    %s2962 = scalar_lea.vmem %s9, 32
    %v2963 = vld [vmem:[%s2962] sm:$0xff]
    %s2964 = scalar_select %p2961, 1, 0
    %v2965 = vstv %s2964
    %vm2966 = vcmp.eq.s32.totalorder %v2965, 1
    %v2967 = vsel %vm2966, %v2963, %v2959
    %2968 = vrot.lane.b32.xlu0 %v2967, 4
    %v2969 = vpop.permute.xlu0 %2968
    %vm2970 = vcmask 39968
    %2971 = vst.msk [vmem:[#allocation5] sm:$0xff] %vm2970, %v2969
    %2972 = vset.pattern.permute.xlu0 0
    %2973 = vperm.xlu0 %2972, %v2967
    %v2974 = vpop.permute.xlu0 %2973
    %vm2975 = vcmp.eq.s32.totalorder %v1122, %v2974
    %v2976 = vsel %vm2975, 1, 0
    %v2977 = vcvt.s32.f32 %v2976
    %2978 = vmatprep.subr.mxu0 %v59
    %2979 = vmatpush1.msra.mxu0 %v58
    %2980 = vmatprep.subr.mxu0 %v61
    %2981 = vmatpush1.msra.mxu0 %v60
    %2982 = vmatprep.subr.mxu0 %v63
    %2983 = vmatpush1.msra.mxu0 %v62
    %2984 = vmatprep.subr.mxu0 %v65
    %2985 = vmatpush1.msra.mxu0 %v64
    %2986 = vmatprep.subr.mxu0 %v67
    %2987 = vmatpush1.msra.mxu0 %v66
    %2988 = vmatprep.subr.mxu0 %v69
    %2989 = vmatpush1.msra.mxu0 %v68
    %2990 = vmatprep.subr.mxu0 %v71
    %2991 = vmatpush1.msra.mxu0 %v70
    %2992 = vmatprep.subr.mxu0 %v73
    %2993 = vmatpush1.msra.mxu0 %v72
    %2994 = vmatprep.subr.mxu0 0.0
    %2995 = vmatpush1.msra.mxu0 0.0
    %2996 = vmatprep.subr.mxu0 0.0
    %2997 = vmatpush1.msra.mxu0 0.0
    %2998 = vmatprep.subr.mxu0 0.0
    %2999 = vmatpush1.msra.mxu0 0.0
    %3000 = vmatprep.subr.mxu0 0.0
    %3001 = vmatpush1.msra.mxu0 0.0
    %3002 = vmatprep.subr.mxu0 0.0
    %3003 = vmatpush1.msra.mxu0 0.0
    %3004 = vmatprep.subr.mxu0 0.0
    %3005 = vmatpush1.msra.mxu0 0.0
    %3006 = vmatprep.subr.mxu0 0.0
    %3007 = vmatpush1.msra.mxu0 0.0
    %3008 = vmatprep.subr.mxu0 0.0
    %3009 = vmatpush1.msra.mxu0 0.0
    %3010 = vmatprep.subr.mxu0 0.0
    %3011 = vmatpush1.msra.mxu0 0.0
    %3012 = vmatprep.subr.mxu0 0.0
    %3013 = vmatpush1.msra.mxu0 0.0
    %3014 = vmatprep.subr.mxu0 0.0
    %3015 = vmatpush1.msra.mxu0 0.0
    %3016 = vmatprep.subr.mxu0 0.0
    %3017 = vmatpush1.msra.mxu0 0.0
    %3018 = vmatprep.subr.mxu0 0.0
    %3019 = vmatpush1.msra.mxu0 0.0
    %3020 = vmatprep.subr.mxu0 0.0
    %3021 = vmatpush1.msra.mxu0 0.0
    %3022 = vmatprep.subr.mxu0 0.0
    %3023 = vmatpush1.msra.mxu0 0.0
    %3024 = vmatprep.subr.mxu0 0.0
    %3025 = vmatpush1.msra.mxu0 0.0
    %3026 = vmatprep.subr.mxu0 0.0
    %3027 = vmatpush1.msra.mxu0 0.0
    %3028 = vmatprep.subr.mxu0 0.0
    %3029 = vmatpush1.msra.mxu0 0.0
    %3030 = vmatprep.subr.mxu0 0.0
    %3031 = vmatpush1.msra.mxu0 0.0
    %3032 = vmatprep.subr.mxu0 0.0
    %3033 = vmatpush1.msra.mxu0 0.0
    %3034 = vmatprep.subr.mxu0 0.0
    %3035 = vmatpush1.msra.mxu0 0.0
    %3036 = vmatprep.subr.mxu0 0.0
    %3037 = vmatpush1.msra.mxu0 0.0
    %3038 = vmatprep.subr.mxu0 0.0
    %3039 = vmatpush1.msra.mxu0 0.0
    %3040 = vmatprep.subr.mxu0 0.0
    %3041 = vmatpush1.msra.mxu0 0.0
    %3042 = vmatprep.mubr.f32.mxu0 0.0
    %3043 = vmatmul.mubr.f32.gmra.mrb[0].mxu0 %v2773
    %v3044 = vpop.f32.mrb[0].mxu0
    %v3045 = vadd.f32 0.0, %v3044
    %v3046 = vpop.f32.mrb[0].mxu0
    %v3047 = vadd.f32 0.0, %v3046
    %3048 = vdwg.mxu0
    %v3050 = vsel %vm1516, %v2977, 0
    %3052 = vmatprep.subr.mxu0 %v91
    %3053 = vmatpush1.msra.mxu0 %v90
    %3054 = vmatprep.subr.mxu0 %v93
    %3055 = vmatpush1.msra.mxu0 %v92
    %3056 = vmatprep.subr.mxu0 0.0
    %3057 = vmatpush1.msra.mxu0 0.0
    %3058 = vmatprep.subr.mxu0 0.0
    %3059 = vmatpush1.msra.mxu0 0.0
    %3060 = vmatprep.subr.mxu0 0.0
    %3061 = vmatpush1.msra.mxu0 0.0
    %3062 = vmatprep.subr.mxu0 0.0
    %3063 = vmatpush1.msra.mxu0 0.0
    %3064 = vmatprep.subr.mxu0 0.0
    %3065 = vmatpush1.msra.mxu0 0.0
    %3066 = vmatprep.subr.mxu0 0.0
    %3067 = vmatpush1.msra.mxu0 0.0
    %3068 = vmatprep.subr.mxu0 0.0
    %3069 = vmatpush1.msra.mxu0 0.0
    %3070 = vmatprep.subr.mxu0 0.0
    %3071 = vmatpush1.msra.mxu0 0.0
    %3072 = vmatprep.subr.mxu0 0.0
    %3073 = vmatpush1.msra.mxu0 0.0
    %3074 = vmatprep.subr.mxu0 0.0
    %3075 = vmatpush1.msra.mxu0 0.0
    %3076 = vmatprep.subr.mxu0 0.0
    %3077 = vmatpush1.msra.mxu0 0.0
    %3078 = vmatprep.subr.mxu0 0.0
    %3079 = vmatpush1.msra.mxu0 0.0
    %3080 = vmatprep.subr.mxu0 0.0
    %3081 = vmatpush1.msra.mxu0 0.0
    %3082 = vmatprep.subr.mxu0 0.0
    %3083 = vmatpush1.msra.mxu0 0.0
    %3084 = vmatprep.subr.mxu0 0.0
    %3085 = vmatpush1.msra.mxu0 0.0
    %3086 = vmatprep.subr.mxu0 0.0
    %3087 = vmatpush1.msra.mxu0 0.0
    %3088 = vmatprep.subr.mxu0 0.0
    %3089 = vmatpush1.msra.mxu0 0.0
    %3090 = vmatprep.subr.mxu0 0.0
    %3091 = vmatpush1.msra.mxu0 0.0
    %3092 = vmatprep.subr.mxu0 0.0
    %3093 = vmatpush1.msra.mxu0 0.0
    %3094 = vmatprep.subr.mxu0 0.0
    %3095 = vmatpush1.msra.mxu0 0.0
    %3096 = vmatprep.subr.mxu0 0.0
    %3097 = vmatpush1.msra.mxu0 0.0
    %3098 = vmatprep.subr.mxu0 0.0
    %3099 = vmatpush1.msra.mxu0 0.0
    %3100 = vmatprep.subr.mxu0 0.0
    %3101 = vmatpush1.msra.mxu0 0.0
    %3102 = vmatprep.subr.mxu0 0.0
    %3103 = vmatpush1.msra.mxu0 0.0
    %3104 = vmatprep.subr.mxu0 0.0
    %3105 = vmatpush1.msra.mxu0 0.0
    %3106 = vmatprep.subr.mxu0 0.0
    %3107 = vmatpush1.msra.mxu0 0.0
    %3108 = vmatprep.subr.mxu0 0.0
    %3109 = vmatpush1.msra.mxu0 0.0
    %3110 = vmatprep.subr.mxu0 0.0
    %3111 = vmatpush1.msra.mxu0 0.0
    %3112 = vmatprep.subr.mxu0 0.0
    %3113 = vmatpush1.msra.mxu0 0.0
    %3114 = vmatprep.subr.mxu0 0.0
    %3115 = vmatpush1.msra.mxu0 0.0
    %3116 = vmatprep.mubr.f32.mxu0 0.0
    %3117 = vmatmul.mubr.f32.gmra.mrb[0].mxu0 %v3050
    %v3118 = vpop.f32.mrb[0].mxu0
    %v3119 = vadd.f32 %v3045, %v3118
    %v3120 = vpop.f32.mrb[0].mxu0
    %v3121 = vadd.f32 %v3047, %v3120
    %3122 = vdwg.mxu0
    %v3123 = vxor.u32 %v3119, 2147483648
    %v3124 = vxor.u32 %v3121, 2147483648
    %v3125 = vmul.f32 %v3123, 1.442695
    %v3126 = vpow.pop %v3125
    %v3127 = vmul.f32 %v3124, 1.442695
    %v3128 = vpow.pop %v3127
    %v3129 = vadd.f32 %v3126, 1.0
    %v3130 = vadd.f32 %v3128, 1.0
    %v3131 = vrcp.pop %v3129
    %v3132 = vmul.f32 1.0, %v3131
    %v3133 = vrcp.pop %v3130
    %v3134 = vmul.f32 1.0, %v3133
    %v3135 = vtanh.pop %v3121
    %v3136 = vmul.f32 %v3132, %v2763
    %3138 = vrot.lane.b32.xlu0 %v3135, 64
    %v3139 = vpop.permute.xlu0 %3138
    %v3141 = vmul.f32 %v3132, %v3139
    %3143 = vrot.lane.b32.xlu0 %v3141, 64
    %v3144 = vpop.permute.xlu0 %3143
    %v3146 = vadd.f32 %v3136, %v3144
    %v3147 = vtanh.pop %v3146
    %3149 = vrot.lane.b32.xlu0 %v3147, 64
    %v3150 = vpop.permute.xlu0 %3149
    %v3152 = vmul.f32 %v3134, %v3150
    %s3153 = scalar_lea.vmem %s5, 40
    %v3154 = vld [vmem:[%s3153] sm:$0xff]
    %v3156 = vsel %vm1135, %v3152, 0
    %3158 = vmatprep.subr.mxu0 0.0
    %3159 = vmatpush1.msra.mxu0 %v74
    %3160 = vmatprep.subr.mxu0 0.0
    %3161 = vmatpush1.msra.mxu0 %v75
    %3162 = vmatprep.subr.mxu0 0.0
    %3163 = vmatpush1.msra.mxu0 %v76
    %3164 = vmatprep.subr.mxu0 0.0
    %3165 = vmatpush1.msra.mxu0 %v77
    %3166 = vmatprep.subr.mxu0 0.0
    %3167 = vmatpush1.msra.mxu0 %v78
    %3168 = vmatprep.subr.mxu0 0.0
    %3169 = vmatpush1.msra.mxu0 %v79
    %3170 = vmatprep.subr.mxu0 0.0
    %3171 = vmatpush1.msra.mxu0 %v80
    %3172 = vmatprep.subr.mxu0 0.0
    %3173 = vmatpush1.msra.mxu0 %v81
    %3174 = vmatprep.subr.mxu0 0.0
    %3175 = vmatpush1.msra.mxu0 0.0
    %3176 = vmatprep.subr.mxu0 0.0
    %3177 = vmatpush1.msra.mxu0 0.0
    %3178 = vmatprep.subr.mxu0 0.0
    %3179 = vmatpush1.msra.mxu0 0.0
    %3180 = vmatprep.subr.mxu0 0.0
    %3181 = vmatpush1.msra.mxu0 0.0
    %3182 = vmatprep.subr.mxu0 0.0
    %3183 = vmatpush1.msra.mxu0 0.0
    %3184 = vmatprep.subr.mxu0 0.0
    %3185 = vmatpush1.msra.mxu0 0.0
    %3186 = vmatprep.subr.mxu0 0.0
    %3187 = vmatpush1.msra.mxu0 0.0
    %3188 = vmatprep.subr.mxu0 0.0
    %3189 = vmatpush1.msra.mxu0 0.0
    %3190 = vmatprep.subr.mxu0 0.0
    %3191 = vmatpush1.msra.mxu0 0.0
    %3192 = vmatprep.subr.mxu0 0.0
    %3193 = vmatpush1.msra.mxu0 0.0
    %3194 = vmatprep.subr.mxu0 0.0
    %3195 = vmatpush1.msra.mxu0 0.0
    %3196 = vmatprep.subr.mxu0 0.0
    %3197 = vmatpush1.msra.mxu0 0.0
    %3198 = vmatprep.subr.mxu0 0.0
    %3199 = vmatpush1.msra.mxu0 0.0
    %3200 = vmatprep.subr.mxu0 0.0
    %3201 = vmatpush1.msra.mxu0 0.0
    %3202 = vmatprep.subr.mxu0 0.0
    %3203 = vmatpush1.msra.mxu0 0.0
    %3204 = vmatprep.subr.mxu0 0.0
    %3205 = vmatpush1.msra.mxu0 0.0
    %3206 = vmatprep.subr.mxu0 0.0
    %3207 = vmatpush1.msra.mxu0 0.0
    %3208 = vmatprep.subr.mxu0 0.0
    %3209 = vmatpush1.msra.mxu0 0.0
    %3210 = vmatprep.subr.mxu0 0.0
    %3211 = vmatpush1.msra.mxu0 0.0
    %3212 = vmatprep.subr.mxu0 0.0
    %3213 = vmatpush1.msra.mxu0 0.0
    %3214 = vmatprep.subr.mxu0 0.0
    %3215 = vmatpush1.msra.mxu0 0.0
    %3216 = vmatprep.subr.mxu0 0.0
    %3217 = vmatpush1.msra.mxu0 0.0
    %3218 = vmatprep.subr.mxu0 0.0
    %3219 = vmatpush1.msra.mxu0 0.0
    %3220 = vmatprep.subr.mxu0 0.0
    %3221 = vmatpush1.msra.mxu0 0.0
    %3222 = vmatprep.mubr.f32.mxu0 0.0
    %3223 = vmatmul.mubr.f32.gmra.mrb[0].mxu0 %v3156
    %v3224 = vpop.f32.mrb[0].mxu0
    %v3225 = vadd.f32 0.0, %v3224
    %v3226 = vpop.f32.mrb[0].mxu0
    %3227 = vdwg.mxu0
    %v3228 = vadd.f32 %v3154, %v3225
    %v3229 = vtanh.pop %v3228
    %v3231 = vsel %vm1135, %v3229, 0
    %3233 = vmatprep.subr.mxu0 0.0
    %3234 = vmatpush1.msra.mxu0 %v82
    %3235 = vmatprep.subr.mxu0 0.0
    %3236 = vmatpush1.msra.mxu0 %v83
    %3237 = vmatprep.subr.mxu0 0.0
    %3238 = vmatpush1.msra.mxu0 %v84
    %3239 = vmatprep.subr.mxu0 0.0
    %3240 = vmatpush1.msra.mxu0 %v85
    %3241 = vmatprep.subr.mxu0 0.0
    %3242 = vmatpush1.msra.mxu0 %v86
    %3243 = vmatprep.subr.mxu0 0.0
    %3244 = vmatpush1.msra.mxu0 %v87
    %3245 = vmatprep.subr.mxu0 0.0
    %3246 = vmatpush1.msra.mxu0 %v88
    %3247 = vmatprep.subr.mxu0 0.0
    %3248 = vmatpush1.msra.mxu0 %v89
    %3249 = vmatprep.subr.mxu0 0.0
    %3250 = vmatpush1.msra.mxu0 0.0
    %3251 = vmatprep.subr.mxu0 0.0
    %3252 = vmatpush1.msra.mxu0 0.0
    %3253 = vmatprep.subr.mxu0 0.0
    %3254 = vmatpush1.msra.mxu0 0.0
    %3255 = vmatprep.subr.mxu0 0.0
    %3256 = vmatpush1.msra.mxu0 0.0
    %3257 = vmatprep.subr.mxu0 0.0
    %3258 = vmatpush1.msra.mxu0 0.0
    %3259 = vmatprep.subr.mxu0 0.0
    %3260 = vmatpush1.msra.mxu0 0.0
    %3261 = vmatprep.subr.mxu0 0.0
    %3262 = vmatpush1.msra.mxu0 0.0
    %3263 = vmatprep.subr.mxu0 0.0
    %3264 = vmatpush1.msra.mxu0 0.0
    %3265 = vmatprep.subr.mxu0 0.0
    %3266 = vmatpush1.msra.mxu0 0.0
    %3267 = vmatprep.subr.mxu0 0.0
    %3268 = vmatpush1.msra.mxu0 0.0
    %3269 = vmatprep.subr.mxu0 0.0
    %3270 = vmatpush1.msra.mxu0 0.0
    %3271 = vmatprep.subr.mxu0 0.0
    %3272 = vmatpush1.msra.mxu0 0.0
    %3273 = vmatprep.subr.mxu0 0.0
    %3274 = vmatpush1.msra.mxu0 0.0
    %3275 = vmatprep.subr.mxu0 0.0
    %3276 = vmatpush1.msra.mxu0 0.0
    %3277 = vmatprep.subr.mxu0 0.0
    %3278 = vmatpush1.msra.mxu0 0.0
    %3279 = vmatprep.subr.mxu0 0.0
    %3280 = vmatpush1.msra.mxu0 0.0
    %3281 = vmatprep.subr.mxu0 0.0
    %3282 = vmatpush1.msra.mxu0 0.0
    %3283 = vmatprep.subr.mxu0 0.0
    %3284 = vmatpush1.msra.mxu0 0.0
    %3285 = vmatprep.subr.mxu0 0.0
    %3286 = vmatpush1.msra.mxu0 0.0
    %3287 = vmatprep.subr.mxu0 0.0
    %3288 = vmatpush1.msra.mxu0 0.0
    %3289 = vmatprep.subr.mxu0 0.0
    %3290 = vmatpush1.msra.mxu0 0.0
    %3291 = vmatprep.subr.mxu0 0.0
    %3292 = vmatpush1.msra.mxu0 0.0
    %3293 = vmatprep.subr.mxu0 0.0
    %3294 = vmatpush1.msra.mxu0 0.0
    %3295 = vmatprep.subr.mxu0 0.0
    %3296 = vmatpush1.msra.mxu0 0.0
    %3297 = vmatprep.mubr.f32.mxu0 0.0
    %3298 = vmatmul.mubr.f32.gmra.mrb[0].mxu0 %v3231
    %v3299 = vpop.f32.mrb[0].mxu0
    %v3300 = vadd.f32 0.0, %v3299
    %v3301 = vpop.f32.mrb[0].mxu0
    %3302 = vdwg.mxu0
    %v3303 = vsel %vm1395, %v3300, -inf
    %3304 = vmax.xlane.f32.xlu0 %v3303
    %v3305 = vpop.xlane.xlu0 %3304
    %v3306 = vsub.f32 %v3300, %v3305
    %v3307 = vmul.f32 %v3306, 1.442695
    %v3308 = vpow.pop %v3307
    %v3309 = vsel %vm1395, %v3308, 0.0
    %3310 = vadd.xlane.f32.xlu0 %v3309
    %v3311 = vpop.xlane.xlu0 %3310
    %v3312 = vrcp.pop %v3311
    %v3313 = vmul.f32 %v3308, %v3312
    %3315 = vrot.lane.b32.xlu0 %v3313, 10
    %v3316 = vpop.permute.xlu0 %3315
    %vm3318 = vcmask 97360
    %3319 = vst.msk [vmem:[%s11] sm:$0xff] %vm3318, %v3316
    %s3320 = scalar_lea.vmem %s8, 40
    %v3321 = vld [vmem:[%s3320] sm:$0xff]
    %v3322 = vadd.f32 %v3300, %v3321
    %v3323 = vsel %vm1395, %v3322, -inf
    %3324 = vmax.xlane.f32.xlu0 %v3323
    %v3325 = vpop.xlane.xlu0 %3324
    %vm3326 = vcmp.ge.f32.partialorder %v3322, %v3325
    %v3327 = vsel %vm3326, %v1122, 2
    %v3328 = vsel %vm1395, %v3327, 2147483647
    %v3329 = vand.u32 %v3328, 65535
    %v3330 = vshra.s32 %v3328, 16
    %v3331 = vcvt.s32.f32 %v3329
    %v3332 = vcvt.s32.f32 %v3330
    %3333 = vmin.xlane.f32.xlu0 %v3332
    %v3334 = vpop.xlane.xlu0 %3333
    %vm3335 = vcmp.eq.f32.partialorder %v3332, %v3334
    %v3336 = vsel %vm3335, %v3331, inf
    %3337 = vmin.xlane.f32.xlu0 %v3336
    %v3338 = vpop.xlane.xlu0 %3337
    %v3339 = vcvt.f32.s32 %v3338
    %v3340 = vcvt.f32.s32 %v3334
    %v3341 = vshll.u32 %v3340, 16
    %v3342 = vadd.s32 %v3341, %v3339
    %s3343 = sld [smem:[#allocation2 + $0x5]]
    %p3344 = scmp.gt.s32.totalorder %s3343, 0
    %s3345 = scalar_lea.vmem %s9, 40
    %v3346 = vld [vmem:[%s3345] sm:$0xff]
    %s3347 = scalar_select %p3344, 1, 0
    %v3348 = vstv %s3347
    %vm3349 = vcmp.eq.s32.totalorder %v3348, 1
    %v3350 = vsel %vm3349, %v3346, %v3342
    %3351 = vrot.lane.b32.xlu0 %v3350, 5
    %v3352 = vpop.permute.xlu0 %3351
    %vm3353 = vcmask 48168
    %3354 = vst.msk [vmem:[#allocation5] sm:$0xff] %vm3353, %v3352
    %3355 = vset.pattern.permute.xlu0 0
    %3356 = vperm.xlu0 %3355, %v3350
    %v3357 = vpop.permute.xlu0 %3356
    %vm3358 = vcmp.eq.s32.totalorder %v1122, %v3357
    %v3359 = vsel %vm3358, 1, 0
    %v3360 = vcvt.s32.f32 %v3359
    %3361 = vmatprep.subr.mxu0 %v59
    %3362 = vmatpush1.msra.mxu0 %v58
    %3363 = vmatprep.subr.mxu0 %v61
    %3364 = vmatpush1.msra.mxu0 %v60
    %3365 = vmatprep.subr.mxu0 %v63
    %3366 = vmatpush1.msra.mxu0 %v62
    %3367 = vmatprep.subr.mxu0 %v65
    %3368 = vmatpush1.msra.mxu0 %v64
    %3369 = vmatprep.subr.mxu0 %v67
    %3370 = vmatpush1.msra.mxu0 %v66
    %3371 = vmatprep.subr.mxu0 %v69
    %3372 = vmatpush1.msra.mxu0 %v68
    %3373 = vmatprep.subr.mxu0 %v71
    %3374 = vmatpush1.msra.mxu0 %v70
    %3375 = vmatprep.subr.mxu0 %v73
    %3376 = vmatpush1.msra.mxu0 %v72
    %3377 = vmatprep.subr.mxu0 0.0
    %3378 = vmatpush1.msra.mxu0 0.0
    %3379 = vmatprep.subr.mxu0 0.0
    %3380 = vmatpush1.msra.mxu0 0.0
    %3381 = vmatprep.subr.mxu0 0.0
    %3382 = vmatpush1.msra.mxu0 0.0
    %3383 = vmatprep.subr.mxu0 0.0
    %3384 = vmatpush1.msra.mxu0 0.0
    %3385 = vmatprep.subr.mxu0 0.0
    %3386 = vmatpush1.msra.mxu0 0.0
    %3387 = vmatprep.subr.mxu0 0.0
    %3388 = vmatpush1.msra.mxu0 0.0
    %3389 = vmatprep.subr.mxu0 0.0
    %3390 = vmatpush1.msra.mxu0 0.0
    %3391 = vmatprep.subr.mxu0 0.0
    %3392 = vmatpush1.msra.mxu0 0.0
    %3393 = vmatprep.subr.mxu0 0.0
    %3394 = vmatpush1.msra.mxu0 0.0
    %3395 = vmatprep.subr.mxu0 0.0
    %3396 = vmatpush1.msra.mxu0 0.0
    %3397 = vmatprep.subr.mxu0 0.0
    %3398 = vmatpush1.msra.mxu0 0.0
    %3399 = vmatprep.subr.mxu0 0.0
    %3400 = vmatpush1.msra.mxu0 0.0
    %3401 = vmatprep.subr.mxu0 0.0
    %3402 = vmatpush1.msra.mxu0 0.0
    %3403 = vmatprep.subr.mxu0 0.0
    %3404 = vmatpush1.msra.mxu0 0.0
    %3405 = vmatprep.subr.mxu0 0.0
    %3406 = vmatpush1.msra.mxu0 0.0
    %3407 = vmatprep.subr.mxu0 0.0
    %3408 = vmatpush1.msra.mxu0 0.0
    %3409 = vmatprep.subr.mxu0 0.0
    %3410 = vmatpush1.msra.mxu0 0.0
    %3411 = vmatprep.subr.mxu0 0.0
    %3412 = vmatpush1.msra.mxu0 0.0
    %3413 = vmatprep.subr.mxu0 0.0
    %3414 = vmatpush1.msra.mxu0 0.0
    %3415 = vmatprep.subr.mxu0 0.0
    %3416 = vmatpush1.msra.mxu0 0.0
    %3417 = vmatprep.subr.mxu0 0.0
    %3418 = vmatpush1.msra.mxu0 0.0
    %3419 = vmatprep.subr.mxu0 0.0
    %3420 = vmatpush1.msra.mxu0 0.0
    %3421 = vmatprep.subr.mxu0 0.0
    %3422 = vmatpush1.msra.mxu0 0.0
    %3423 = vmatprep.subr.mxu0 0.0
    %3424 = vmatpush1.msra.mxu0 0.0
    %3425 = vmatprep.mubr.f32.mxu0 0.0
    %3426 = vmatmul.mubr.f32.gmra.mrb[0].mxu0 %v3156
    %v3427 = vpop.f32.mrb[0].mxu0
    %v3428 = vadd.f32 0.0, %v3427
    %v3429 = vpop.f32.mrb[0].mxu0
    %v3430 = vadd.f32 0.0, %v3429
    %3431 = vdwg.mxu0
    %v3433 = vsel %vm1516, %v3360, 0
    %3435 = vmatprep.subr.mxu0 %v91
    %3436 = vmatpush1.msra.mxu0 %v90
    %3437 = vmatprep.subr.mxu0 %v93
    %3438 = vmatpush1.msra.mxu0 %v92
    %3439 = vmatprep.subr.mxu0 0.0
    %3440 = vmatpush1.msra.mxu0 0.0
    %3441 = vmatprep.subr.mxu0 0.0
    %3442 = vmatpush1.msra.mxu0 0.0
    %3443 = vmatprep.subr.mxu0 0.0
    %3444 = vmatpush1.msra.mxu0 0.0
    %3445 = vmatprep.subr.mxu0 0.0
    %3446 = vmatpush1.msra.mxu0 0.0
    %3447 = vmatprep.subr.mxu0 0.0
    %3448 = vmatpush1.msra.mxu0 0.0
    %3449 = vmatprep.subr.mxu0 0.0
    %3450 = vmatpush1.msra.mxu0 0.0
    %3451 = vmatprep.subr.mxu0 0.0
    %3452 = vmatpush1.msra.mxu0 0.0
    %3453 = vmatprep.subr.mxu0 0.0
    %3454 = vmatpush1.msra.mxu0 0.0
    %3455 = vmatprep.subr.mxu0 0.0
    %3456 = vmatpush1.msra.mxu0 0.0
    %3457 = vmatprep.subr.mxu0 0.0
    %3458 = vmatpush1.msra.mxu0 0.0
    %3459 = vmatprep.subr.mxu0 0.0
    %3460 = vmatpush1.msra.mxu0 0.0
    %3461 = vmatprep.subr.mxu0 0.0
    %3462 = vmatpush1.msra.mxu0 0.0
    %3463 = vmatprep.subr.mxu0 0.0
    %3464 = vmatpush1.msra.mxu0 0.0
    %3465 = vmatprep.subr.mxu0 0.0
    %3466 = vmatpush1.msra.mxu0 0.0
    %3467 = vmatprep.subr.mxu0 0.0
    %3468 = vmatpush1.msra.mxu0 0.0
    %3469 = vmatprep.subr.mxu0 0.0
    %3470 = vmatpush1.msra.mxu0 0.0
    %3471 = vmatprep.subr.mxu0 0.0
    %3472 = vmatpush1.msra.mxu0 0.0
    %3473 = vmatprep.subr.mxu0 0.0
    %3474 = vmatpush1.msra.mxu0 0.0
    %3475 = vmatprep.subr.mxu0 0.0
    %3476 = vmatpush1.msra.mxu0 0.0
    %3477 = vmatprep.subr.mxu0 0.0
    %3478 = vmatpush1.msra.mxu0 0.0
    %3479 = vmatprep.subr.mxu0 0.0
    %3480 = vmatpush1.msra.mxu0 0.0
    %3481 = vmatprep.subr.mxu0 0.0
    %3482 = vmatpush1.msra.mxu0 0.0
    %3483 = vmatprep.subr.mxu0 0.0
    %3484 = vmatpush1.msra.mxu0 0.0
    %3485 = vmatprep.subr.mxu0 0.0
    %3486 = vmatpush1.msra.mxu0 0.0
    %3487 = vmatprep.subr.mxu0 0.0
    %3488 = vmatpush1.msra.mxu0 0.0
    %3489 = vmatprep.subr.mxu0 0.0
    %3490 = vmatpush1.msra.mxu0 0.0
    %3491 = vmatprep.subr.mxu0 0.0
    %3492 = vmatpush1.msra.mxu0 0.0
    %3493 = vmatprep.subr.mxu0 0.0
    %3494 = vmatpush1.msra.mxu0 0.0
    %3495 = vmatprep.subr.mxu0 0.0
    %3496 = vmatpush1.msra.mxu0 0.0
    %3497 = vmatprep.subr.mxu0 0.0
    %3498 = vmatpush1.msra.mxu0 0.0
    %3499 = vmatprep.mubr.f32.mxu0 0.0
    %3500 = vmatmul.mubr.f32.gmra.mrb[0].mxu0 %v3433
    %v3501 = vpop.f32.mrb[0].mxu0
    %v3502 = vadd.f32 %v3428, %v3501
    %v3503 = vpop.f32.mrb[0].mxu0
    %v3504 = vadd.f32 %v3430, %v3503
    %3505 = vdwg.mxu0
    %v3506 = vxor.u32 %v3502, 2147483648
    %v3507 = vxor.u32 %v3504, 2147483648
    %v3508 = vmul.f32 %v3506, 1.442695
    %v3509 = vpow.pop %v3508
    %v3510 = vmul.f32 %v3507, 1.442695
    %v3511 = vpow.pop %v3510
    %v3512 = vadd.f32 %v3509, 1.0
    %v3513 = vadd.f32 %v3511, 1.0
    %v3514 = vrcp.pop %v3512
    %v3515 = vmul.f32 1.0, %v3514
    %v3516 = vrcp.pop %v3513
    %v3517 = vmul.f32 1.0, %v3516
    %v3518 = vtanh.pop %v3504
    %v3519 = vmul.f32 %v3515, %v3146
    %3521 = vrot.lane.b32.xlu0 %v3518, 64
    %v3522 = vpop.permute.xlu0 %3521
    %v3524 = vmul.f32 %v3515, %v3522
    %3526 = vrot.lane.b32.xlu0 %v3524, 64
    %v3527 = vpop.permute.xlu0 %3526
    %v3529 = vadd.f32 %v3519, %v3527
    %v3530 = vtanh.pop %v3529
    %3532 = vrot.lane.b32.xlu0 %v3530, 64
    %v3533 = vpop.permute.xlu0 %3532
    %v3535 = vmul.f32 %v3517, %v3533
    %s3536 = scalar_lea.vmem %s5, 48
    %v3537 = vld [vmem:[%s3536] sm:$0xff]
    %v3539 = vsel %vm1135, %v3535, 0
    %3541 = vmatprep.subr.mxu0 0.0
    %3542 = vmatpush1.msra.mxu0 %v74
    %3543 = vmatprep.subr.mxu0 0.0
    %3544 = vmatpush1.msra.mxu0 %v75
    %3545 = vmatprep.subr.mxu0 0.0
    %3546 = vmatpush1.msra.mxu0 %v76
    %3547 = vmatprep.subr.mxu0 0.0
    %3548 = vmatpush1.msra.mxu0 %v77
    %3549 = vmatprep.subr.mxu0 0.0
    %3550 = vmatpush1.msra.mxu0 %v78
    %3551 = vmatprep.subr.mxu0 0.0
    %3552 = vmatpush1.msra.mxu0 %v79
    %3553 = vmatprep.subr.mxu0 0.0
    %3554 = vmatpush1.msra.mxu0 %v80
    %3555 = vmatprep.subr.mxu0 0.0
    %3556 = vmatpush1.msra.mxu0 %v81
    %3557 = vmatprep.subr.mxu0 0.0
    %3558 = vmatpush1.msra.mxu0 0.0
    %3559 = vmatprep.subr.mxu0 0.0
    %3560 = vmatpush1.msra.mxu0 0.0
    %3561 = vmatprep.subr.mxu0 0.0
    %3562 = vmatpush1.msra.mxu0 0.0
    %3563 = vmatprep.subr.mxu0 0.0
    %3564 = vmatpush1.msra.mxu0 0.0
    %3565 = vmatprep.subr.mxu0 0.0
    %3566 = vmatpush1.msra.mxu0 0.0
    %3567 = vmatprep.subr.mxu0 0.0
    %3568 = vmatpush1.msra.mxu0 0.0
    %3569 = vmatprep.subr.mxu0 0.0
    %3570 = vmatpush1.msra.mxu0 0.0
    %3571 = vmatprep.subr.mxu0 0.0
    %3572 = vmatpush1.msra.mxu0 0.0
    %3573 = vmatprep.subr.mxu0 0.0
    %3574 = vmatpush1.msra.mxu0 0.0
    %3575 = vmatprep.subr.mxu0 0.0
    %3576 = vmatpush1.msra.mxu0 0.0
    %3577 = vmatprep.subr.mxu0 0.0
    %3578 = vmatpush1.msra.mxu0 0.0
    %3579 = vmatprep.subr.mxu0 0.0
    %3580 = vmatpush1.msra.mxu0 0.0
    %3581 = vmatprep.subr.mxu0 0.0
    %3582 = vmatpush1.msra.mxu0 0.0
    %3583 = vmatprep.subr.mxu0 0.0
    %3584 = vmatpush1.msra.mxu0 0.0
    %3585 = vmatprep.subr.mxu0 0.0
    %3586 = vmatpush1.msra.mxu0 0.0
    %3587 = vmatprep.subr.mxu0 0.0
    %3588 = vmatpush1.msra.mxu0 0.0
    %3589 = vmatprep.subr.mxu0 0.0
    %3590 = vmatpush1.msra.mxu0 0.0
    %3591 = vmatprep.subr.mxu0 0.0
    %3592 = vmatpush1.msra.mxu0 0.0
    %3593 = vmatprep.subr.mxu0 0.0
    %3594 = vmatpush1.msra.mxu0 0.0
    %3595 = vmatprep.subr.mxu0 0.0
    %3596 = vmatpush1.msra.mxu0 0.0
    %3597 = vmatprep.subr.mxu0 0.0
    %3598 = vmatpush1.msra.mxu0 0.0
    %3599 = vmatprep.subr.mxu0 0.0
    %3600 = vmatpush1.msra.mxu0 0.0
    %3601 = vmatprep.subr.mxu0 0.0
    %3602 = vmatpush1.msra.mxu0 0.0
    %3603 = vmatprep.subr.mxu0 0.0
    %3604 = vmatpush1.msra.mxu0 0.0
    %3605 = vmatprep.mubr.f32.mxu0 0.0
    %3606 = vmatmul.mubr.f32.gmra.mrb[0].mxu0 %v3539
    %v3607 = vpop.f32.mrb[0].mxu0
    %v3608 = vadd.f32 0.0, %v3607
    %v3609 = vpop.f32.mrb[0].mxu0
    %3610 = vdwg.mxu0
    %v3611 = vadd.f32 %v3537, %v3608
    %v3612 = vtanh.pop %v3611
    %v3614 = vsel %vm1135, %v3612, 0
    %3616 = vmatprep.subr.mxu0 0.0
    %3617 = vmatpush1.msra.mxu0 %v82
    %3618 = vmatprep.subr.mxu0 0.0
    %3619 = vmatpush1.msra.mxu0 %v83
    %3620 = vmatprep.subr.mxu0 0.0
    %3621 = vmatpush1.msra.mxu0 %v84
    %3622 = vmatprep.subr.mxu0 0.0
    %3623 = vmatpush1.msra.mxu0 %v85
    %3624 = vmatprep.subr.mxu0 0.0
    %3625 = vmatpush1.msra.mxu0 %v86
    %3626 = vmatprep.subr.mxu0 0.0
    %3627 = vmatpush1.msra.mxu0 %v87
    %3628 = vmatprep.subr.mxu0 0.0
    %3629 = vmatpush1.msra.mxu0 %v88
    %3630 = vmatprep.subr.mxu0 0.0
    %3631 = vmatpush1.msra.mxu0 %v89
    %3632 = vmatprep.subr.mxu0 0.0
    %3633 = vmatpush1.msra.mxu0 0.0
    %3634 = vmatprep.subr.mxu0 0.0
    %3635 = vmatpush1.msra.mxu0 0.0
    %3636 = vmatprep.subr.mxu0 0.0
    %3637 = vmatpush1.msra.mxu0 0.0
    %3638 = vmatprep.subr.mxu0 0.0
    %3639 = vmatpush1.msra.mxu0 0.0
    %3640 = vmatprep.subr.mxu0 0.0
    %3641 = vmatpush1.msra.mxu0 0.0
    %3642 = vmatprep.subr.mxu0 0.0
    %3643 = vmatpush1.msra.mxu0 0.0
    %3644 = vmatprep.subr.mxu0 0.0
    %3645 = vmatpush1.msra.mxu0 0.0
    %3646 = vmatprep.subr.mxu0 0.0
    %3647 = vmatpush1.msra.mxu0 0.0
    %3648 = vmatprep.subr.mxu0 0.0
    %3649 = vmatpush1.msra.mxu0 0.0
    %3650 = vmatprep.subr.mxu0 0.0
    %3651 = vmatpush1.msra.mxu0 0.0
    %3652 = vmatprep.subr.mxu0 0.0
    %3653 = vmatpush1.msra.mxu0 0.0
    %3654 = vmatprep.subr.mxu0 0.0
    %3655 = vmatpush1.msra.mxu0 0.0
    %3656 = vmatprep.subr.mxu0 0.0
    %3657 = vmatpush1.msra.mxu0 0.0
    %3658 = vmatprep.subr.mxu0 0.0
    %3659 = vmatpush1.msra.mxu0 0.0
    %3660 = vmatprep.subr.mxu0 0.0
    %3661 = vmatpush1.msra.mxu0 0.0
    %3662 = vmatprep.subr.mxu0 0.0
    %3663 = vmatpush1.msra.mxu0 0.0
    %3664 = vmatprep.subr.mxu0 0.0
    %3665 = vmatpush1.msra.mxu0 0.0
    %3666 = vmatprep.subr.mxu0 0.0
    %3667 = vmatpush1.msra.mxu0 0.0
    %3668 = vmatprep.subr.mxu0 0.0
    %3669 = vmatpush1.msra.mxu0 0.0
    %3670 = vmatprep.subr.mxu0 0.0
    %3671 = vmatpush1.msra.mxu0 0.0
    %3672 = vmatprep.subr.mxu0 0.0
    %3673 = vmatpush1.msra.mxu0 0.0
    %3674 = vmatprep.subr.mxu0 0.0
    %3675 = vmatpush1.msra.mxu0 0.0
    %3676 = vmatprep.subr.mxu0 0.0
    %3677 = vmatpush1.msra.mxu0 0.0
    %3678 = vmatprep.subr.mxu0 0.0
    %3679 = vmatpush1.msra.mxu0 0.0
    %3680 = vmatprep.mubr.f32.mxu0 0.0
    %3681 = vmatmul.mubr.f32.gmra.mrb[0].mxu0 %v3614
    %v3682 = vpop.f32.mrb[0].mxu0
    %v3683 = vadd.f32 0.0, %v3682
    %v3684 = vpop.f32.mrb[0].mxu0
    %3685 = vdwg.mxu0
    %v3686 = vsel %vm1395, %v3683, -inf
    %3687 = vmax.xlane.f32.xlu0 %v3686
    %v3688 = vpop.xlane.xlu0 %3687
    %v3689 = vsub.f32 %v3683, %v3688
    %v3690 = vmul.f32 %v3689, 1.442695
    %v3691 = vpow.pop %v3690
    %v3692 = vsel %vm1395, %v3691, 0.0
    %3693 = vadd.xlane.f32.xlu0 %v3692
    %v3694 = vpop.xlane.xlu0 %3693
    %v3695 = vrcp.pop %v3694
    %v3696 = vmul.f32 %v3691, %v3695
    %3698 = vrot.lane.b32.xlu0 %v3696, 12
    %v3699 = vpop.permute.xlu0 %3698
    %vm3701 = vcmask 113760
    %3702 = vst.msk [vmem:[%s11] sm:$0xff] %vm3701, %v3699
    %s3703 = scalar_lea.vmem %s8, 48
    %v3704 = vld [vmem:[%s3703] sm:$0xff]
    %v3705 = vadd.f32 %v3683, %v3704
    %v3706 = vsel %vm1395, %v3705, -inf
    %3707 = vmax.xlane.f32.xlu0 %v3706
    %v3708 = vpop.xlane.xlu0 %3707
    %vm3709 = vcmp.ge.f32.partialorder %v3705, %v3708
    %v3710 = vsel %vm3709, %v1122, 2
    %v3711 = vsel %vm1395, %v3710, 2147483647
    %v3712 = vand.u32 %v3711, 65535
    %v3713 = vshra.s32 %v3711, 16
    %v3714 = vcvt.s32.f32 %v3712
    %v3715 = vcvt.s32.f32 %v3713
    %3716 = vmin.xlane.f32.xlu0 %v3715
    %v3717 = vpop.xlane.xlu0 %3716
    %vm3718 = vcmp.eq.f32.partialorder %v3715, %v3717
    %v3719 = vsel %vm3718, %v3714, inf
    %3720 = vmin.xlane.f32.xlu0 %v3719
    %v3721 = vpop.xlane.xlu0 %3720
    %v3722 = vcvt.f32.s32 %v3721
    %v3723 = vcvt.f32.s32 %v3717
    %v3724 = vshll.u32 %v3723, 16
    %v3725 = vadd.s32 %v3724, %v3722
    %s3726 = sld [smem:[#allocation2 + $0x6]]
    %p3727 = scmp.gt.s32.totalorder %s3726, 0
    %s3728 = scalar_lea.vmem %s9, 48
    %v3729 = vld [vmem:[%s3728] sm:$0xff]
    %s3730 = scalar_select %p3727, 1, 0
    %v3731 = vstv %s3730
    %vm3732 = vcmp.eq.s32.totalorder %v3731, 1
    %v3733 = vsel %vm3732, %v3729, %v3725
    %3734 = vrot.lane.b32.xlu0 %v3733, 6
    %v3735 = vpop.permute.xlu0 %3734
    %vm3736 = vcmask 56368
    %3737 = vst.msk [vmem:[#allocation5] sm:$0xff] %vm3736, %v3735
    %3738 = vset.pattern.permute.xlu0 0
    %3739 = vperm.xlu0 %3738, %v3733
    %v3740 = vpop.permute.xlu0 %3739
    %vm3741 = vcmp.eq.s32.totalorder %v1122, %v3740
    %v3742 = vsel %vm3741, 1, 0
    %v3743 = vcvt.s32.f32 %v3742
    %3744 = vmatprep.subr.mxu0 %v59
    %3745 = vmatpush1.msra.mxu0 %v58
    %3746 = vmatprep.subr.mxu0 %v61
    %3747 = vmatpush1.msra.mxu0 %v60
    %3748 = vmatprep.subr.mxu0 %v63
    %3749 = vmatpush1.msra.mxu0 %v62
    %3750 = vmatprep.subr.mxu0 %v65
    %3751 = vmatpush1.msra.mxu0 %v64
    %3752 = vmatprep.subr.mxu0 %v67
    %3753 = vmatpush1.msra.mxu0 %v66
    %3754 = vmatprep.subr.mxu0 %v69
    %3755 = vmatpush1.msra.mxu0 %v68
    %3756 = vmatprep.subr.mxu0 %v71
    %3757 = vmatpush1.msra.mxu0 %v70
    %3758 = vmatprep.subr.mxu0 %v73
    %3759 = vmatpush1.msra.mxu0 %v72
    %3760 = vmatprep.subr.mxu0 0.0
    %3761 = vmatpush1.msra.mxu0 0.0
    %3762 = vmatprep.subr.mxu0 0.0
    %3763 = vmatpush1.msra.mxu0 0.0
    %3764 = vmatprep.subr.mxu0 0.0
    %3765 = vmatpush1.msra.mxu0 0.0
    %3766 = vmatprep.subr.mxu0 0.0
    %3767 = vmatpush1.msra.mxu0 0.0
    %3768 = vmatprep.subr.mxu0 0.0
    %3769 = vmatpush1.msra.mxu0 0.0
    %3770 = vmatprep.subr.mxu0 0.0
    %3771 = vmatpush1.msra.mxu0 0.0
    %3772 = vmatprep.subr.mxu0 0.0
    %3773 = vmatpush1.msra.mxu0 0.0
    %3774 = vmatprep.subr.mxu0 0.0
    %3775 = vmatpush1.msra.mxu0 0.0
    %3776 = vmatprep.subr.mxu0 0.0
    %3777 = vmatpush1.msra.mxu0 0.0
    %3778 = vmatprep.subr.mxu0 0.0
    %3779 = vmatpush1.msra.mxu0 0.0
    %3780 = vmatprep.subr.mxu0 0.0
    %3781 = vmatpush1.msra.mxu0 0.0
    %3782 = vmatprep.subr.mxu0 0.0
    %3783 = vmatpush1.msra.mxu0 0.0
    %3784 = vmatprep.subr.mxu0 0.0
    %3785 = vmatpush1.msra.mxu0 0.0
    %3786 = vmatprep.subr.mxu0 0.0
    %3787 = vmatpush1.msra.mxu0 0.0
    %3788 = vmatprep.subr.mxu0 0.0
    %3789 = vmatpush1.msra.mxu0 0.0
    %3790 = vmatprep.subr.mxu0 0.0
    %3791 = vmatpush1.msra.mxu0 0.0
    %3792 = vmatprep.subr.mxu0 0.0
    %3793 = vmatpush1.msra.mxu0 0.0
    %3794 = vmatprep.subr.mxu0 0.0
    %3795 = vmatpush1.msra.mxu0 0.0
    %3796 = vmatprep.subr.mxu0 0.0
    %3797 = vmatpush1.msra.mxu0 0.0
    %3798 = vmatprep.subr.mxu0 0.0
    %3799 = vmatpush1.msra.mxu0 0.0
    %3800 = vmatprep.subr.mxu0 0.0
    %3801 = vmatpush1.msra.mxu0 0.0
    %3802 = vmatprep.subr.mxu0 0.0
    %3803 = vmatpush1.msra.mxu0 0.0
    %3804 = vmatprep.subr.mxu0 0.0
    %3805 = vmatpush1.msra.mxu0 0.0
    %3806 = vmatprep.subr.mxu0 0.0
    %3807 = vmatpush1.msra.mxu0 0.0
    %3808 = vmatprep.mubr.f32.mxu0 0.0
    %3809 = vmatmul.mubr.f32.gmra.mrb[0].mxu0 %v3539
    %v3810 = vpop.f32.mrb[0].mxu0
    %v3811 = vadd.f32 0.0, %v3810
    %v3812 = vpop.f32.mrb[0].mxu0
    %v3813 = vadd.f32 0.0, %v3812
    %3814 = vdwg.mxu0
    %v3816 = vsel %vm1516, %v3743, 0
    %3818 = vmatprep.subr.mxu0 %v91
    %3819 = vmatpush1.msra.mxu0 %v90
    %3820 = vmatprep.subr.mxu0 %v93
    %3821 = vmatpush1.msra.mxu0 %v92
    %3822 = vmatprep.subr.mxu0 0.0
    %3823 = vmatpush1.msra.mxu0 0.0
    %3824 = vmatprep.subr.mxu0 0.0
    %3825 = vmatpush1.msra.mxu0 0.0
    %3826 = vmatprep.subr.mxu0 0.0
    %3827 = vmatpush1.msra.mxu0 0.0
    %3828 = vmatprep.subr.mxu0 0.0
    %3829 = vmatpush1.msra.mxu0 0.0
    %3830 = vmatprep.subr.mxu0 0.0
    %3831 = vmatpush1.msra.mxu0 0.0
    %3832 = vmatprep.subr.mxu0 0.0
    %3833 = vmatpush1.msra.mxu0 0.0
    %3834 = vmatprep.subr.mxu0 0.0
    %3835 = vmatpush1.msra.mxu0 0.0
    %3836 = vmatprep.subr.mxu0 0.0
    %3837 = vmatpush1.msra.mxu0 0.0
    %3838 = vmatprep.subr.mxu0 0.0
    %3839 = vmatpush1.msra.mxu0 0.0
    %3840 = vmatprep.subr.mxu0 0.0
    %3841 = vmatpush1.msra.mxu0 0.0
    %3842 = vmatprep.subr.mxu0 0.0
    %3843 = vmatpush1.msra.mxu0 0.0
    %3844 = vmatprep.subr.mxu0 0.0
    %3845 = vmatpush1.msra.mxu0 0.0
    %3846 = vmatprep.subr.mxu0 0.0
    %3847 = vmatpush1.msra.mxu0 0.0
    %3848 = vmatprep.subr.mxu0 0.0
    %3849 = vmatpush1.msra.mxu0 0.0
    %3850 = vmatprep.subr.mxu0 0.0
    %3851 = vmatpush1.msra.mxu0 0.0
    %3852 = vmatprep.subr.mxu0 0.0
    %3853 = vmatpush1.msra.mxu0 0.0
    %3854 = vmatprep.subr.mxu0 0.0
    %3855 = vmatpush1.msra.mxu0 0.0
    %3856 = vmatprep.subr.mxu0 0.0
    %3857 = vmatpush1.msra.mxu0 0.0
    %3858 = vmatprep.subr.mxu0 0.0
    %3859 = vmatpush1.msra.mxu0 0.0
    %3860 = vmatprep.subr.mxu0 0.0
    %3861 = vmatpush1.msra.mxu0 0.0
    %3862 = vmatprep.subr.mxu0 0.0
    %3863 = vmatpush1.msra.mxu0 0.0
    %3864 = vmatprep.subr.mxu0 0.0
    %3865 = vmatpush1.msra.mxu0 0.0
    %3866 = vmatprep.subr.mxu0 0.0
    %3867 = vmatpush1.msra.mxu0 0.0
    %3868 = vmatprep.subr.mxu0 0.0
    %3869 = vmatpush1.msra.mxu0 0.0
    %3870 = vmatprep.subr.mxu0 0.0
    %3871 = vmatpush1.msra.mxu0 0.0
    %3872 = vmatprep.subr.mxu0 0.0
    %3873 = vmatpush1.msra.mxu0 0.0
    %3874 = vmatprep.subr.mxu0 0.0
    %3875 = vmatpush1.msra.mxu0 0.0
    %3876 = vmatprep.subr.mxu0 0.0
    %3877 = vmatpush1.msra.mxu0 0.0
    %3878 = vmatprep.subr.mxu0 0.0
    %3879 = vmatpush1.msra.mxu0 0.0
    %3880 = vmatprep.subr.mxu0 0.0
    %3881 = vmatpush1.msra.mxu0 0.0
    %3882 = vmatprep.mubr.f32.mxu0 0.0
    %3883 = vmatmul.mubr.f32.gmra.mrb[0].mxu0 %v3816
    %v3884 = vpop.f32.mrb[0].mxu0
    %v3885 = vadd.f32 %v3811, %v3884
    %v3886 = vpop.f32.mrb[0].mxu0
    %v3887 = vadd.f32 %v3813, %v3886
    %3888 = vdwg.mxu0
    %v3889 = vxor.u32 %v3885, 2147483648
    %v3890 = vxor.u32 %v3887, 2147483648
    %v3891 = vmul.f32 %v3889, 1.442695
    %v3892 = vpow.pop %v3891
    %v3893 = vmul.f32 %v3890, 1.442695
    %v3894 = vpow.pop %v3893
    %v3895 = vadd.f32 %v3892, 1.0
    %v3896 = vadd.f32 %v3894, 1.0
    %v3897 = vrcp.pop %v3895
    %v3898 = vmul.f32 1.0, %v3897
    %v3899 = vrcp.pop %v3896
    %v3900 = vmul.f32 1.0, %v3899
    %v3901 = vtanh.pop %v3887
    %v3902 = vmul.f32 %v3898, %v3529
    %3904 = vrot.lane.b32.xlu0 %v3901, 64
    %v3905 = vpop.permute.xlu0 %3904
    %v3907 = vmul.f32 %v3898, %v3905
    %3909 = vrot.lane.b32.xlu0 %v3907, 64
    %v3910 = vpop.permute.xlu0 %3909
    %v3912 = vadd.f32 %v3902, %v3910
    %v3913 = vtanh.pop %v3912
    %3915 = vrot.lane.b32.xlu0 %v3913, 64
    %v3916 = vpop.permute.xlu0 %3915
    %v3918 = vmul.f32 %v3900, %v3916
    %s3919 = scalar_lea.vmem %s5, 56
    %v3920 = vld [vmem:[%s3919] sm:$0xff]
    %v3922 = vsel %vm1135, %v3918, 0
    %3924 = vmatprep.subr.mxu0 0.0
    %3925 = vmatpush1.msra.mxu0 %v74
    %3926 = vmatprep.subr.mxu0 0.0
    %3927 = vmatpush1.msra.mxu0 %v75
    %3928 = vmatprep.subr.mxu0 0.0
    %3929 = vmatpush1.msra.mxu0 %v76
    %3930 = vmatprep.subr.mxu0 0.0
    %3931 = vmatpush1.msra.mxu0 %v77
    %3932 = vmatprep.subr.mxu0 0.0
    %3933 = vmatpush1.msra.mxu0 %v78
    %3934 = vmatprep.subr.mxu0 0.0
    %3935 = vmatpush1.msra.mxu0 %v79
    %3936 = vmatprep.subr.mxu0 0.0
    %3937 = vmatpush1.msra.mxu0 %v80
    %3938 = vmatprep.subr.mxu0 0.0
    %3939 = vmatpush1.msra.mxu0 %v81
    %3940 = vmatprep.subr.mxu0 0.0
    %3941 = vmatpush1.msra.mxu0 0.0
    %3942 = vmatprep.subr.mxu0 0.0
    %3943 = vmatpush1.msra.mxu0 0.0
    %3944 = vmatprep.subr.mxu0 0.0
    %3945 = vmatpush1.msra.mxu0 0.0
    %3946 = vmatprep.subr.mxu0 0.0
    %3947 = vmatpush1.msra.mxu0 0.0
    %3948 = vmatprep.subr.mxu0 0.0
    %3949 = vmatpush1.msra.mxu0 0.0
    %3950 = vmatprep.subr.mxu0 0.0
    %3951 = vmatpush1.msra.mxu0 0.0
    %3952 = vmatprep.subr.mxu0 0.0
    %3953 = vmatpush1.msra.mxu0 0.0
    %3954 = vmatprep.subr.mxu0 0.0
    %3955 = vmatpush1.msra.mxu0 0.0
    %3956 = vmatprep.subr.mxu0 0.0
    %3957 = vmatpush1.msra.mxu0 0.0
    %3958 = vmatprep.subr.mxu0 0.0
    %3959 = vmatpush1.msra.mxu0 0.0
    %3960 = vmatprep.subr.mxu0 0.0
    %3961 = vmatpush1.msra.mxu0 0.0
    %3962 = vmatprep.subr.mxu0 0.0
    %3963 = vmatpush1.msra.mxu0 0.0
    %3964 = vmatprep.subr.mxu0 0.0
    %3965 = vmatpush1.msra.mxu0 0.0
    %3966 = vmatprep.subr.mxu0 0.0
    %3967 = vmatpush1.msra.mxu0 0.0
    %3968 = vmatprep.subr.mxu0 0.0
    %3969 = vmatpush1.msra.mxu0 0.0
    %3970 = vmatprep.subr.mxu0 0.0
    %3971 = vmatpush1.msra.mxu0 0.0
    %3972 = vmatprep.subr.mxu0 0.0
    %3973 = vmatpush1.msra.mxu0 0.0
    %3974 = vmatprep.subr.mxu0 0.0
    %3975 = vmatpush1.msra.mxu0 0.0
    %3976 = vmatprep.subr.mxu0 0.0
    %3977 = vmatpush1.msra.mxu0 0.0
    %3978 = vmatprep.subr.mxu0 0.0
    %3979 = vmatpush1.msra.mxu0 0.0
    %3980 = vmatprep.subr.mxu0 0.0
    %3981 = vmatpush1.msra.mxu0 0.0
    %3982 = vmatprep.subr.mxu0 0.0
    %3983 = vmatpush1.msra.mxu0 0.0
    %3984 = vmatprep.subr.mxu0 0.0
    %3985 = vmatpush1.msra.mxu0 0.0
    %3986 = vmatprep.subr.mxu0 0.0
    %3987 = vmatpush1.msra.mxu0 0.0
    %3988 = vmatprep.mubr.f32.mxu0 0.0
    %3989 = vmatmul.mubr.f32.gmra.mrb[0].mxu0 %v3922
    %v3990 = vpop.f32.mrb[0].mxu0
    %v3991 = vadd.f32 0.0, %v3990
    %v3992 = vpop.f32.mrb[0].mxu0
    %3993 = vdwg.mxu0
    %v3994 = vadd.f32 %v3920, %v3991
    %v3995 = vtanh.pop %v3994
    %v3997 = vsel %vm1135, %v3995, 0
    %3999 = vmatprep.subr.mxu0 0.0
    %4000 = vmatpush1.msra.mxu0 %v82
    %4001 = vmatprep.subr.mxu0 0.0
    %4002 = vmatpush1.msra.mxu0 %v83
    %4003 = vmatprep.subr.mxu0 0.0
    %4004 = vmatpush1.msra.mxu0 %v84
    %4005 = vmatprep.subr.mxu0 0.0
    %4006 = vmatpush1.msra.mxu0 %v85
    %4007 = vmatprep.subr.mxu0 0.0
    %4008 = vmatpush1.msra.mxu0 %v86
    %4009 = vmatprep.subr.mxu0 0.0
    %4010 = vmatpush1.msra.mxu0 %v87
    %4011 = vmatprep.subr.mxu0 0.0
    %4012 = vmatpush1.msra.mxu0 %v88
    %4013 = vmatprep.subr.mxu0 0.0
    %4014 = vmatpush1.msra.mxu0 %v89
    %4015 = vmatprep.subr.mxu0 0.0
    %4016 = vmatpush1.msra.mxu0 0.0
    %4017 = vmatprep.subr.mxu0 0.0
    %4018 = vmatpush1.msra.mxu0 0.0
    %4019 = vmatprep.subr.mxu0 0.0
    %4020 = vmatpush1.msra.mxu0 0.0
    %4021 = vmatprep.subr.mxu0 0.0
    %4022 = vmatpush1.msra.mxu0 0.0
    %4023 = vmatprep.subr.mxu0 0.0
    %4024 = vmatpush1.msra.mxu0 0.0
    %4025 = vmatprep.subr.mxu0 0.0
    %4026 = vmatpush1.msra.mxu0 0.0
    %4027 = vmatprep.subr.mxu0 0.0
    %4028 = vmatpush1.msra.mxu0 0.0
    %4029 = vmatprep.subr.mxu0 0.0
    %4030 = vmatpush1.msra.mxu0 0.0
    %4031 = vmatprep.subr.mxu0 0.0
    %4032 = vmatpush1.msra.mxu0 0.0
    %4033 = vmatprep.subr.mxu0 0.0
    %4034 = vmatpush1.msra.mxu0 0.0
    %4035 = vmatprep.subr.mxu0 0.0
    %4036 = vmatpush1.msra.mxu0 0.0
    %4037 = vmatprep.subr.mxu0 0.0
    %4038 = vmatpush1.msra.mxu0 0.0
    %4039 = vmatprep.subr.mxu0 0.0
    %4040 = vmatpush1.msra.mxu0 0.0
    %4041 = vmatprep.subr.mxu0 0.0
    %4042 = vmatpush1.msra.mxu0 0.0
    %4043 = vmatprep.subr.mxu0 0.0
    %4044 = vmatpush1.msra.mxu0 0.0
    %4045 = vmatprep.subr.mxu0 0.0
    %4046 = vmatpush1.msra.mxu0 0.0
    %4047 = vmatprep.subr.mxu0 0.0
    %4048 = vmatpush1.msra.mxu0 0.0
    %4049 = vmatprep.subr.mxu0 0.0
    %4050 = vmatpush1.msra.mxu0 0.0
    %4051 = vmatprep.subr.mxu0 0.0
    %4052 = vmatpush1.msra.mxu0 0.0
    %4053 = vmatprep.subr.mxu0 0.0
    %4054 = vmatpush1.msra.mxu0 0.0
    %4055 = vmatprep.subr.mxu0 0.0
    %4056 = vmatpush1.msra.mxu0 0.0
    %4057 = vmatprep.subr.mxu0 0.0
    %4058 = vmatpush1.msra.mxu0 0.0
    %4059 = vmatprep.subr.mxu0 0.0
    %4060 = vmatpush1.msra.mxu0 0.0
    %4061 = vmatprep.subr.mxu0 0.0
    %4062 = vmatpush1.msra.mxu0 0.0
    %4063 = vmatprep.mubr.f32.mxu0 0.0
    %4064 = vmatmul.mubr.f32.gmra.mrb[0].mxu0 %v3997
    %v4065 = vpop.f32.mrb[0].mxu0
    %v4066 = vadd.f32 0.0, %v4065
    %v4067 = vpop.f32.mrb[0].mxu0
    %4068 = vdwg.mxu0
    %v4069 = vsel %vm1395, %v4066, -inf
    %4070 = vmax.xlane.f32.xlu0 %v4069
    %v4071 = vpop.xlane.xlu0 %4070
    %v4072 = vsub.f32 %v4066, %v4071
    %v4073 = vmul.f32 %v4072, 1.442695
    %v4074 = vpow.pop %v4073
    %v4075 = vsel %vm1395, %v4074, 0.0
    %4076 = vadd.xlane.f32.xlu0 %v4075
    %v4077 = vpop.xlane.xlu0 %4076
    %v4078 = vrcp.pop %v4077
    %v4079 = vmul.f32 %v4074, %v4078
    %4081 = vrot.lane.b32.xlu0 %v4079, 14
    %v4082 = vpop.permute.xlu0 %4081
    %vm4084 = vcmask 130160
    %4085 = vst.msk [vmem:[%s11] sm:$0xff] %vm4084, %v4082
    %s4086 = scalar_lea.vmem %s8, 56
    %v4087 = vld [vmem:[%s4086] sm:$0xff]
    %v4088 = vadd.f32 %v4066, %v4087
    %v4089 = vsel %vm1395, %v4088, -inf
    %4090 = vmax.xlane.f32.xlu0 %v4089
    %v4091 = vpop.xlane.xlu0 %4090
    %vm4092 = vcmp.ge.f32.partialorder %v4088, %v4091
    %v4093 = vsel %vm4092, %v1122, 2
    %v4094 = vsel %vm1395, %v4093, 2147483647
    %v4095 = vand.u32 %v4094, 65535
    %v4096 = vshra.s32 %v4094, 16
    %v4097 = vcvt.s32.f32 %v4095
    %v4098 = vcvt.s32.f32 %v4096
    %4099 = vmin.xlane.f32.xlu0 %v4098
    %v4100 = vpop.xlane.xlu0 %4099
    %vm4101 = vcmp.eq.f32.partialorder %v4098, %v4100
    %v4102 = vsel %vm4101, %v4097, inf
    %4103 = vmin.xlane.f32.xlu0 %v4102
    %v4104 = vpop.xlane.xlu0 %4103
    %v4105 = vcvt.f32.s32 %v4104
    %v4106 = vcvt.f32.s32 %v4100
    %v4107 = vshll.u32 %v4106, 16
    %v4108 = vadd.s32 %v4107, %v4105
    %s4109 = sld [smem:[#allocation2 + $0x7]]
    %p4110 = scmp.gt.s32.totalorder %s4109, 0
    %s4111 = scalar_lea.vmem %s9, 56
    %v4112 = vld [vmem:[%s4111] sm:$0xff]
    %s4113 = scalar_select %p4110, 1, 0
    %v4114 = vstv %s4113
    %vm4115 = vcmp.eq.s32.totalorder %v4114, 1
    %v4116 = vsel %vm4115, %v4112, %v4108
    %4117 = vrot.lane.b32.xlu0 %v4116, 7
    %v4118 = vpop.permute.xlu0 %4117
    %vm4119 = vcmask 64568
    %4120 = vst.msk [vmem:[#allocation5] sm:$0xff] %vm4119, %v4118
    // Predicated region
    $region50: #{neural_crossover_forward.3} parent=1 // pred_check
      _
    $region51: #{neural_crossover_forward.3} parent=1 // pred_check_branch
      %4122 = sbr.rel (0) target = $region53
    $region52: #{neural_crossover_forward.3} parent=1 // pred_region
      _
    $region53: #{neural_crossover_forward.3} parent=1 // pred_fallthru
      _
    // Predicated region
    $region54: #{neural_crossover_forward.3} parent=1 // pred_check
      _
    $region55: #{neural_crossover_forward.3} parent=1 // pred_check_branch
      %4124 = sbr.rel (0) target = $region57
    $region56: #{neural_crossover_forward.3} parent=1 // pred_region
      %s4126 = ssub.s32 128, 128
      %4127 = vsyncadd [#allocation3], %s4126
      %s4129 = sshll.u32 [#allocation5], 4
      %s4130 = int_to_ptr.vmem [resolvable:$true] %s4129
      %4132 = dma.vmem_to_hbm [thread:$0]  %s4130, 128, %s12, [#allocation3]
    $region57: #{neural_crossover_forward.3} parent=1 // pred_fallthru
      _
    // Predicated region
    $region58: #{neural_crossover_forward.3} parent=1 // pred_check
      _
    $region59: #{neural_crossover_forward.3} parent=1 // pred_check_branch
      %4134 = sbr.rel (0) target = $region61
    $region60: #{neural_crossover_forward.3} parent=1 // pred_region
      _
    $region61: #{neural_crossover_forward.3} parent=1 // pred_fallthru
      _
    // Predicated region
    $region62: #{neural_crossover_forward.3} parent=1 // pred_check
      _
    $region63: #{neural_crossover_forward.3} parent=1 // pred_check_branch
      %4136 = sbr.rel (0) target = $region65
    $region64: #{neural_crossover_forward.3} parent=1 // pred_region
      %4137 = dma.done [#allocation3], 128
    $region65: #{neural_crossover_forward.3} parent=1 // pred_fallthru
      _
    %4138 = vsyncpa [#allocation3], 1
    %4139 = vsyncpa [#allocation4], 1

</llo_original>
